<compile_context>
chip_gen: v7x
topology: tpu7x:2x2x1
jax: 0.10.0
libtpu: 0.0.40
codegen_flags: <defaults>
</compile_context>

<pallas_src>
import functools

import jax
import jax.numpy as jnp
from jax.experimental import pallas as pl
from jax.experimental.pallas import tpu as pltpu

_C1 = 0.01 ** 2
_C2 = 0.03 ** 2


def _loss_sums_kernel(pred_ref, sparse_ref, cur_ref, warp_ref, out_ref, *, H, W):
    f32 = jnp.float32
    pred = pred_ref[0].astype(f32)        # [H, W]
    sparse = sparse_ref[0].astype(f32)    # [H, W]
    cur = cur_ref[0].astype(f32)          # [3, H, W]
    warp = warp_ref[0].astype(f32)        # [3, H, W]

    # ----- small constant matrices built in-register from iota -----
    def band(n, bw):
        r = jax.lax.broadcasted_iota(jnp.int32, (n, n), 0)
        c = jax.lax.broadcasted_iota(jnp.int32, (n, n), 1)
        return (jnp.abs(r - c) <= bw).astype(f32)

    th1, tw1 = band(H, 1), band(W, 1)        # 3-tap box filters (SSIM)
    th10, tw10 = band(H, 10), band(W, 10)    # 21-tap box filters (mask dilation)
    rr = jax.lax.broadcasted_iota(jnp.int32, (W, W), 0)
    cc = jax.lax.broadcasted_iota(jnp.int32, (W, W), 1)
    shift_l = (rr == cc + 1).astype(f32)     # (x @ shift_l)[:, j] == x[:, j+1], 0 at j=W-1

    def box9(x):
        # zero-padded 3x3 avg pool, count_include_pad=True -> /9, on the MXU.
        t = jnp.dot(x, tw1, preferred_element_type=f32)
        return jnp.dot(th1, t, preferred_element_type=f32) * (1.0 / 9.0)

    # ---------------- photometric (per channel -> only 2-D intermediates) ----
    l1_sum = jnp.float32(0.0)
    ssim_sum = jnp.float32(0.0)
    idx_acc = jnp.zeros((H, W), f32)        # sum_c |I[:, j] - I[:, j+1]|
    idy_acc = jnp.zeros((H - 1, W), f32)    # sum_c |I[i, :] - I[i+1, :]|
    for ch in range(3):
        x = cur[ch]
        y = warp[ch]
        l1_sum = l1_sum + jnp.sum(jnp.abs(x - y))
        mu_x = box9(x)
        mu_y = box9(y)
        sigma_x = box9(x * x) - mu_x * mu_x
        sigma_y = box9(y * y) - mu_y * mu_y
        sigma_xy = box9(x * y) - mu_x * mu_y
        ssim = ((2.0 * mu_x * mu_y + _C1) * (2.0 * sigma_xy + _C2) /
                ((mu_x * mu_x + mu_y * mu_y + _C1) * (sigma_x + sigma_y + _C2)))
        ssim_sum = ssim_sum + jnp.sum((1.0 - ssim) * 0.5)
        # image gradients for the edge-aware smoothness weights
        x_s = jnp.dot(x, shift_l, preferred_element_type=f32)   # x[:, j+1], 0-filled
        idx_acc = idx_acc + jnp.abs(x - x_s)
        idy_acc = idy_acc + jnp.abs(x[:-1, :] - x[1:, :])

    # ---------------- edge-aware smoothness ----------------
    weight_x = jnp.exp(idx_acc * (-10.0 / 3.0))      # [H, W]   (lane >= W-1 is masked)
    weight_y = jnp.exp(idy_acc * (-10.0 / 3.0))      # [H-1, W]

    pred_s = jnp.dot(pred, shift_l, preferred_element_type=f32)
    dx = pred - pred_s                               # valid for lanes j <= W-2
    dxx = dx - jnp.dot(dx, shift_l, preferred_element_type=f32)   # valid j <= W-3
    dy = pred[:-1, :] - pred[1:, :]                  # [H-1, W]
    dyy = dy[:-1, :] - dy[1:, :]                     # [H-2, W]

    lane = jax.lax.broadcasted_iota(jnp.int32, (H, W), 1)
    x_valid = (lane < (W - 2)).astype(f32)           # lanes 0..W-3 (full-width, no odd slices)
    smooth_x_sum = jnp.sum(jnp.abs(dx) * weight_x * x_valid)
    smooth2x_sum = jnp.sum(jnp.abs(dxx) * weight_x * x_valid)
    smooth_y_sum = jnp.sum(jnp.abs(dy[:-1, :]) * weight_y[:-1, :])
    smooth2y_sum = jnp.sum(jnp.abs(dyy) * weight_y[:-1, :])

    # ---------------- sparse depth stats (mask computed once, reused) --------
    smask = (sparse > 0.0).astype(f32)
    sparse_count = jnp.sum(smask)
    sparse_l1_sum = jnp.sum(jnp.abs(pred - sparse) * smask)
    sparse_sum = jnp.sum(sparse * smask)
    sparse_sumsq = jnp.sum(sparse * sparse * smask)

    # ---------------- 21x21 dilation via banded box-sum on the MXU -----------
    t10 = jnp.dot(smask, tw10, preferred_element_type=f32)
    boxsum = jnp.dot(th10, t10, preferred_element_type=f32)
    dil = (boxsum > 0.5).astype(f32)                 # == 21x21 max-pool > 0 for a 0/1 mask
    dil_count = jnp.sum(dil)
    pred_dil_sum = jnp.sum(pred * dil)
    pred_dil_sumsq = jnp.sum(pred * pred * dil)

    # ---------------- write 13 partial sums into a lane-dense output tile ----
    vals = (l1_sum, ssim_sum, sparse_count, sparse_l1_sum, sparse_sum,
            sparse_sumsq, smooth_x_sum, smooth_y_sum, smooth2x_sum,
            smooth2y_sum, dil_count, pred_dil_sum, pred_dil_sumsq)
    row = jax.lax.broadcasted_iota(jnp.int32, (16, 128), 0)
    tile = jnp.zeros((16, 128), f32)
    for k, v in enumerate(vals):
        tile = jnp.where(row == k, v, tile)
    out_ref[0] = tile


def self_supervised_depth_loss(pred_depth, sparse_depth, rgb_current, rgb_warped,
                               gt_depth=None, *, alpha=0.85, sparse_weight=0.5,
                               smooth_weight=0.1, regularization_weight=0.1,
                               gt_weight=0.0):
    """JAX/Pallas port of SelfSupervisedDepthLoss.forward.

    Args (NCHW, matching the PyTorch module):
      pred_depth   [B, 1, H, W]
      sparse_depth [B, 1, H, W]
      rgb_current  [B, 3, H, W]
      rgb_warped   [B, 3, H, W]
    Returns (total_loss, loss_dict).
    """
    B, _, H, W = pred_depth.shape
    pred = pred_depth.reshape(B, H, W)        # free metadata reshape, no pad/cast
    sparse = sparse_depth.reshape(B, H, W)

    kernel = functools.partial(_loss_sums_kernel, H=H, W=W)
    sums_pb = pl.pallas_call(
        kernel,
        out_shape=jax.ShapeDtypeStruct((B, 16, 128), jnp.float32),
        grid=(B,),
        in_specs=[
            pl.BlockSpec((1, H, W), lambda b: (b, 0, 0)),
            pl.BlockSpec((1, H, W), lambda b: (b, 0, 0)),
            pl.BlockSpec((1, 3, H, W), lambda b: (b, 0, 0, 0)),
            pl.BlockSpec((1, 3, H, W), lambda b: (b, 0, 0, 0)),
        ],
        out_specs=pl.BlockSpec((1, 16, 128), lambda b: (b, 0, 0)),
        compiler_params=pltpu.CompilerParams(
            dimension_semantics=("parallel",),
            vmem_limit_bytes=48 * 1024 * 1024),
    )(pred, sparse, rgb_current, rgb_warped)

    # combine per-batch partial sums (row k, lane 0 holds term k)
    sums = jnp.sum(sums_pb[:, :, 0], axis=0)          # (16,)

    # ----- photometric -----
    n_photo = float(B * 3 * H * W)
    l1_mean = sums[0] / n_photo
    ssim_mean = sums[1] / n_photo
    photo_loss = alpha * ssim_mean + (1.0 - alpha) * l1_mean

    # ----- sparse depth L1 (masked mean; count==0 -> 0, like the torch branch) -----
    s_cnt = sums[2]
    sparse_loss = jnp.where(s_cnt > 0, sums[3] / jnp.maximum(s_cnt, 1.0), 0.0)

    # ----- smoothness -----
    n_sx = float(B * H * (W - 2))
    n_sy = float(B * (H - 2) * W)
    smooth_loss = (sums[6] / n_sx + sums[7] / n_sy
                   + 0.5 * (sums[8] / n_sx + sums[9] / n_sy))

    # ----- depth regularization (torch.std is unbiased; masked gather -> masked sums) -----
    safe_cnt = jnp.maximum(s_cnt, 2.0)
    sparse_mean = sums[4] / safe_cnt
    sparse_var = jnp.maximum(sums[5] - sums[4] ** 2 / safe_cnt, 0.0) / (safe_cnt - 1.0)
    sparse_std = jnp.sqrt(sparse_var)
    d_cnt = sums[10]
    safe_dcnt = jnp.maximum(d_cnt, 2.0)
    pred_mean = sums[11] / safe_dcnt
    pred_var = jnp.maximum(sums[12] - sums[11] ** 2 / safe_dcnt, 0.0) / (safe_dcnt - 1.0)
    pred_std = jnp.sqrt(pred_var)
    mean_diff = jnp.minimum(jnp.abs(pred_mean - sparse_mean) / (sparse_mean + 0.1), 2.0)
    std_diff = jnp.minimum(jnp.abs(pred_std - sparse_std) / (sparse_std + 0.1), 2.0)
    reg_loss = 0.1 * (mean_diff + 0.5 * std_diff)
    reg_loss = jnp.where((s_cnt >= 10) & (d_cnt > 0), reg_loss, 0.0)

    # ----- optional ground-truth term (gt_weight defaults to 0.0) -----
    gt_loss = jnp.float32(0.0)
    if gt_depth is not None and gt_weight > 0:
        valid = (gt_depth > 0).astype(jnp.float32)
        vcnt = jnp.sum(valid)
        gt_loss = jnp.where(
            vcnt > 0,
            jnp.sum(jnp.abs(pred_depth.astype(jnp.float32)
                            - gt_depth.astype(jnp.float32)) * valid)
            / jnp.maximum(vcnt, 1.0),
            0.0)

    total = (gt_weight * gt_loss + photo_loss + sparse_weight * sparse_loss
             + smooth_weight * smooth_loss + regularization_weight * reg_loss)

    loss_dict = {
        'ground_truth': gt_loss,
        'photometric': photo_loss,
        'sparse': sparse_loss,
        'smoothness': smooth_loss,
        'regularization': reg_loss,
        'total': total,
    }
    return total, loss_dict


if __name__ == "__main__":
    key = jax.random.PRNGKey(0)
    B, H, W = 2, 16, 16
    k1, k2, k3, k4, k5 = jax.random.split(key, 5)

    pred_depth = jax.random.uniform(k1, (B, 1, H, W), jnp.float32, 0.5, 10.0)
    dense = jax.random.uniform(k2, (B, 1, H, W), jnp.float32, 0.5, 10.0)
    keep = jax.random.bernoulli(k3, 0.3, (B, 1, H, W))
    sparse_depth = jnp.where(keep, dense, 0.0)
    rgb_current = jax.random.uniform(k4, (B, 3, H, W), jnp.float32)
    rgb_warped = jax.random.uniform(k5, (B, 3, H, W), jnp.float32)

    total, loss_dict = self_supervised_depth_loss(
        pred_depth, sparse_depth, rgb_current, rgb_warped)
    total = jax.block_until_ready(total)
    jax.block_until_ready(loss_dict['total'])
    print("KERNEL_OK")
</pallas_src>

<mosaic_0001>
module attributes {stable_mosaic.version = 11 : i64} {
  func.func @_loss_sums_kernel(%arg0: i32, %arg1: memref<1x16x16xf32, #tpu.memory_space<vmem>>, %arg2: memref<1x16x16xf32, #tpu.memory_space<vmem>>, %arg3: memref<1x3x16x16xf32, #tpu.memory_space<vmem>>, %arg4: memref<1x3x16x16xf32, #tpu.memory_space<vmem>>, %arg5: memref<1x16x128xf32, #tpu.memory_space<vmem>>) attributes {dimension_semantics = [#tpu.dimension_semantics<parallel>], iteration_bounds = array<i64: 2>, scalar_prefetch = 0 : i64, scratch_operands = 0 : i64, tpu.core_type = #tpu.core_type<tc>, window_params = [{transform_indices = @transform_0, window_bounds = array<i64: 1, 16, 16>}, {transform_indices = @transform_1, window_bounds = array<i64: 1, 16, 16>}, {transform_indices = @transform_2, window_bounds = array<i64: 1, 3, 16, 16>}, {transform_indices = @transform_3, window_bounds = array<i64: 1, 3, 16, 16>}, {transform_indices = @transform_4, window_bounds = array<i64: 1, 16, 128>}]} {
    %c0 = arith.constant 0 : index
    %c0_0 = arith.constant 0 : index
    %c0_1 = arith.constant 0 : index
    %0 = vector.load %arg1[%c0, %c0_0, %c0_1] : memref<1x16x16xf32, #tpu.memory_space<vmem>>, vector<1x16x16xf32>
    %1 = vector.shape_cast %0 : vector<1x16x16xf32> to vector<16x16xf32>
    %c0_2 = arith.constant 0 : index
    %c0_3 = arith.constant 0 : index
    %c0_4 = arith.constant 0 : index
    %2 = vector.load %arg2[%c0_2, %c0_3, %c0_4] : memref<1x16x16xf32, #tpu.memory_space<vmem>>, vector<1x16x16xf32>
    %3 = vector.shape_cast %2 : vector<1x16x16xf32> to vector<16x16xf32>
    %c0_5 = arith.constant 0 : index
    %c0_6 = arith.constant 0 : index
    %c0_7 = arith.constant 0 : index
    %c0_8 = arith.constant 0 : index
    %4 = vector.load %arg3[%c0_5, %c0_6, %c0_7, %c0_8] : memref<1x3x16x16xf32, #tpu.memory_space<vmem>>, vector<1x3x16x16xf32>
    %5 = vector.shape_cast %4 : vector<1x3x16x16xf32> to vector<3x16x16xf32>
    %c0_9 = arith.constant 0 : index
    %c0_10 = arith.constant 0 : index
    %c0_11 = arith.constant 0 : index
    %c0_12 = arith.constant 0 : index
    %6 = vector.load %arg4[%c0_9, %c0_10, %c0_11, %c0_12] : memref<1x3x16x16xf32, #tpu.memory_space<vmem>>, vector<1x3x16x16xf32>
    %7 = vector.shape_cast %6 : vector<1x3x16x16xf32> to vector<3x16x16xf32>
    %8 = tpu.iota {dimensions = array<i32: 0>} : vector<16x16xi32>
    %9 = tpu.iota {dimensions = array<i32: 1>} : vector<16x16xi32>
    %10 = arith.subi %8, %9 : vector<16x16xi32>
    %11 = math.absi %10 : vector<16x16xi32>
    %c1_i32 = arith.constant 1 : i32
    %12 = vector.broadcast %c1_i32 : i32 to vector<16x16xi32>
    %13 = arith.cmpi sle, %11, %12 : vector<16x16xi32>
    %14 = arith.extui %13 : vector<16x16xi1> to vector<16x16xi32>
    %15 = arith.sitofp %14 : vector<16x16xi32> to vector<16x16xf32>
    %16 = tpu.iota {dimensions = array<i32: 0>} : vector<16x16xi32>
    %17 = tpu.iota {dimensions = array<i32: 1>} : vector<16x16xi32>
    %18 = arith.subi %16, %17 : vector<16x16xi32>
    %19 = math.absi %18 : vector<16x16xi32>
    %c1_i32_13 = arith.constant 1 : i32
    %20 = vector.broadcast %c1_i32_13 : i32 to vector<16x16xi32>
    %21 = arith.cmpi sle, %19, %20 : vector<16x16xi32>
    %22 = arith.extui %21 : vector<16x16xi1> to vector<16x16xi32>
    %23 = arith.sitofp %22 : vector<16x16xi32> to vector<16x16xf32>
    %24 = tpu.iota {dimensions = array<i32: 0>} : vector<16x16xi32>
    %25 = tpu.iota {dimensions = array<i32: 1>} : vector<16x16xi32>
    %26 = arith.subi %24, %25 : vector<16x16xi32>
    %27 = math.absi %26 : vector<16x16xi32>
    %c10_i32 = arith.constant 10 : i32
    %28 = vector.broadcast %c10_i32 : i32 to vector<16x16xi32>
    %29 = arith.cmpi sle, %27, %28 : vector<16x16xi32>
    %30 = arith.extui %29 : vector<16x16xi1> to vector<16x16xi32>
    %31 = arith.sitofp %30 : vector<16x16xi32> to vector<16x16xf32>
    %32 = tpu.iota {dimensions = array<i32: 0>} : vector<16x16xi32>
    %33 = tpu.iota {dimensions = array<i32: 1>} : vector<16x16xi32>
    %34 = arith.subi %32, %33 : vector<16x16xi32>
    %35 = math.absi %34 : vector<16x16xi32>
    %c10_i32_14 = arith.constant 10 : i32
    %36 = vector.broadcast %c10_i32_14 : i32 to vector<16x16xi32>
    %37 = arith.cmpi sle, %35, %36 : vector<16x16xi32>
    %38 = arith.extui %37 : vector<16x16xi1> to vector<16x16xi32>
    %39 = arith.sitofp %38 : vector<16x16xi32> to vector<16x16xf32>
    %40 = tpu.iota {dimensions = array<i32: 0>} : vector<16x16xi32>
    %41 = tpu.iota {dimensions = array<i32: 1>} : vector<16x16xi32>
    %c1_i32_15 = arith.constant 1 : i32
    %42 = vector.broadcast %c1_i32_15 : i32 to vector<16x16xi32>
    %43 = arith.addi %41, %42 : vector<16x16xi32>
    %44 = arith.cmpi eq, %40, %43 : vector<16x16xi32>
    %45 = arith.extui %44 : vector<16x16xi1> to vector<16x16xi32>
    %46 = arith.sitofp %45 : vector<16x16xi32> to vector<16x16xf32>
    %cst = arith.constant 0.000000e+00 : f32
    %47 = vector.broadcast %cst : f32 to vector<16x16xf32>
    %cst_16 = arith.constant 0.000000e+00 : f32
    %48 = vector.broadcast %cst_16 : f32 to vector<15x16xf32>
    %49 = vector.extract_strided_slice %5 {offsets = [0, 0, 0], sizes = [1, 16, 16], strides = [1, 1, 1]} : vector<3x16x16xf32> to vector<1x16x16xf32>
    %50 = vector.shape_cast %49 : vector<1x16x16xf32> to vector<16x16xf32>
    %51 = vector.extract_strided_slice %7 {offsets = [0, 0, 0], sizes = [1, 16, 16], strides = [1, 1, 1]} : vector<3x16x16xf32> to vector<1x16x16xf32>
    %52 = vector.shape_cast %51 : vector<1x16x16xf32> to vector<16x16xf32>
    %53 = arith.subf %50, %52 : vector<16x16xf32>
    %54 = math.absf %53 : vector<16x16xf32>
    %55 = vector.shape_cast %54 : vector<16x16xf32> to vector<1x16x16xf32>
    %cst_17 = arith.constant dense<0.000000e+00> : vector<1xf32>
    %56 = vector.multi_reduction <add>, %55, %cst_17 [1, 2] : vector<1x16x16xf32> to vector<1xf32>
    %57 = vector.shape_cast %56 : vector<1xf32> to vector<1x1x1xf32>
    %58 = vector.extract %57[0, 0, 0] : f32 from vector<1x1x1xf32>
    %cst_18 = arith.constant 0.000000e+00 : f32
    %59 = arith.addf %cst_18, %58 : f32
    %cst_19 = arith.constant dense<0.000000e+00> : vector<16x16xf32>
    %60 = tpu.matmul %50, %23, %cst_19 {dimension_numbers = #tpu.dot_dimension_numbers<[1], [0], [0], [1], [0, 0, 1, 1], [], []>} : vector<16x16xf32>, vector<16x16xf32>, vector<16x16xf32> -> vector<16x16xf32>
    %cst_20 = arith.constant dense<0.000000e+00> : vector<16x16xf32>
    %61 = tpu.matmul %15, %60, %cst_20 {dimension_numbers = #tpu.dot_dimension_numbers<[1], [0], [0], [1], [0, 0, 1, 1], [], []>} : vector<16x16xf32>, vector<16x16xf32>, vector<16x16xf32> -> vector<16x16xf32>
    %cst_21 = arith.constant 0.111111112 : f32
    %62 = vector.broadcast %cst_21 : f32 to vector<16x16xf32>
    %63 = arith.mulf %61, %62 : vector<16x16xf32>
    %cst_22 = arith.constant dense<0.000000e+00> : vector<16x16xf32>
    %64 = tpu.matmul %52, %23, %cst_22 {dimension_numbers = #tpu.dot_dimension_numbers<[1], [0], [0], [1], [0, 0, 1, 1], [], []>} : vector<16x16xf32>, vector<16x16xf32>, vector<16x16xf32> -> vector<16x16xf32>
    %cst_23 = arith.constant dense<0.000000e+00> : vector<16x16xf32>
    %65 = tpu.matmul %15, %64, %cst_23 {dimension_numbers = #tpu.dot_dimension_numbers<[1], [0], [0], [1], [0, 0, 1, 1], [], []>} : vector<16x16xf32>, vector<16x16xf32>, vector<16x16xf32> -> vector<16x16xf32>
    %cst_24 = arith.constant 0.111111112 : f32
    %66 = vector.broadcast %cst_24 : f32 to vector<16x16xf32>
    %67 = arith.mulf %65, %66 : vector<16x16xf32>
    %68 = arith.mulf %50, %50 : vector<16x16xf32>
    %cst_25 = arith.constant dense<0.000000e+00> : vector<16x16xf32>
    %69 = tpu.matmul %68, %23, %cst_25 {dimension_numbers = #tpu.dot_dimension_numbers<[1], [0], [0], [1], [0, 0, 1, 1], [], []>} : vector<16x16xf32>, vector<16x16xf32>, vector<16x16xf32> -> vector<16x16xf32>
    %cst_26 = arith.constant dense<0.000000e+00> : vector<16x16xf32>
    %70 = tpu.matmul %15, %69, %cst_26 {dimension_numbers = #tpu.dot_dimension_numbers<[1], [0], [0], [1], [0, 0, 1, 1], [], []>} : vector<16x16xf32>, vector<16x16xf32>, vector<16x16xf32> -> vector<16x16xf32>
    %cst_27 = arith.constant 0.111111112 : f32
    %71 = vector.broadcast %cst_27 : f32 to vector<16x16xf32>
    %72 = arith.mulf %70, %71 : vector<16x16xf32>
    %73 = arith.mulf %63, %63 : vector<16x16xf32>
    %74 = arith.subf %72, %73 : vector<16x16xf32>
    %75 = arith.mulf %52, %52 : vector<16x16xf32>
    %cst_28 = arith.constant dense<0.000000e+00> : vector<16x16xf32>
    %76 = tpu.matmul %75, %23, %cst_28 {dimension_numbers = #tpu.dot_dimension_numbers<[1], [0], [0], [1], [0, 0, 1, 1], [], []>} : vector<16x16xf32>, vector<16x16xf32>, vector<16x16xf32> -> vector<16x16xf32>
    %cst_29 = arith.constant dense<0.000000e+00> : vector<16x16xf32>
    %77 = tpu.matmul %15, %76, %cst_29 {dimension_numbers = #tpu.dot_dimension_numbers<[1], [0], [0], [1], [0, 0, 1, 1], [], []>} : vector<16x16xf32>, vector<16x16xf32>, vector<16x16xf32> -> vector<16x16xf32>
    %cst_30 = arith.constant 0.111111112 : f32
    %78 = vector.broadcast %cst_30 : f32 to vector<16x16xf32>
    %79 = arith.mulf %77, %78 : vector<16x16xf32>
    %80 = arith.mulf %67, %67 : vector<16x16xf32>
    %81 = arith.subf %79, %80 : vector<16x16xf32>
    %82 = arith.mulf %50, %52 : vector<16x16xf32>
    %cst_31 = arith.constant dense<0.000000e+00> : vector<16x16xf32>
    %83 = tpu.matmul %82, %23, %cst_31 {dimension_numbers = #tpu.dot_dimension_numbers<[1], [0], [0], [1], [0, 0, 1, 1], [], []>} : vector<16x16xf32>, vector<16x16xf32>, vector<16x16xf32> -> vector<16x16xf32>
    %cst_32 = arith.constant dense<0.000000e+00> : vector<16x16xf32>
    %84 = tpu.matmul %15, %83, %cst_32 {dimension_numbers = #tpu.dot_dimension_numbers<[1], [0], [0], [1], [0, 0, 1, 1], [], []>} : vector<16x16xf32>, vector<16x16xf32>, vector<16x16xf32> -> vector<16x16xf32>
    %cst_33 = arith.constant 0.111111112 : f32
    %85 = vector.broadcast %cst_33 : f32 to vector<16x16xf32>
    %86 = arith.mulf %84, %85 : vector<16x16xf32>
    %87 = arith.mulf %63, %67 : vector<16x16xf32>
    %88 = arith.subf %86, %87 : vector<16x16xf32>
    %cst_34 = arith.constant 2.000000e+00 : f32
    %89 = vector.broadcast %cst_34 : f32 to vector<16x16xf32>
    %90 = arith.mulf %89, %63 : vector<16x16xf32>
    %91 = arith.mulf %90, %67 : vector<16x16xf32>
    %cst_35 = arith.constant 9.99999974E-5 : f32
    %92 = vector.broadcast %cst_35 : f32 to vector<16x16xf32>
    %93 = arith.addf %91, %92 : vector<16x16xf32>
    %cst_36 = arith.constant 2.000000e+00 : f32
    %94 = vector.broadcast %cst_36 : f32 to vector<16x16xf32>
    %95 = arith.mulf %94, %88 : vector<16x16xf32>
    %cst_37 = arith.constant 8.99999984E-4 : f32
    %96 = vector.broadcast %cst_37 : f32 to vector<16x16xf32>
    %97 = arith.addf %95, %96 : vector<16x16xf32>
    %98 = arith.mulf %93, %97 : vector<16x16xf32>
    %99 = arith.mulf %63, %63 : vector<16x16xf32>
    %100 = arith.mulf %67, %67 : vector<16x16xf32>
    %101 = arith.addf %99, %100 : vector<16x16xf32>
    %cst_38 = arith.constant 9.99999974E-5 : f32
    %102 = vector.broadcast %cst_38 : f32 to vector<16x16xf32>
    %103 = arith.addf %101, %102 : vector<16x16xf32>
    %104 = arith.addf %74, %81 : vector<16x16xf32>
    %cst_39 = arith.constant 8.99999984E-4 : f32
    %105 = vector.broadcast %cst_39 : f32 to vector<16x16xf32>
    %106 = arith.addf %104, %105 : vector<16x16xf32>
    %107 = arith.mulf %103, %106 : vector<16x16xf32>
    %108 = arith.divf %98, %107 : vector<16x16xf32>
    %cst_40 = arith.constant 1.000000e+00 : f32
    %109 = vector.broadcast %cst_40 : f32 to vector<16x16xf32>
    %110 = arith.subf %109, %108 : vector<16x16xf32>
    %cst_41 = arith.constant 5.000000e-01 : f32
    %111 = vector.broadcast %cst_41 : f32 to vector<16x16xf32>
    %112 = arith.mulf %110, %111 : vector<16x16xf32>
    %113 = vector.shape_cast %112 : vector<16x16xf32> to vector<1x16x16xf32>
    %cst_42 = arith.constant dense<0.000000e+00> : vector<1xf32>
    %114 = vector.multi_reduction <add>, %113, %cst_42 [1, 2] : vector<1x16x16xf32> to vector<1xf32>
    %115 = vector.shape_cast %114 : vector<1xf32> to vector<1x1x1xf32>
    %116 = vector.extract %115[0, 0, 0] : f32 from vector<1x1x1xf32>
    %cst_43 = arith.constant 0.000000e+00 : f32
    %117 = arith.addf %cst_43, %116 : f32
    %cst_44 = arith.constant dense<0.000000e+00> : vector<16x16xf32>
    %118 = tpu.matmul %50, %46, %cst_44 {dimension_numbers = #tpu.dot_dimension_numbers<[1], [0], [0], [1], [0, 0, 1, 1], [], []>} : vector<16x16xf32>, vector<16x16xf32>, vector<16x16xf32> -> vector<16x16xf32>
    %119 = arith.subf %50, %118 : vector<16x16xf32>
    %120 = math.absf %119 : vector<16x16xf32>
    %121 = arith.addf %47, %120 : vector<16x16xf32>
    %122 = vector.extract_strided_slice %50 {offsets = [0, 0], sizes = [15, 16], strides = [1, 1]} : vector<16x16xf32> to vector<15x16xf32>
    %123 = vector.extract_strided_slice %50 {offsets = [1, 0], sizes = [15, 16], strides = [1, 1]} : vector<16x16xf32> to vector<15x16xf32>
    %124 = arith.subf %122, %123 : vector<15x16xf32>
    %125 = math.absf %124 : vector<15x16xf32>
    %126 = arith.addf %48, %125 : vector<15x16xf32>
    %127 = vector.extract_strided_slice %5 {offsets = [1, 0, 0], sizes = [1, 16, 16], strides = [1, 1, 1]} : vector<3x16x16xf32> to vector<1x16x16xf32>
    %128 = vector.shape_cast %127 : vector<1x16x16xf32> to vector<16x16xf32>
    %129 = vector.extract_strided_slice %7 {offsets = [1, 0, 0], sizes = [1, 16, 16], strides = [1, 1, 1]} : vector<3x16x16xf32> to vector<1x16x16xf32>
    %130 = vector.shape_cast %129 : vector<1x16x16xf32> to vector<16x16xf32>
    %131 = arith.subf %128, %130 : vector<16x16xf32>
    %132 = math.absf %131 : vector<16x16xf32>
    %133 = vector.shape_cast %132 : vector<16x16xf32> to vector<1x16x16xf32>
    %cst_45 = arith.constant dense<0.000000e+00> : vector<1xf32>
    %134 = vector.multi_reduction <add>, %133, %cst_45 [1, 2] : vector<1x16x16xf32> to vector<1xf32>
    %135 = vector.shape_cast %134 : vector<1xf32> to vector<1x1x1xf32>
    %136 = vector.extract %135[0, 0, 0] : f32 from vector<1x1x1xf32>
    %137 = arith.addf %59, %136 : f32
    %cst_46 = arith.constant dense<0.000000e+00> : vector<16x16xf32>
    %138 = tpu.matmul %128, %23, %cst_46 {dimension_numbers = #tpu.dot_dimension_numbers<[1], [0], [0], [1], [0, 0, 1, 1], [], []>} : vector<16x16xf32>, vector<16x16xf32>, vector<16x16xf32> -> vector<16x16xf32>
    %cst_47 = arith.constant dense<0.000000e+00> : vector<16x16xf32>
    %139 = tpu.matmul %15, %138, %cst_47 {dimension_numbers = #tpu.dot_dimension_numbers<[1], [0], [0], [1], [0, 0, 1, 1], [], []>} : vector<16x16xf32>, vector<16x16xf32>, vector<16x16xf32> -> vector<16x16xf32>
    %cst_48 = arith.constant 0.111111112 : f32
    %140 = vector.broadcast %cst_48 : f32 to vector<16x16xf32>
    %141 = arith.mulf %139, %140 : vector<16x16xf32>
    %cst_49 = arith.constant dense<0.000000e+00> : vector<16x16xf32>
    %142 = tpu.matmul %130, %23, %cst_49 {dimension_numbers = #tpu.dot_dimension_numbers<[1], [0], [0], [1], [0, 0, 1, 1], [], []>} : vector<16x16xf32>, vector<16x16xf32>, vector<16x16xf32> -> vector<16x16xf32>
    %cst_50 = arith.constant dense<0.000000e+00> : vector<16x16xf32>
    %143 = tpu.matmul %15, %142, %cst_50 {dimension_numbers = #tpu.dot_dimension_numbers<[1], [0], [0], [1], [0, 0, 1, 1], [], []>} : vector<16x16xf32>, vector<16x16xf32>, vector<16x16xf32> -> vector<16x16xf32>
    %cst_51 = arith.constant 0.111111112 : f32
    %144 = vector.broadcast %cst_51 : f32 to vector<16x16xf32>
    %145 = arith.mulf %143, %144 : vector<16x16xf32>
    %146 = arith.mulf %128, %128 : vector<16x16xf32>
    %cst_52 = arith.constant dense<0.000000e+00> : vector<16x16xf32>
    %147 = tpu.matmul %146, %23, %cst_52 {dimension_numbers = #tpu.dot_dimension_numbers<[1], [0], [0], [1], [0, 0, 1, 1], [], []>} : vector<16x16xf32>, vector<16x16xf32>, vector<16x16xf32> -> vector<16x16xf32>
    %cst_53 = arith.constant dense<0.000000e+00> : vector<16x16xf32>
    %148 = tpu.matmul %15, %147, %cst_53 {dimension_numbers = #tpu.dot_dimension_numbers<[1], [0], [0], [1], [0, 0, 1, 1], [], []>} : vector<16x16xf32>, vector<16x16xf32>, vector<16x16xf32> -> vector<16x16xf32>
    %cst_54 = arith.constant 0.111111112 : f32
    %149 = vector.broadcast %cst_54 : f32 to vector<16x16xf32>
    %150 = arith.mulf %148, %149 : vector<16x16xf32>
    %151 = arith.mulf %141, %141 : vector<16x16xf32>
    %152 = arith.subf %150, %151 : vector<16x16xf32>
    %153 = arith.mulf %130, %130 : vector<16x16xf32>
    %cst_55 = arith.constant dense<0.000000e+00> : vector<16x16xf32>
    %154 = tpu.matmul %153, %23, %cst_55 {dimension_numbers = #tpu.dot_dimension_numbers<[1], [0], [0], [1], [0, 0, 1, 1], [], []>} : vector<16x16xf32>, vector<16x16xf32>, vector<16x16xf32> -> vector<16x16xf32>
    %cst_56 = arith.constant dense<0.000000e+00> : vector<16x16xf32>
    %155 = tpu.matmul %15, %154, %cst_56 {dimension_numbers = #tpu.dot_dimension_numbers<[1], [0], [0], [1], [0, 0, 1, 1], [], []>} : vector<16x16xf32>, vector<16x16xf32>, vector<16x16xf32> -> vector<16x16xf32>
    %cst_57 = arith.constant 0.111111112 : f32
    %156 = vector.broadcast %cst_57 : f32 to vector<16x16xf32>
    %157 = arith.mulf %155, %156 : vector<16x16xf32>
    %158 = arith.mulf %145, %145 : vector<16x16xf32>
    %159 = arith.subf %157, %158 : vector<16x16xf32>
    %160 = arith.mulf %128, %130 : vector<16x16xf32>
    %cst_58 = arith.constant dense<0.000000e+00> : vector<16x16xf32>
    %161 = tpu.matmul %160, %23, %cst_58 {dimension_numbers = #tpu.dot_dimension_numbers<[1], [0], [0], [1], [0, 0, 1, 1], [], []>} : vector<16x16xf32>, vector<16x16xf32>, vector<16x16xf32> -> vector<16x16xf32>
    %cst_59 = arith.constant dense<0.000000e+00> : vector<16x16xf32>
    %162 = tpu.matmul %15, %161, %cst_59 {dimension_numbers = #tpu.dot_dimension_numbers<[1], [0], [0], [1], [0, 0, 1, 1], [], []>} : vector<16x16xf32>, vector<16x16xf32>, vector<16x16xf32> -> vector<16x16xf32>
    %cst_60 = arith.constant 0.111111112 : f32
    %163 = vector.broadcast %cst_60 : f32 to vector<16x16xf32>
    %164 = arith.mulf %162, %163 : vector<16x16xf32>
    %165 = arith.mulf %141, %145 : vector<16x16xf32>
    %166 = arith.subf %164, %165 : vector<16x16xf32>
    %cst_61 = arith.constant 2.000000e+00 : f32
    %167 = vector.broadcast %cst_61 : f32 to vector<16x16xf32>
    %168 = arith.mulf %167, %141 : vector<16x16xf32>
    %169 = arith.mulf %168, %145 : vector<16x16xf32>
    %cst_62 = arith.constant 9.99999974E-5 : f32
    %170 = vector.broadcast %cst_62 : f32 to vector<16x16xf32>
    %171 = arith.addf %169, %170 : vector<16x16xf32>
    %cst_63 = arith.constant 2.000000e+00 : f32
    %172 = vector.broadcast %cst_63 : f32 to vector<16x16xf32>
    %173 = arith.mulf %172, %166 : vector<16x16xf32>
    %cst_64 = arith.constant 8.99999984E-4 : f32
    %174 = vector.broadcast %cst_64 : f32 to vector<16x16xf32>
    %175 = arith.addf %173, %174 : vector<16x16xf32>
    %176 = arith.mulf %171, %175 : vector<16x16xf32>
    %177 = arith.mulf %141, %141 : vector<16x16xf32>
    %178 = arith.mulf %145, %145 : vector<16x16xf32>
    %179 = arith.addf %177, %178 : vector<16x16xf32>
    %cst_65 = arith.constant 9.99999974E-5 : f32
    %180 = vector.broadcast %cst_65 : f32 to vector<16x16xf32>
    %181 = arith.addf %179, %180 : vector<16x16xf32>
    %182 = arith.addf %152, %159 : vector<16x16xf32>
    %cst_66 = arith.constant 8.99999984E-4 : f32
    %183 = vector.broadcast %cst_66 : f32 to vector<16x16xf32>
    %184 = arith.addf %182, %183 : vector<16x16xf32>
    %185 = arith.mulf %181, %184 : vector<16x16xf32>
    %186 = arith.divf %176, %185 : vector<16x16xf32>
    %cst_67 = arith.constant 1.000000e+00 : f32
    %187 = vector.broadcast %cst_67 : f32 to vector<16x16xf32>
    %188 = arith.subf %187, %186 : vector<16x16xf32>
    %cst_68 = arith.constant 5.000000e-01 : f32
    %189 = vector.broadcast %cst_68 : f32 to vector<16x16xf32>
    %190 = arith.mulf %188, %189 : vector<16x16xf32>
    %191 = vector.shape_cast %190 : vector<16x16xf32> to vector<1x16x16xf32>
    %cst_69 = arith.constant dense<0.000000e+00> : vector<1xf32>
    %192 = vector.multi_reduction <add>, %191, %cst_69 [1, 2] : vector<1x16x16xf32> to vector<1xf32>
    %193 = vector.shape_cast %192 : vector<1xf32> to vector<1x1x1xf32>
    %194 = vector.extract %193[0, 0, 0] : f32 from vector<1x1x1xf32>
    %195 = arith.addf %117, %194 : f32
    %cst_70 = arith.constant dense<0.000000e+00> : vector<16x16xf32>
    %196 = tpu.matmul %128, %46, %cst_70 {dimension_numbers = #tpu.dot_dimension_numbers<[1], [0], [0], [1], [0, 0, 1, 1], [], []>} : vector<16x16xf32>, vector<16x16xf32>, vector<16x16xf32> -> vector<16x16xf32>
    %197 = arith.subf %128, %196 : vector<16x16xf32>
    %198 = math.absf %197 : vector<16x16xf32>
    %199 = arith.addf %121, %198 : vector<16x16xf32>
    %200 = vector.extract_strided_slice %128 {offsets = [0, 0], sizes = [15, 16], strides = [1, 1]} : vector<16x16xf32> to vector<15x16xf32>
    %201 = vector.extract_strided_slice %128 {offsets = [1, 0], sizes = [15, 16], strides = [1, 1]} : vector<16x16xf32> to vector<15x16xf32>
    %202 = arith.subf %200, %201 : vector<15x16xf32>
    %203 = math.absf %202 : vector<15x16xf32>
    %204 = arith.addf %126, %203 : vector<15x16xf32>
    %205 = vector.extract_strided_slice %5 {offsets = [2, 0, 0], sizes = [1, 16, 16], strides = [1, 1, 1]} : vector<3x16x16xf32> to vector<1x16x16xf32>
    %206 = vector.shape_cast %205 : vector<1x16x16xf32> to vector<16x16xf32>
    %207 = vector.extract_strided_slice %7 {offsets = [2, 0, 0], sizes = [1, 16, 16], strides = [1, 1, 1]} : vector<3x16x16xf32> to vector<1x16x16xf32>
    %208 = vector.shape_cast %207 : vector<1x16x16xf32> to vector<16x16xf32>
    %209 = arith.subf %206, %208 : vector<16x16xf32>
    %210 = math.absf %209 : vector<16x16xf32>
    %211 = vector.shape_cast %210 : vector<16x16xf32> to vector<1x16x16xf32>
    %cst_71 = arith.constant dense<0.000000e+00> : vector<1xf32>
    %212 = vector.multi_reduction <add>, %211, %cst_71 [1, 2] : vector<1x16x16xf32> to vector<1xf32>
    %213 = vector.shape_cast %212 : vector<1xf32> to vector<1x1x1xf32>
    %214 = vector.extract %213[0, 0, 0] : f32 from vector<1x1x1xf32>
    %215 = arith.addf %137, %214 : f32
    %cst_72 = arith.constant dense<0.000000e+00> : vector<16x16xf32>
    %216 = tpu.matmul %206, %23, %cst_72 {dimension_numbers = #tpu.dot_dimension_numbers<[1], [0], [0], [1], [0, 0, 1, 1], [], []>} : vector<16x16xf32>, vector<16x16xf32>, vector<16x16xf32> -> vector<16x16xf32>
    %cst_73 = arith.constant dense<0.000000e+00> : vector<16x16xf32>
    %217 = tpu.matmul %15, %216, %cst_73 {dimension_numbers = #tpu.dot_dimension_numbers<[1], [0], [0], [1], [0, 0, 1, 1], [], []>} : vector<16x16xf32>, vector<16x16xf32>, vector<16x16xf32> -> vector<16x16xf32>
    %cst_74 = arith.constant 0.111111112 : f32
    %218 = vector.broadcast %cst_74 : f32 to vector<16x16xf32>
    %219 = arith.mulf %217, %218 : vector<16x16xf32>
    %cst_75 = arith.constant dense<0.000000e+00> : vector<16x16xf32>
    %220 = tpu.matmul %208, %23, %cst_75 {dimension_numbers = #tpu.dot_dimension_numbers<[1], [0], [0], [1], [0, 0, 1, 1], [], []>} : vector<16x16xf32>, vector<16x16xf32>, vector<16x16xf32> -> vector<16x16xf32>
    %cst_76 = arith.constant dense<0.000000e+00> : vector<16x16xf32>
    %221 = tpu.matmul %15, %220, %cst_76 {dimension_numbers = #tpu.dot_dimension_numbers<[1], [0], [0], [1], [0, 0, 1, 1], [], []>} : vector<16x16xf32>, vector<16x16xf32>, vector<16x16xf32> -> vector<16x16xf32>
    %cst_77 = arith.constant 0.111111112 : f32
    %222 = vector.broadcast %cst_77 : f32 to vector<16x16xf32>
    %223 = arith.mulf %221, %222 : vector<16x16xf32>
    %224 = arith.mulf %206, %206 : vector<16x16xf32>
    %cst_78 = arith.constant dense<0.000000e+00> : vector<16x16xf32>
    %225 = tpu.matmul %224, %23, %cst_78 {dimension_numbers = #tpu.dot_dimension_numbers<[1], [0], [0], [1], [0, 0, 1, 1], [], []>} : vector<16x16xf32>, vector<16x16xf32>, vector<16x16xf32> -> vector<16x16xf32>
    %cst_79 = arith.constant dense<0.000000e+00> : vector<16x16xf32>
    %226 = tpu.matmul %15, %225, %cst_79 {dimension_numbers = #tpu.dot_dimension_numbers<[1], [0], [0], [1], [0, 0, 1, 1], [], []>} : vector<16x16xf32>, vector<16x16xf32>, vector<16x16xf32> -> vector<16x16xf32>
    %cst_80 = arith.constant 0.111111112 : f32
    %227 = vector.broadcast %cst_80 : f32 to vector<16x16xf32>
    %228 = arith.mulf %226, %227 : vector<16x16xf32>
    %229 = arith.mulf %219, %219 : vector<16x16xf32>
    %230 = arith.subf %228, %229 : vector<16x16xf32>
    %231 = arith.mulf %208, %208 : vector<16x16xf32>
    %cst_81 = arith.constant dense<0.000000e+00> : vector<16x16xf32>
    %232 = tpu.matmul %231, %23, %cst_81 {dimension_numbers = #tpu.dot_dimension_numbers<[1], [0], [0], [1], [0, 0, 1, 1], [], []>} : vector<16x16xf32>, vector<16x16xf32>, vector<16x16xf32> -> vector<16x16xf32>
    %cst_82 = arith.constant dense<0.000000e+00> : vector<16x16xf32>
    %233 = tpu.matmul %15, %232, %cst_82 {dimension_numbers = #tpu.dot_dimension_numbers<[1], [0], [0], [1], [0, 0, 1, 1], [], []>} : vector<16x16xf32>, vector<16x16xf32>, vector<16x16xf32> -> vector<16x16xf32>
    %cst_83 = arith.constant 0.111111112 : f32
    %234 = vector.broadcast %cst_83 : f32 to vector<16x16xf32>
    %235 = arith.mulf %233, %234 : vector<16x16xf32>
    %236 = arith.mulf %223, %223 : vector<16x16xf32>
    %237 = arith.subf %235, %236 : vector<16x16xf32>
    %238 = arith.mulf %206, %208 : vector<16x16xf32>
    %cst_84 = arith.constant dense<0.000000e+00> : vector<16x16xf32>
    %239 = tpu.matmul %238, %23, %cst_84 {dimension_numbers = #tpu.dot_dimension_numbers<[1], [0], [0], [1], [0, 0, 1, 1], [], []>} : vector<16x16xf32>, vector<16x16xf32>, vector<16x16xf32> -> vector<16x16xf32>
    %cst_85 = arith.constant dense<0.000000e+00> : vector<16x16xf32>
    %240 = tpu.matmul %15, %239, %cst_85 {dimension_numbers = #tpu.dot_dimension_numbers<[1], [0], [0], [1], [0, 0, 1, 1], [], []>} : vector<16x16xf32>, vector<16x16xf32>, vector<16x16xf32> -> vector<16x16xf32>
    %cst_86 = arith.constant 0.111111112 : f32
    %241 = vector.broadcast %cst_86 : f32 to vector<16x16xf32>
    %242 = arith.mulf %240, %241 : vector<16x16xf32>
    %243 = arith.mulf %219, %223 : vector<16x16xf32>
    %244 = arith.subf %242, %243 : vector<16x16xf32>
    %cst_87 = arith.constant 2.000000e+00 : f32
    %245 = vector.broadcast %cst_87 : f32 to vector<16x16xf32>
    %246 = arith.mulf %245, %219 : vector<16x16xf32>
    %247 = arith.mulf %246, %223 : vector<16x16xf32>
    %cst_88 = arith.constant 9.99999974E-5 : f32
    %248 = vector.broadcast %cst_88 : f32 to vector<16x16xf32>
    %249 = arith.addf %247, %248 : vector<16x16xf32>
    %cst_89 = arith.constant 2.000000e+00 : f32
    %250 = vector.broadcast %cst_89 : f32 to vector<16x16xf32>
    %251 = arith.mulf %250, %244 : vector<16x16xf32>
    %cst_90 = arith.constant 8.99999984E-4 : f32
    %252 = vector.broadcast %cst_90 : f32 to vector<16x16xf32>
    %253 = arith.addf %251, %252 : vector<16x16xf32>
    %254 = arith.mulf %249, %253 : vector<16x16xf32>
    %255 = arith.mulf %219, %219 : vector<16x16xf32>
    %256 = arith.mulf %223, %223 : vector<16x16xf32>
    %257 = arith.addf %255, %256 : vector<16x16xf32>
    %cst_91 = arith.constant 9.99999974E-5 : f32
    %258 = vector.broadcast %cst_91 : f32 to vector<16x16xf32>
    %259 = arith.addf %257, %258 : vector<16x16xf32>
    %260 = arith.addf %230, %237 : vector<16x16xf32>
    %cst_92 = arith.constant 8.99999984E-4 : f32
    %261 = vector.broadcast %cst_92 : f32 to vector<16x16xf32>
    %262 = arith.addf %260, %261 : vector<16x16xf32>
    %263 = arith.mulf %259, %262 : vector<16x16xf32>
    %264 = arith.divf %254, %263 : vector<16x16xf32>
    %cst_93 = arith.constant 1.000000e+00 : f32
    %265 = vector.broadcast %cst_93 : f32 to vector<16x16xf32>
    %266 = arith.subf %265, %264 : vector<16x16xf32>
    %cst_94 = arith.constant 5.000000e-01 : f32
    %267 = vector.broadcast %cst_94 : f32 to vector<16x16xf32>
    %268 = arith.mulf %266, %267 : vector<16x16xf32>
    %269 = vector.shape_cast %268 : vector<16x16xf32> to vector<1x16x16xf32>
    %cst_95 = arith.constant dense<0.000000e+00> : vector<1xf32>
    %270 = vector.multi_reduction <add>, %269, %cst_95 [1, 2] : vector<1x16x16xf32> to vector<1xf32>
    %271 = vector.shape_cast %270 : vector<1xf32> to vector<1x1x1xf32>
    %272 = vector.extract %271[0, 0, 0] : f32 from vector<1x1x1xf32>
    %273 = arith.addf %195, %272 : f32
    %cst_96 = arith.constant dense<0.000000e+00> : vector<16x16xf32>
    %274 = tpu.matmul %206, %46, %cst_96 {dimension_numbers = #tpu.dot_dimension_numbers<[1], [0], [0], [1], [0, 0, 1, 1], [], []>} : vector<16x16xf32>, vector<16x16xf32>, vector<16x16xf32> -> vector<16x16xf32>
    %275 = arith.subf %206, %274 : vector<16x16xf32>
    %276 = math.absf %275 : vector<16x16xf32>
    %277 = arith.addf %199, %276 : vector<16x16xf32>
    %278 = vector.extract_strided_slice %206 {offsets = [0, 0], sizes = [15, 16], strides = [1, 1]} : vector<16x16xf32> to vector<15x16xf32>
    %279 = vector.extract_strided_slice %206 {offsets = [1, 0], sizes = [15, 16], strides = [1, 1]} : vector<16x16xf32> to vector<15x16xf32>
    %280 = arith.subf %278, %279 : vector<15x16xf32>
    %281 = math.absf %280 : vector<15x16xf32>
    %282 = arith.addf %204, %281 : vector<15x16xf32>
    %cst_97 = arith.constant -3.33333325 : f32
    %283 = vector.broadcast %cst_97 : f32 to vector<16x16xf32>
    %284 = arith.mulf %277, %283 : vector<16x16xf32>
    %285 = math.exp %284 : vector<16x16xf32>
    %cst_98 = arith.constant -3.33333325 : f32
    %286 = vector.broadcast %cst_98 : f32 to vector<15x16xf32>
    %287 = arith.mulf %282, %286 : vector<15x16xf32>
    %288 = math.exp %287 : vector<15x16xf32>
    %cst_99 = arith.constant dense<0.000000e+00> : vector<16x16xf32>
    %289 = tpu.matmul %1, %46, %cst_99 {dimension_numbers = #tpu.dot_dimension_numbers<[1], [0], [0], [1], [0, 0, 1, 1], [], []>} : vector<16x16xf32>, vector<16x16xf32>, vector<16x16xf32> -> vector<16x16xf32>
    %290 = arith.subf %1, %289 : vector<16x16xf32>
    %cst_100 = arith.constant dense<0.000000e+00> : vector<16x16xf32>
    %291 = tpu.matmul %290, %46, %cst_100 {dimension_numbers = #tpu.dot_dimension_numbers<[1], [0], [0], [1], [0, 0, 1, 1], [], []>} : vector<16x16xf32>, vector<16x16xf32>, vector<16x16xf32> -> vector<16x16xf32>
    %292 = arith.subf %290, %291 : vector<16x16xf32>
    %293 = vector.extract_strided_slice %1 {offsets = [0, 0], sizes = [15, 16], strides = [1, 1]} : vector<16x16xf32> to vector<15x16xf32>
    %294 = vector.extract_strided_slice %1 {offsets = [1, 0], sizes = [15, 16], strides = [1, 1]} : vector<16x16xf32> to vector<15x16xf32>
    %295 = arith.subf %293, %294 : vector<15x16xf32>
    %296 = vector.extract_strided_slice %295 {offsets = [0, 0], sizes = [14, 16], strides = [1, 1]} : vector<15x16xf32> to vector<14x16xf32>
    %297 = vector.extract_strided_slice %295 {offsets = [1, 0], sizes = [14, 16], strides = [1, 1]} : vector<15x16xf32> to vector<14x16xf32>
    %298 = arith.subf %296, %297 : vector<14x16xf32>
    %299 = tpu.iota {dimensions = array<i32: 1>} : vector<16x16xi32>
    %c14_i32 = arith.constant 14 : i32
    %300 = vector.broadcast %c14_i32 : i32 to vector<16x16xi32>
    %301 = arith.cmpi slt, %299, %300 : vector<16x16xi32>
    %302 = arith.extui %301 : vector<16x16xi1> to vector<16x16xi32>
    %303 = arith.sitofp %302 : vector<16x16xi32> to vector<16x16xf32>
    %304 = math.absf %290 : vector<16x16xf32>
    %305 = arith.mulf %304, %285 : vector<16x16xf32>
    %306 = arith.mulf %305, %303 : vector<16x16xf32>
    %307 = vector.shape_cast %306 : vector<16x16xf32> to vector<1x16x16xf32>
    %cst_101 = arith.constant dense<0.000000e+00> : vector<1xf32>
    %308 = vector.multi_reduction <add>, %307, %cst_101 [1, 2] : vector<1x16x16xf32> to vector<1xf32>
    %309 = vector.shape_cast %308 : vector<1xf32> to vector<1x1x1xf32>
    %310 = vector.extract %309[0, 0, 0] : f32 from vector<1x1x1xf32>
    %311 = math.absf %292 : vector<16x16xf32>
    %312 = arith.mulf %311, %285 : vector<16x16xf32>
    %313 = arith.mulf %312, %303 : vector<16x16xf32>
    %314 = vector.shape_cast %313 : vector<16x16xf32> to vector<1x16x16xf32>
    %cst_102 = arith.constant dense<0.000000e+00> : vector<1xf32>
    %315 = vector.multi_reduction <add>, %314, %cst_102 [1, 2] : vector<1x16x16xf32> to vector<1xf32>
    %316 = vector.shape_cast %315 : vector<1xf32> to vector<1x1x1xf32>
    %317 = vector.extract %316[0, 0, 0] : f32 from vector<1x1x1xf32>
    %318 = vector.extract_strided_slice %295 {offsets = [0, 0], sizes = [14, 16], strides = [1, 1]} : vector<15x16xf32> to vector<14x16xf32>
    %319 = math.absf %318 : vector<14x16xf32>
    %320 = vector.extract_strided_slice %288 {offsets = [0, 0], sizes = [14, 16], strides = [1, 1]} : vector<15x16xf32> to vector<14x16xf32>
    %321 = arith.mulf %319, %320 : vector<14x16xf32>
    %322 = vector.shape_cast %321 : vector<14x16xf32> to vector<1x14x16xf32>
    %cst_103 = arith.constant dense<0.000000e+00> : vector<1xf32>
    %323 = vector.multi_reduction <add>, %322, %cst_103 [1, 2] : vector<1x14x16xf32> to vector<1xf32>
    %324 = vector.shape_cast %323 : vector<1xf32> to vector<1x1x1xf32>
    %325 = vector.extract %324[0, 0, 0] : f32 from vector<1x1x1xf32>
    %326 = math.absf %298 : vector<14x16xf32>
    %327 = vector.extract_strided_slice %288 {offsets = [0, 0], sizes = [14, 16], strides = [1, 1]} : vector<15x16xf32> to vector<14x16xf32>
    %328 = arith.mulf %326, %327 : vector<14x16xf32>
    %329 = vector.shape_cast %328 : vector<14x16xf32> to vector<1x14x16xf32>
    %cst_104 = arith.constant dense<0.000000e+00> : vector<1xf32>
    %330 = vector.multi_reduction <add>, %329, %cst_104 [1, 2] : vector<1x14x16xf32> to vector<1xf32>
    %331 = vector.shape_cast %330 : vector<1xf32> to vector<1x1x1xf32>
    %332 = vector.extract %331[0, 0, 0] : f32 from vector<1x1x1xf32>
    %cst_105 = arith.constant 0.000000e+00 : f32
    %333 = vector.broadcast %cst_105 : f32 to vector<16x16xf32>
    %334 = arith.cmpf ogt, %3, %333 : vector<16x16xf32>
    %335 = arith.extui %334 : vector<16x16xi1> to vector<16x16xi32>
    %336 = arith.sitofp %335 : vector<16x16xi32> to vector<16x16xf32>
    %337 = vector.shape_cast %336 : vector<16x16xf32> to vector<1x16x16xf32>
    %cst_106 = arith.constant dense<0.000000e+00> : vector<1xf32>
    %338 = vector.multi_reduction <add>, %337, %cst_106 [1, 2] : vector<1x16x16xf32> to vector<1xf32>
    %339 = vector.shape_cast %338 : vector<1xf32> to vector<1x1x1xf32>
    %340 = vector.extract %339[0, 0, 0] : f32 from vector<1x1x1xf32>
    %341 = arith.subf %1, %3 : vector<16x16xf32>
    %342 = math.absf %341 : vector<16x16xf32>
    %343 = arith.mulf %342, %336 : vector<16x16xf32>
    %344 = vector.shape_cast %343 : vector<16x16xf32> to vector<1x16x16xf32>
    %cst_107 = arith.constant dense<0.000000e+00> : vector<1xf32>
    %345 = vector.multi_reduction <add>, %344, %cst_107 [1, 2] : vector<1x16x16xf32> to vector<1xf32>
    %346 = vector.shape_cast %345 : vector<1xf32> to vector<1x1x1xf32>
    %347 = vector.extract %346[0, 0, 0] : f32 from vector<1x1x1xf32>
    %348 = arith.mulf %3, %336 : vector<16x16xf32>
    %349 = vector.shape_cast %348 : vector<16x16xf32> to vector<1x16x16xf32>
    %cst_108 = arith.constant dense<0.000000e+00> : vector<1xf32>
    %350 = vector.multi_reduction <add>, %349, %cst_108 [1, 2] : vector<1x16x16xf32> to vector<1xf32>
    %351 = vector.shape_cast %350 : vector<1xf32> to vector<1x1x1xf32>
    %352 = vector.extract %351[0, 0, 0] : f32 from vector<1x1x1xf32>
    %353 = arith.mulf %3, %3 : vector<16x16xf32>
    %354 = arith.mulf %353, %336 : vector<16x16xf32>
    %355 = vector.shape_cast %354 : vector<16x16xf32> to vector<1x16x16xf32>
    %cst_109 = arith.constant dense<0.000000e+00> : vector<1xf32>
    %356 = vector.multi_reduction <add>, %355, %cst_109 [1, 2] : vector<1x16x16xf32> to vector<1xf32>
    %357 = vector.shape_cast %356 : vector<1xf32> to vector<1x1x1xf32>
    %358 = vector.extract %357[0, 0, 0] : f32 from vector<1x1x1xf32>
    %cst_110 = arith.constant dense<0.000000e+00> : vector<16x16xf32>
    %359 = tpu.matmul %336, %39, %cst_110 {dimension_numbers = #tpu.dot_dimension_numbers<[1], [0], [0], [1], [0, 0, 1, 1], [], []>} : vector<16x16xf32>, vector<16x16xf32>, vector<16x16xf32> -> vector<16x16xf32>
    %cst_111 = arith.constant dense<0.000000e+00> : vector<16x16xf32>
    %360 = tpu.matmul %31, %359, %cst_111 {dimension_numbers = #tpu.dot_dimension_numbers<[1], [0], [0], [1], [0, 0, 1, 1], [], []>} : vector<16x16xf32>, vector<16x16xf32>, vector<16x16xf32> -> vector<16x16xf32>
    %cst_112 = arith.constant 5.000000e-01 : f32
    %361 = vector.broadcast %cst_112 : f32 to vector<16x16xf32>
    %362 = arith.cmpf ogt, %360, %361 : vector<16x16xf32>
    %363 = arith.extui %362 : vector<16x16xi1> to vector<16x16xi32>
    %364 = arith.sitofp %363 : vector<16x16xi32> to vector<16x16xf32>
    %365 = vector.shape_cast %364 : vector<16x16xf32> to vector<1x16x16xf32>
    %cst_113 = arith.constant dense<0.000000e+00> : vector<1xf32>
    %366 = vector.multi_reduction <add>, %365, %cst_113 [1, 2] : vector<1x16x16xf32> to vector<1xf32>
    %367 = vector.shape_cast %366 : vector<1xf32> to vector<1x1x1xf32>
    %368 = vector.extract %367[0, 0, 0] : f32 from vector<1x1x1xf32>
    %369 = arith.mulf %1, %364 : vector<16x16xf32>
    %370 = vector.shape_cast %369 : vector<16x16xf32> to vector<1x16x16xf32>
    %cst_114 = arith.constant dense<0.000000e+00> : vector<1xf32>
    %371 = vector.multi_reduction <add>, %370, %cst_114 [1, 2] : vector<1x16x16xf32> to vector<1xf32>
    %372 = vector.shape_cast %371 : vector<1xf32> to vector<1x1x1xf32>
    %373 = vector.extract %372[0, 0, 0] : f32 from vector<1x1x1xf32>
    %374 = arith.mulf %1, %1 : vector<16x16xf32>
    %375 = arith.mulf %374, %364 : vector<16x16xf32>
    %376 = vector.shape_cast %375 : vector<16x16xf32> to vector<1x16x16xf32>
    %cst_115 = arith.constant dense<0.000000e+00> : vector<1xf32>
    %377 = vector.multi_reduction <add>, %376, %cst_115 [1, 2] : vector<1x16x16xf32> to vector<1xf32>
    %378 = vector.shape_cast %377 : vector<1xf32> to vector<1x1x1xf32>
    %379 = vector.extract %378[0, 0, 0] : f32 from vector<1x1x1xf32>
    %380 = tpu.iota {dimensions = array<i32: 0>} : vector<16x128xi32>
    %cst_116 = arith.constant 0.000000e+00 : f32
    %381 = vector.broadcast %cst_116 : f32 to vector<16x128xf32>
    %c0_i32 = arith.constant 0 : i32
    %382 = vector.broadcast %c0_i32 : i32 to vector<16x128xi32>
    %383 = arith.cmpi eq, %380, %382 : vector<16x128xi32>
    %384 = vector.broadcast %215 : f32 to vector<16x128xf32>
    %385 = arith.select %383, %384, %381 : vector<16x128xi1>, vector<16x128xf32>
    %c1_i32_117 = arith.constant 1 : i32
    %386 = vector.broadcast %c1_i32_117 : i32 to vector<16x128xi32>
    %387 = arith.cmpi eq, %380, %386 : vector<16x128xi32>
    %388 = vector.broadcast %273 : f32 to vector<16x128xf32>
    %389 = arith.select %387, %388, %385 : vector<16x128xi1>, vector<16x128xf32>
    %c2_i32 = arith.constant 2 : i32
    %390 = vector.broadcast %c2_i32 : i32 to vector<16x128xi32>
    %391 = arith.cmpi eq, %380, %390 : vector<16x128xi32>
    %392 = vector.broadcast %340 : f32 to vector<16x128xf32>
    %393 = arith.select %391, %392, %389 : vector<16x128xi1>, vector<16x128xf32>
    %c3_i32 = arith.constant 3 : i32
    %394 = vector.broadcast %c3_i32 : i32 to vector<16x128xi32>
    %395 = arith.cmpi eq, %380, %394 : vector<16x128xi32>
    %396 = vector.broadcast %347 : f32 to vector<16x128xf32>
    %397 = arith.select %395, %396, %393 : vector<16x128xi1>, vector<16x128xf32>
    %c4_i32 = arith.constant 4 : i32
    %398 = vector.broadcast %c4_i32 : i32 to vector<16x128xi32>
    %399 = arith.cmpi eq, %380, %398 : vector<16x128xi32>
    %400 = vector.broadcast %352 : f32 to vector<16x128xf32>
    %401 = arith.select %399, %400, %397 : vector<16x128xi1>, vector<16x128xf32>
    %c5_i32 = arith.constant 5 : i32
    %402 = vector.broadcast %c5_i32 : i32 to vector<16x128xi32>
    %403 = arith.cmpi eq, %380, %402 : vector<16x128xi32>
    %404 = vector.broadcast %358 : f32 to vector<16x128xf32>
    %405 = arith.select %403, %404, %401 : vector<16x128xi1>, vector<16x128xf32>
    %c6_i32 = arith.constant 6 : i32
    %406 = vector.broadcast %c6_i32 : i32 to vector<16x128xi32>
    %407 = arith.cmpi eq, %380, %406 : vector<16x128xi32>
    %408 = vector.broadcast %310 : f32 to vector<16x128xf32>
    %409 = arith.select %407, %408, %405 : vector<16x128xi1>, vector<16x128xf32>
    %c7_i32 = arith.constant 7 : i32
    %410 = vector.broadcast %c7_i32 : i32 to vector<16x128xi32>
    %411 = arith.cmpi eq, %380, %410 : vector<16x128xi32>
    %412 = vector.broadcast %325 : f32 to vector<16x128xf32>
    %413 = arith.select %411, %412, %409 : vector<16x128xi1>, vector<16x128xf32>
    %c8_i32 = arith.constant 8 : i32
    %414 = vector.broadcast %c8_i32 : i32 to vector<16x128xi32>
    %415 = arith.cmpi eq, %380, %414 : vector<16x128xi32>
    %416 = vector.broadcast %317 : f32 to vector<16x128xf32>
    %417 = arith.select %415, %416, %413 : vector<16x128xi1>, vector<16x128xf32>
    %c9_i32 = arith.constant 9 : i32
    %418 = vector.broadcast %c9_i32 : i32 to vector<16x128xi32>
    %419 = arith.cmpi eq, %380, %418 : vector<16x128xi32>
    %420 = vector.broadcast %332 : f32 to vector<16x128xf32>
    %421 = arith.select %419, %420, %417 : vector<16x128xi1>, vector<16x128xf32>
    %c10_i32_118 = arith.constant 10 : i32
    %422 = vector.broadcast %c10_i32_118 : i32 to vector<16x128xi32>
    %423 = arith.cmpi eq, %380, %422 : vector<16x128xi32>
    %424 = vector.broadcast %368 : f32 to vector<16x128xf32>
    %425 = arith.select %423, %424, %421 : vector<16x128xi1>, vector<16x128xf32>
    %c11_i32 = arith.constant 11 : i32
    %426 = vector.broadcast %c11_i32 : i32 to vector<16x128xi32>
    %427 = arith.cmpi eq, %380, %426 : vector<16x128xi32>
    %428 = vector.broadcast %373 : f32 to vector<16x128xf32>
    %429 = arith.select %427, %428, %425 : vector<16x128xi1>, vector<16x128xf32>
    %c12_i32 = arith.constant 12 : i32
    %430 = vector.broadcast %c12_i32 : i32 to vector<16x128xi32>
    %431 = arith.cmpi eq, %380, %430 : vector<16x128xi32>
    %432 = vector.broadcast %379 : f32 to vector<16x128xf32>
    %433 = arith.select %431, %432, %429 : vector<16x128xi1>, vector<16x128xf32>
    %c0_119 = arith.constant 0 : index
    %c0_120 = arith.constant 0 : index
    %c0_121 = arith.constant 0 : index
    %434 = vector.load %arg5[%c0_119, %c0_120, %c0_121] : memref<1x16x128xf32, #tpu.memory_space<vmem>>, vector<1x16x128xf32>
    %435 = vector.shape_cast %434 : vector<1x16x128xf32> to vector<16x128xf32>
    %436 = vector.shape_cast %433 : vector<16x128xf32> to vector<1x16x128xf32>
    tpu.vector_store %arg5[%c0_119, %c0_120, %c0_121], %436 {strides = array<i32>} : memref<1x16x128xf32, #tpu.memory_space<vmem>>, vector<1x16x128xf32>,
    return
  }
  func.func @transform_0(%arg0: i32) -> (i32, i32, i32) {
    %c0_i32 = arith.constant 0 : i32
    %c0_i32_0 = arith.constant 0 : i32
    %c0_i32_1 = arith.constant 0 : i32
    return %arg0, %c0_i32, %c0_i32_0 : i32, i32, i32
  }
  func.func @transform_1(%arg0: i32) -> (i32, i32, i32) {
    %c0_i32 = arith.constant 0 : i32
    %c0_i32_0 = arith.constant 0 : i32
    %c0_i32_1 = arith.constant 0 : i32
    return %arg0, %c0_i32, %c0_i32_0 : i32, i32, i32
  }
  func.func @transform_2(%arg0: i32) -> (i32, i32, i32, i32) {
    %c0_i32 = arith.constant 0 : i32
    %c0_i32_0 = arith.constant 0 : i32
    %c0_i32_1 = arith.constant 0 : i32
    %c0_i32_2 = arith.constant 0 : i32
    return %arg0, %c0_i32, %c0_i32_0, %c0_i32_1 : i32, i32, i32, i32
  }
  func.func @transform_3(%arg0: i32) -> (i32, i32, i32, i32) {
    %c0_i32 = arith.constant 0 : i32
    %c0_i32_0 = arith.constant 0 : i32
    %c0_i32_1 = arith.constant 0 : i32
    %c0_i32_2 = arith.constant 0 : i32
    return %arg0, %c0_i32, %c0_i32_0, %c0_i32_1 : i32, i32, i32, i32
  }
  func.func @transform_4(%arg0: i32) -> (i32, i32, i32) {
    %c0_i32 = arith.constant 0 : i32
    %c0_i32_0 = arith.constant 0 : i32
    %c0_i32_1 = arith.constant 0 : i32
    return %arg0, %c0_i32, %c0_i32_0 : i32, i32, i32
  }
}

</mosaic_0001>

<llo_original>
// kernel: tpu_custom_call.1
$region0: #{tpu_custom_call.1}
  #allocation0 [shape = 'u32[]', space=smem, size = 0x4, offset = 0x4, fixed_abs, tag = 'smem constant byte address 0x4 - core index']
  #allocation1 [shape = 'u32[144,128]{1,0:T(1,128)}', space=vmem, size = 0x12000, scoped, tag = 'internal scratch']
  %s0 = inlined_call_operand.hbm [shape: f32[2,16,16], index: 0, kind: input, shape index: {}]
  %s1 = inlined_call_operand.hbm [shape: f32[2,16,16], index: 1, kind: input, shape index: {}]
  %s2 = inlined_call_operand.hbm [shape: f32[2,3,16,16], index: 2, kind: input, shape index: {}]
  %s3 = inlined_call_operand.hbm [shape: f32[2,3,16,16], index: 3, kind: input, shape index: {}]
  %s4 = inlined_call_operand.hbm [shape: f32[2,16,128], index: 4, kind: output, shape index: {}]
  %s5 = sld [smem:[#allocation0]]
  $region65: #{tpu_custom_call.1} parent=0
    _
  %s7 = ssub.s32 1, %s5
  %s8 = scalar_select 0, %s7, %s5
  $region1: #{tpu_custom_call.1} parent=0
    #allocation2 [shape = 'u8[16384]{0}', space=vmem, size = 0x4000, scoped, tag = 'input window, operand 0']
    #allocation3 [shape = 's32[2]{0}', space=sflag, size = 0x8, scoped, tag = 'scoped memory for tpu_custom_call.1']
    #allocation4 [shape = 's32[2]{0}', space=sflag, size = 0x8, scoped, tag = 'scoped memory for tpu_custom_call.1']
    #allocation5 [shape = 'u8[16384]{0}', space=vmem, size = 0x4000, scoped, tag = 'input window, operand 1']
    #allocation6 [shape = 's32[2]{0}', space=sflag, size = 0x8, scoped, tag = 'scoped memory for tpu_custom_call.1']
    #allocation7 [shape = 'u8[49152]{0}', space=vmem, size = 0xc000, scoped, tag = 'input window, operand 2']
    #allocation8 [shape = 'u8[49152]{0}', space=vmem, size = 0xc000, scoped, tag = 'input window, operand 3']
    #allocation9 [shape = 's32[2]{0}', space=sflag, size = 0x8, scoped, tag = 'scoped memory for tpu_custom_call.1']
    #allocation10 [shape = 'u8[16384]{0}', space=vmem, size = 0x4000, scoped, tag = 'output window, operand 0']
    %9 = vsyncpa [#allocation3], 0
    %s10 = scalar_lea.sflag [#allocation3], 1
    %11 = vsyncpa %s10, 0
    %12 = vsyncpa [#allocation6], 0
    %s13 = scalar_lea.sflag [#allocation6], 1
    %14 = vsyncpa %s13, 0
    %15 = vsyncpa [#allocation9], 0
    %s16 = scalar_lea.sflag [#allocation9], 1
    %17 = vsyncpa %s16, 0
    %18 = vsyncpa [#allocation4], 0
    %s19 = scalar_lea.sflag [#allocation4], 1
    %20 = vsyncpa %s19, 0
    loop: start=0, step=1, limit=4
    $region2: #{tpu_custom_call.1} parent=1 // loop_pre_header
      _
    $region3: #{tpu_custom_call.1} parent=1 // loop_header
      %s22 = sphi 0, %s26
      %p23 = scmp.ge.s32.totalorder %s22, 4
      %s32 = sphi 0, %s34
      %s35 = sphi 0, %s32
      %s36 = sphi 0, %s35
      %s52 = sphi 0, %s36
      %s58 = sphi 0, %s60
      %s61 = sphi 0, %s58
      %s62 = sphi 0, %s61
      %s78 = sphi 0, %s62
      %s84 = sphi 0, %s86
      %s87 = sphi 0, %s84
      %s88 = sphi 0, %s87
      %s104 = sphi 0, %s88
      %s110 = sphi 0, %s112
      %s113 = sphi 0, %s110
      %s114 = sphi 0, %s113
      %s130 = sphi 0, %s114
      %s136 = sphi 0, %s138
      %s139 = sphi 0, %s136
      %s140 = sphi 0, %s139
      %s156 = sphi 0, %s140
    $region4: #{tpu_custom_call.1} parent=1 // loop_header_branch
      %25 = sbr.rel (%p23) target = $region8
    $region5: #{tpu_custom_call.1} parent=1 // loop_body
      %s27 = ssub.s32 %s22, 1
      %s28 = ssub.s32 %s22, 2
      %s29 = sadd.s32 %s22, 1
      %s30 = ssub.s32 %s22, %s29
      %p31 = scmp.eq.s32.totalorder %s30, 0
      %s33 = sadd.s32 %s32, 1
      %s34 = scalar_select %p31, %s32, %s33
      %p37 = pneg %p31
      %p38 = scmp.eq.s32.totalorder %s22, 1
      %p39 = por %p37, %p38
      %p40 = scmp.ne.s32.totalorder %s32, %s35
      %p41 = scmp.eq.s32.totalorder %s22, 0
      %p42 = por %p40, %p41
      %p43 = scmp.ne.s32.totalorder %s32, %s35
      %p44 = scmp.eq.s32.totalorder %s27, 1
      %p45 = por %p43, %p44
      %p46 = scmp.ne.s32.totalorder %s35, %s36
      %p47 = scmp.eq.s32.totalorder %s27, 0
      %p48 = por %p46, %p47
      %p49 = scmp.ne.s32.totalorder %s35, %s36
      %p50 = scmp.eq.s32.totalorder %s28, 1
      %p51 = por %p49, %p50
      %p53 = scmp.ne.s32.totalorder %s36, %s52
      %p54 = scmp.eq.s32.totalorder %s28, 0
      %p55 = por %p53, %p54
      %s56 = ssub.s32 %s22, %s29
      %p57 = scmp.eq.s32.totalorder %s56, 0
      %s59 = sadd.s32 %s58, 1
      %s60 = scalar_select %p57, %s58, %s59
      %p63 = pneg %p57
      %p64 = scmp.eq.s32.totalorder %s22, 1
      %p65 = por %p63, %p64
      %p66 = scmp.ne.s32.totalorder %s58, %s61
      %p67 = scmp.eq.s32.totalorder %s22, 0
      %p68 = por %p66, %p67
      %p69 = scmp.ne.s32.totalorder %s58, %s61
      %p70 = scmp.eq.s32.totalorder %s27, 1
      %p71 = por %p69, %p70
      %p72 = scmp.ne.s32.totalorder %s61, %s62
      %p73 = scmp.eq.s32.totalorder %s27, 0
      %p74 = por %p72, %p73
      %p75 = scmp.ne.s32.totalorder %s61, %s62
      %p76 = scmp.eq.s32.totalorder %s28, 1
      %p77 = por %p75, %p76
      %p79 = scmp.ne.s32.totalorder %s62, %s78
      %p80 = scmp.eq.s32.totalorder %s28, 0
      %p81 = por %p79, %p80
      %s82 = ssub.s32 %s22, %s29
      %p83 = scmp.eq.s32.totalorder %s82, 0
      %s85 = sadd.s32 %s84, 1
      %s86 = scalar_select %p83, %s84, %s85
      %p89 = pneg %p83
      %p90 = scmp.eq.s32.totalorder %s22, 1
      %p91 = por %p89, %p90
      %p92 = scmp.ne.s32.totalorder %s84, %s87
      %p93 = scmp.eq.s32.totalorder %s22, 0
      %p94 = por %p92, %p93
      %p95 = scmp.ne.s32.totalorder %s84, %s87
      %p96 = scmp.eq.s32.totalorder %s27, 1
      %p97 = por %p95, %p96
      %p98 = scmp.ne.s32.totalorder %s87, %s88
      %p99 = scmp.eq.s32.totalorder %s27, 0
      %p100 = por %p98, %p99
      %p101 = scmp.ne.s32.totalorder %s87, %s88
      %p102 = scmp.eq.s32.totalorder %s28, 1
      %p103 = por %p101, %p102
      %p105 = scmp.ne.s32.totalorder %s88, %s104
      %p106 = scmp.eq.s32.totalorder %s28, 0
      %p107 = por %p105, %p106
      %s108 = ssub.s32 %s22, %s29
      %p109 = scmp.eq.s32.totalorder %s108, 0
      %s111 = sadd.s32 %s110, 1
      %s112 = scalar_select %p109, %s110, %s111
      %p115 = pneg %p109
      %p116 = scmp.eq.s32.totalorder %s22, 1
      %p117 = por %p115, %p116
      %p118 = scmp.ne.s32.totalorder %s110, %s113
      %p119 = scmp.eq.s32.totalorder %s22, 0
      %p120 = por %p118, %p119
      %p121 = scmp.ne.s32.totalorder %s110, %s113
      %p122 = scmp.eq.s32.totalorder %s27, 1
      %p123 = por %p121, %p122
      %p124 = scmp.ne.s32.totalorder %s113, %s114
      %p125 = scmp.eq.s32.totalorder %s27, 0
      %p126 = por %p124, %p125
      %p127 = scmp.ne.s32.totalorder %s113, %s114
      %p128 = scmp.eq.s32.totalorder %s28, 1
      %p129 = por %p127, %p128
      %p131 = scmp.ne.s32.totalorder %s114, %s130
      %p132 = scmp.eq.s32.totalorder %s28, 0
      %p133 = por %p131, %p132
      %s134 = ssub.s32 %s22, %s29
      %p135 = scmp.eq.s32.totalorder %s134, 0
      %s137 = sadd.s32 %s136, 1
      %s138 = scalar_select %p135, %s136, %s137
      %p141 = pneg %p135
      %p142 = scmp.eq.s32.totalorder %s22, 1
      %p143 = por %p141, %p142
      %p144 = scmp.ne.s32.totalorder %s136, %s139
      %p145 = scmp.eq.s32.totalorder %s22, 0
      %p146 = por %p144, %p145
      %p147 = scmp.ne.s32.totalorder %s136, %s139
      %p148 = scmp.eq.s32.totalorder %s27, 1
      %p149 = por %p147, %p148
      %p150 = scmp.ne.s32.totalorder %s139, %s140
      %p151 = scmp.eq.s32.totalorder %s27, 0
      %p152 = por %p150, %p151
      %p153 = scmp.ne.s32.totalorder %s139, %s140
      %p154 = scmp.eq.s32.totalorder %s28, 1
      %p155 = por %p153, %p154
      %p157 = scmp.ne.s32.totalorder %s140, %s156
      %p158 = scmp.eq.s32.totalorder %s28, 0
      %p159 = por %p157, %p158
      %p160 = scmp.le.s32.totalorder 1, %s22
      %p161 = scmp.lt.s32.totalorder %s22, 3
      %p162 = pnand %p160, %p161
      %p163 = pneg %p162
      // Predicated region
      $region9: #{tpu_custom_call.1} parent=5 // pred_check
        _
      $region10: #{tpu_custom_call.1} parent=5 // pred_check_branch
        %165 = sbr.rel (%p162) target = $region12
      $region11: #{tpu_custom_call.1} parent=5 // pred_region
        %s166 = ssub.s32 %s22, 1
      $region12: #{tpu_custom_call.1} parent=5 // pred_fallthru
        _
      %p167 = scmp.lt.s32.totalorder %s22, 2
      // Predicated region
      $region13: #{tpu_custom_call.1} parent=5 // pred_check
        %p168 = pneg %p167
      $region14: #{tpu_custom_call.1} parent=5 // pred_check_branch
        %170 = sbr.rel (%p168) target = $region16
      $region15: #{tpu_custom_call.1} parent=5 // pred_region
        // Predicated region
        $region17: #{tpu_custom_call.1} parent=15 // pred_check
          %p171 = pneg %p42
        $region18: #{tpu_custom_call.1} parent=15 // pred_check_branch
          %173 = sbr.rel (%p171) target = $region20
        $region19: #{tpu_custom_call.1} parent=15 // pred_region
          %s174 = sand.u32 %s32, 1
          %s175 = scalar_lea.sflag [#allocation3], %s174
          %s176 = sand.u32 %s32, 1
          %s177 = smul.addr %s176, 16
          %s178 = scalar_lea.vmem [#allocation2], %s177
          %s180 = ssub.s32 256, 256
          %181 = vsyncadd %s175, %s180
          %s182 = smul.addr %s22, 2
          %s183 = smul.addr %s182, 128
          %s184 = scalar_lea.hbm %s0, %s183
          %s185 = sshll.u32 %s178, 4
          %s186 = int_to_ptr.vmem [resolvable:$true] %s185
          %191 = dma.hbm_to_vmem [thread:$0]  %s184, 256, %s186, %s175, 128, 128, 8
        $region20: #{tpu_custom_call.1} parent=15 // pred_fallthru
          _
        // Predicated region
        $region21: #{tpu_custom_call.1} parent=15 // pred_check
          %p192 = pneg %p68
        $region22: #{tpu_custom_call.1} parent=15 // pred_check_branch
          %194 = sbr.rel (%p192) target = $region24
        $region23: #{tpu_custom_call.1} parent=15 // pred_region
          %s195 = sand.u32 %s22, 1
          %s196 = scalar_lea.sflag [#allocation6], %s195
          %s197 = sand.u32 %s58, 1
          %s198 = smul.addr %s197, 16
          %s199 = scalar_lea.vmem [#allocation5], %s198
          %s201 = ssub.s32 256, 256
          %202 = vsyncadd %s196, %s201
          %s203 = smul.addr %s22, 2
          %s204 = smul.addr %s203, 128
          %s205 = scalar_lea.hbm %s1, %s204
          %s206 = sshll.u32 %s199, 4
          %s207 = int_to_ptr.vmem [resolvable:$true] %s206
          %212 = dma.hbm_to_vmem [thread:$0]  %s205, 256, %s207, %s196, 128, 128, 8
        $region24: #{tpu_custom_call.1} parent=15 // pred_fallthru
          _
        // Predicated region
        $region25: #{tpu_custom_call.1} parent=15 // pred_check
          %p213 = pneg %p94
        $region26: #{tpu_custom_call.1} parent=15 // pred_check_branch
          %215 = sbr.rel (%p213) target = $region28
        $region27: #{tpu_custom_call.1} parent=15 // pred_region
          %s216 = sand.u32 %s22, 1
          %s217 = scalar_lea.sflag [#allocation6], %s216
          %s218 = sand.u32 %s84, 1
          %s219 = smul.addr %s218, 48
          %s220 = scalar_lea.vmem [#allocation7], %s219
          %s222 = ssub.s32 768, 768
          %223 = vsyncadd %s217, %s222
          %s224 = smul.addr %s22, 6
          %s225 = smul.addr %s224, 128
          %s226 = scalar_lea.hbm %s2, %s225
          %s227 = sshll.u32 %s220, 4
          %s228 = int_to_ptr.vmem [resolvable:$true] %s227
          %233 = dma.hbm_to_vmem [thread:$0]  %s226, 768, %s228, %s217, 128, 128, 8
        $region28: #{tpu_custom_call.1} parent=15 // pred_fallthru
          _
        // Predicated region
        $region29: #{tpu_custom_call.1} parent=15 // pred_check
          %p234 = pneg %p120
        $region30: #{tpu_custom_call.1} parent=15 // pred_check_branch
          %236 = sbr.rel (%p234) target = $region32
        $region31: #{tpu_custom_call.1} parent=15 // pred_region
          %s237 = sand.u32 %s110, 1
          %s238 = scalar_lea.sflag [#allocation9], %s237
          %s239 = sand.u32 %s110, 1
          %s240 = smul.addr %s239, 48
          %s241 = scalar_lea.vmem [#allocation8], %s240
          %s243 = ssub.s32 768, 768
          %244 = vsyncadd %s238, %s243
          %s245 = smul.addr %s22, 6
          %s246 = smul.addr %s245, 128
          %s247 = scalar_lea.hbm %s3, %s246
          %s248 = sshll.u32 %s241, 4
          %s249 = int_to_ptr.vmem [resolvable:$true] %s248
          %254 = dma.hbm_to_vmem [thread:$0]  %s247, 768, %s249, %s238, 128, 128, 8
        $region32: #{tpu_custom_call.1} parent=15 // pred_fallthru
          _
      $region16: #{tpu_custom_call.1} parent=5 // pred_fallthru
        _
      %p255 = scmp.le.s32.totalorder 1, %s22
      %p256 = scmp.lt.s32.totalorder %s22, 3
      %p257 = pnand %p255, %p256
      %p258 = pneg %p257
      // Predicated region
      $region33: #{tpu_custom_call.1} parent=5 // pred_check
        _
      $region34: #{tpu_custom_call.1} parent=5 // pred_check_branch
        %260 = sbr.rel (%p257) target = $region36
      $region35: #{tpu_custom_call.1} parent=5 // pred_region
        %s261 = ssub.s32 %s22, 1
        %s262 = sand.u32 %s35, 1
        %s263 = scalar_lea.sflag [#allocation3], %s262
        %s264 = sand.u32 %s35, 1
        %s265 = smul.addr %s264, 16
        %s266 = scalar_lea.vmem [#allocation2], %s265
        // Predicated region
        $region37: #{tpu_custom_call.1} parent=35 // pred_check
          %p267 = pneg %p48
        $region38: #{tpu_custom_call.1} parent=35 // pred_check_branch
          %269 = sbr.rel (%p267) target = $region40
        $region39: #{tpu_custom_call.1} parent=35 // pred_region
          %270 = dma.done %s263, 256
        $region40: #{tpu_custom_call.1} parent=35 // pred_fallthru
          _
        %s271 = sand.u32 %s27, 1
        %s272 = scalar_lea.sflag [#allocation6], %s271
        %s273 = sand.u32 %s61, 1
        %s274 = smul.addr %s273, 16
        %s275 = scalar_lea.vmem [#allocation5], %s274
        // Predicated region
        $region41: #{tpu_custom_call.1} parent=35 // pred_check
          %p276 = pneg %p74
        $region42: #{tpu_custom_call.1} parent=35 // pred_check_branch
          %278 = sbr.rel (%p276) target = $region44
        $region43: #{tpu_custom_call.1} parent=35 // pred_region
          %279 = dma.done %s272, 256
        $region44: #{tpu_custom_call.1} parent=35 // pred_fallthru
          _
        %s280 = sand.u32 %s27, 1
        %s281 = scalar_lea.sflag [#allocation6], %s280
        %s282 = sand.u32 %s87, 1
        %s283 = smul.addr %s282, 48
        %s284 = scalar_lea.vmem [#allocation7], %s283
        // Predicated region
        $region45: #{tpu_custom_call.1} parent=35 // pred_check
          %p285 = pneg %p100
        $region46: #{tpu_custom_call.1} parent=35 // pred_check_branch
          %287 = sbr.rel (%p285) target = $region48
        $region47: #{tpu_custom_call.1} parent=35 // pred_region
          %288 = dma.done %s281, 768
        $region48: #{tpu_custom_call.1} parent=35 // pred_fallthru
          _
        %s289 = sand.u32 %s113, 1
        %s290 = scalar_lea.sflag [#allocation9], %s289
        %s291 = sand.u32 %s113, 1
        %s292 = smul.addr %s291, 48
        %s293 = scalar_lea.vmem [#allocation8], %s292
        // Predicated region
        $region49: #{tpu_custom_call.1} parent=35 // pred_check
          %p294 = pneg %p126
        $region50: #{tpu_custom_call.1} parent=35 // pred_check_branch
          %296 = sbr.rel (%p294) target = $region52
        $region51: #{tpu_custom_call.1} parent=35 // pred_region
          %297 = dma.done %s290, 768
        $region52: #{tpu_custom_call.1} parent=35 // pred_fallthru
          _
        %s298 = sand.u32 %s35, 1
        %s299 = scalar_lea.sflag [#allocation3], %s298
        %s300 = sand.u32 %s35, 1
        %s301 = smul.addr %s300, 16
        %s302 = scalar_lea.vmem [#allocation2], %s301
        %p303 = pneg %p48
        %p304 = pneg %p45
        %s305 = sand.u32 %s27, 1
        %s306 = scalar_lea.sflag [#allocation6], %s305
        %s307 = sand.u32 %s61, 1
        %s308 = smul.addr %s307, 16
        %s309 = scalar_lea.vmem [#allocation5], %s308
        %p310 = pneg %p74
        %p311 = pneg %p71
        %s312 = sand.u32 %s27, 1
        %s313 = scalar_lea.sflag [#allocation6], %s312
        %s314 = sand.u32 %s87, 1
        %s315 = smul.addr %s314, 48
        %s316 = scalar_lea.vmem [#allocation7], %s315
        %p317 = pneg %p100
        %p318 = pneg %p97
        %s319 = sand.u32 %s113, 1
        %s320 = scalar_lea.sflag [#allocation9], %s319
        %s321 = sand.u32 %s113, 1
        %s322 = smul.addr %s321, 48
        %s323 = scalar_lea.vmem [#allocation8], %s322
        %p324 = pneg %p126
        %p325 = pneg %p123
        %p326 = pneg %p152
        %p327 = pneg %p149
        %s328 = sand.u32 %s139, 1
        %s329 = scalar_lea.sflag [#allocation4], %s328
        %s330 = sand.u32 %s139, 1
        %s331 = smul.addr %s330, 16
        %s332 = scalar_lea.vmem [#allocation10], %s331
        %v333 = vld [vmem:[%s266] sm:$0xff]
        %v334 = vld [vmem:[%s266 + $0x8] sm:$0xff]
        %v335 = vld [vmem:[%s275] sm:$0xff]
        %v336 = vld [vmem:[%s275 + $0x8] sm:$0xff]
        %v337 = vld [vmem:[%s284] sm:$0xff]
        %v338 = vld [vmem:[%s284 + $0x8] sm:$0xff]
        %v339 = vld [vmem:[%s284 + $0x10] sm:$0xff]
        %v340 = vld [vmem:[%s284 + $0x18] sm:$0xff]
        %v341 = vld [vmem:[%s284 + $0x20] sm:$0xff]
        %v342 = vld [vmem:[%s284 + $0x28] sm:$0xff]
        %v343 = vld [vmem:[%s293] sm:$0xff]
        %v344 = vld [vmem:[%s293 + $0x8] sm:$0xff]
        %v345 = vld [vmem:[%s293 + $0x10] sm:$0xff]
        %v346 = vld [vmem:[%s293 + $0x18] sm:$0xff]
        %v347 = vld [vmem:[%s293 + $0x20] sm:$0xff]
        %v348 = vld [vmem:[%s293 + $0x28] sm:$0xff]
        %v349 = vlaneseq
        %v350 = vshrl.u32 %v349, 7
        %v351 = vadd.s32 %v350, 8
        %v352 = vlaneseq
        %v353 = vand.u32 %v352, 127
        %v354 = vsub.s32 %v350, %v353
        %v355 = vsub.s32 %v351, %v353
        %vm356 = vcmp.lt.s32.totalorder %v354, 0
        %v357 = vsub.s32 0, %v354
        %v358 = vsel %vm356, %v357, %v354
        %vm359 = vcmp.lt.s32.totalorder %v355, 0
        %v360 = vsub.s32 0, %v355
        %v361 = vsel %vm359, %v360, %v355
        %vm362 = vcmp.le.s32.totalorder %v358, 1
        %vm363 = vcmp.le.s32.totalorder %v361, 1
        %v364 = vsel %vm362, 1, 0
        %v365 = vsel %vm363, 1, 0
        %v366 = vcvt.s32.f32 %v364
        %v367 = vcvt.s32.f32 %v365
        %vm368 = vcmp.le.s32.totalorder %v358, 10
        %vm369 = vcmp.le.s32.totalorder %v361, 10
        %v370 = vsel %vm368, 1, 0
        %v371 = vsel %vm369, 1, 0
        %v372 = vcvt.s32.f32 %v370
        %v373 = vcvt.s32.f32 %v371
        %v374 = vadd.s32 %v353, 1
        %vm375 = vcmp.eq.s32.totalorder %v350, %v374
        %vm376 = vcmp.eq.s32.totalorder %v351, %v374
        %v377 = vsel %vm375, 1, 0
        %v378 = vsel %vm376, 1, 0
        %v379 = vcvt.s32.f32 %v377
        %v380 = vcvt.s32.f32 %v378
        %v381 = vsub.f32 %v337, %v343
        %v382 = vsub.f32 %v338, %v344
        %v383 = vand.u32 2147483647, %v381
        %v384 = vand.u32 2147483647, %v382
        %vm385 = vcmask 130048
        %v386 = vsel %vm385, %v383, 0.0
        %v387 = vsel %vm385, %v384, 0.0
        %v388 = vadd.f32 %v386, %v387
        %389 = vadd.xlane.f32.xlu0 %v388
        %v390 = vpop.xlane.xlu0 %389
        %v391 = vrot.slane %v390, 4
        %v392 = vadd.f32 %v390, %v391
        %v393 = vrot.slane %v392, 2
        %v394 = vadd.f32 %v392, %v393
        %v395 = vrot.slane %v394, 1
        %v396 = vadd.f32 %v394, %v395
        %s397 = vtos %v396
        %s398 = sadd.f32 %s397, 0.0
        %v400 = vsel %vm385, %v337, 0
        %v403 = vsel %vm385, %v338, 0
        %405 = vmatprep.subr.mxu0 0.0
        %406 = vmatpush1.msra.mxu0 %v366
        %407 = vmatprep.subr.mxu0 0.0
        %408 = vmatpush1.msra.mxu0 %v367
        %409 = vmatprep.subr.mxu0 0.0
        %410 = vmatpush1.msra.mxu0 0.0
        %411 = vmatprep.subr.mxu0 0.0
        %412 = vmatpush1.msra.mxu0 0.0
        %413 = vmatprep.subr.mxu0 0.0
        %414 = vmatpush1.msra.mxu0 0.0
        %415 = vmatprep.subr.mxu0 0.0
        %416 = vmatpush1.msra.mxu0 0.0
        %417 = vmatprep.subr.mxu0 0.0
        %418 = vmatpush1.msra.mxu0 0.0
        %419 = vmatprep.subr.mxu0 0.0
        %420 = vmatpush1.msra.mxu0 0.0
        %421 = vmatprep.subr.mxu0 0.0
        %422 = vmatpush1.msra.mxu0 0.0
        %423 = vmatprep.subr.mxu0 0.0
        %424 = vmatpush1.msra.mxu0 0.0
        %425 = vmatprep.subr.mxu0 0.0
        %426 = vmatpush1.msra.mxu0 0.0
        %427 = vmatprep.subr.mxu0 0.0
        %428 = vmatpush1.msra.mxu0 0.0
        %429 = vmatprep.subr.mxu0 0.0
        %430 = vmatpush1.msra.mxu0 0.0
        %431 = vmatprep.subr.mxu0 0.0
        %432 = vmatpush1.msra.mxu0 0.0
        %433 = vmatprep.subr.mxu0 0.0
        %434 = vmatpush1.msra.mxu0 0.0
        %435 = vmatprep.subr.mxu0 0.0
        %436 = vmatpush1.msra.mxu0 0.0
        %437 = vmatprep.subr.mxu0 0.0
        %438 = vmatpush1.msra.mxu0 0.0
        %439 = vmatprep.subr.mxu0 0.0
        %440 = vmatpush1.msra.mxu0 0.0
        %441 = vmatprep.subr.mxu0 0.0
        %442 = vmatpush1.msra.mxu0 0.0
        %443 = vmatprep.subr.mxu0 0.0
        %444 = vmatpush1.msra.mxu0 0.0
        %445 = vmatprep.subr.mxu0 0.0
        %446 = vmatpush1.msra.mxu0 0.0
        %447 = vmatprep.subr.mxu0 0.0
        %448 = vmatpush1.msra.mxu0 0.0
        %449 = vmatprep.subr.mxu0 0.0
        %450 = vmatpush1.msra.mxu0 0.0
        %451 = vmatprep.subr.mxu0 0.0
        %452 = vmatpush1.msra.mxu0 0.0
        %453 = vmatprep.subr.mxu0 0.0
        %454 = vmatpush1.msra.mxu0 0.0
        %455 = vmatprep.subr.mxu0 0.0
        %456 = vmatpush1.msra.mxu0 0.0
        %457 = vmatprep.subr.mxu0 0.0
        %458 = vmatpush1.msra.mxu0 0.0
        %459 = vmatprep.subr.mxu0 0.0
        %460 = vmatpush1.msra.mxu0 0.0
        %461 = vmatprep.subr.mxu0 0.0
        %462 = vmatpush1.msra.mxu0 0.0
        %463 = vmatprep.subr.mxu0 0.0
        %464 = vmatpush1.msra.mxu0 0.0
        %465 = vmatprep.subr.mxu0 0.0
        %466 = vmatpush1.msra.mxu0 0.0
        %467 = vmatprep.subr.mxu0 0.0
        %468 = vmatpush1.msra.mxu0 0.0
        %469 = vmatprep.mubr.f32.mxu0 0.0
        %470 = vmatmul.mubr.f32.gmra.mrb[0].mxu0 %v400
        %v471 = vpop.f32.mrb[0].mxu0
        %v472 = vadd.f32 0.0, %v471
        %v473 = vpop.f32.mrb[0].mxu0
        %474 = vmatprep.mubr.f32.mxu0 0.0
        %475 = vmatmul.mubr.f32.gmra.mrb[0].mxu0 %v403
        %v476 = vpop.f32.mrb[0].mxu0
        %v477 = vadd.f32 0.0, %v476
        %v478 = vpop.f32.mrb[0].mxu0
        %479 = vdwg.mxu0
        %v481 = vsel %vm385, %v366, 0
        %v484 = vsel %vm385, %v367, 0
        %486 = vmatprep.subr.mxu0 0.0
        %487 = vmatpush1.msra.mxu0 %v472
        %488 = vmatprep.subr.mxu0 0.0
        %489 = vmatpush1.msra.mxu0 %v477
        %490 = vmatprep.subr.mxu0 0.0
        %491 = vmatpush1.msra.mxu0 0.0
        %492 = vmatprep.subr.mxu0 0.0
        %493 = vmatpush1.msra.mxu0 0.0
        %494 = vmatprep.subr.mxu0 0.0
        %495 = vmatpush1.msra.mxu0 0.0
        %496 = vmatprep.subr.mxu0 0.0
        %497 = vmatpush1.msra.mxu0 0.0
        %498 = vmatprep.subr.mxu0 0.0
        %499 = vmatpush1.msra.mxu0 0.0
        %500 = vmatprep.subr.mxu0 0.0
        %501 = vmatpush1.msra.mxu0 0.0
        %502 = vmatprep.subr.mxu0 0.0
        %503 = vmatpush1.msra.mxu0 0.0
        %504 = vmatprep.subr.mxu0 0.0
        %505 = vmatpush1.msra.mxu0 0.0
        %506 = vmatprep.subr.mxu0 0.0
        %507 = vmatpush1.msra.mxu0 0.0
        %508 = vmatprep.subr.mxu0 0.0
        %509 = vmatpush1.msra.mxu0 0.0
        %510 = vmatprep.subr.mxu0 0.0
        %511 = vmatpush1.msra.mxu0 0.0
        %512 = vmatprep.subr.mxu0 0.0
        %513 = vmatpush1.msra.mxu0 0.0
        %514 = vmatprep.subr.mxu0 0.0
        %515 = vmatpush1.msra.mxu0 0.0
        %516 = vmatprep.subr.mxu0 0.0
        %517 = vmatpush1.msra.mxu0 0.0
        %518 = vmatprep.subr.mxu0 0.0
        %519 = vmatpush1.msra.mxu0 0.0
        %520 = vmatprep.subr.mxu0 0.0
        %521 = vmatpush1.msra.mxu0 0.0
        %522 = vmatprep.subr.mxu0 0.0
        %523 = vmatpush1.msra.mxu0 0.0
        %524 = vmatprep.subr.mxu0 0.0
        %525 = vmatpush1.msra.mxu0 0.0
        %526 = vmatprep.subr.mxu0 0.0
        %527 = vmatpush1.msra.mxu0 0.0
        %528 = vmatprep.subr.mxu0 0.0
        %529 = vmatpush1.msra.mxu0 0.0
        %530 = vmatprep.subr.mxu0 0.0
        %531 = vmatpush1.msra.mxu0 0.0
        %532 = vmatprep.subr.mxu0 0.0
        %533 = vmatpush1.msra.mxu0 0.0
        %534 = vmatprep.subr.mxu0 0.0
        %535 = vmatpush1.msra.mxu0 0.0
        %536 = vmatprep.subr.mxu0 0.0
        %537 = vmatpush1.msra.mxu0 0.0
        %538 = vmatprep.subr.mxu0 0.0
        %539 = vmatpush1.msra.mxu0 0.0
        %540 = vmatprep.subr.mxu0 0.0
        %541 = vmatpush1.msra.mxu0 0.0
        %542 = vmatprep.subr.mxu0 0.0
        %543 = vmatpush1.msra.mxu0 0.0
        %544 = vmatprep.subr.mxu0 0.0
        %545 = vmatpush1.msra.mxu0 0.0
        %546 = vmatprep.subr.mxu0 0.0
        %547 = vmatpush1.msra.mxu0 0.0
        %548 = vmatprep.subr.mxu0 0.0
        %549 = vmatpush1.msra.mxu0 0.0
        %550 = vmatprep.mubr.f32.mxu0 0.0
        %551 = vmatmul.mubr.f32.gmra.mrb[0].mxu0 %v481
        %v552 = vpop.f32.mrb[0].mxu0
        %v553 = vadd.f32 0.0, %v552
        %v554 = vpop.f32.mrb[0].mxu0
        %555 = vmatprep.mubr.f32.mxu0 0.0
        %556 = vmatmul.mubr.f32.gmra.mrb[0].mxu0 %v484
        %v557 = vpop.f32.mrb[0].mxu0
        %v558 = vadd.f32 0.0, %v557
        %v559 = vpop.f32.mrb[0].mxu0
        %560 = vdwg.mxu0
        %v561 = vmul.f32 %v553, 0.11111111
        %v562 = vmul.f32 %v558, 0.11111111
        %v564 = vsel %vm385, %v343, 0
        %v567 = vsel %vm385, %v344, 0
        %569 = vmatprep.subr.mxu0 0.0
        %570 = vmatpush1.msra.mxu0 %v366
        %571 = vmatprep.subr.mxu0 0.0
        %572 = vmatpush1.msra.mxu0 %v367
        %573 = vmatprep.subr.mxu0 0.0
        %574 = vmatpush1.msra.mxu0 0.0
        %575 = vmatprep.subr.mxu0 0.0
        %576 = vmatpush1.msra.mxu0 0.0
        %577 = vmatprep.subr.mxu0 0.0
        %578 = vmatpush1.msra.mxu0 0.0
        %579 = vmatprep.subr.mxu0 0.0
        %580 = vmatpush1.msra.mxu0 0.0
        %581 = vmatprep.subr.mxu0 0.0
        %582 = vmatpush1.msra.mxu0 0.0
        %583 = vmatprep.subr.mxu0 0.0
        %584 = vmatpush1.msra.mxu0 0.0
        %585 = vmatprep.subr.mxu0 0.0
        %586 = vmatpush1.msra.mxu0 0.0
        %587 = vmatprep.subr.mxu0 0.0
        %588 = vmatpush1.msra.mxu0 0.0
        %589 = vmatprep.subr.mxu0 0.0
        %590 = vmatpush1.msra.mxu0 0.0
        %591 = vmatprep.subr.mxu0 0.0
        %592 = vmatpush1.msra.mxu0 0.0
        %593 = vmatprep.subr.mxu0 0.0
        %594 = vmatpush1.msra.mxu0 0.0
        %595 = vmatprep.subr.mxu0 0.0
        %596 = vmatpush1.msra.mxu0 0.0
        %597 = vmatprep.subr.mxu0 0.0
        %598 = vmatpush1.msra.mxu0 0.0
        %599 = vmatprep.subr.mxu0 0.0
        %600 = vmatpush1.msra.mxu0 0.0
        %601 = vmatprep.subr.mxu0 0.0
        %602 = vmatpush1.msra.mxu0 0.0
        %603 = vmatprep.subr.mxu0 0.0
        %604 = vmatpush1.msra.mxu0 0.0
        %605 = vmatprep.subr.mxu0 0.0
        %606 = vmatpush1.msra.mxu0 0.0
        %607 = vmatprep.subr.mxu0 0.0
        %608 = vmatpush1.msra.mxu0 0.0
        %609 = vmatprep.subr.mxu0 0.0
        %610 = vmatpush1.msra.mxu0 0.0
        %611 = vmatprep.subr.mxu0 0.0
        %612 = vmatpush1.msra.mxu0 0.0
        %613 = vmatprep.subr.mxu0 0.0
        %614 = vmatpush1.msra.mxu0 0.0
        %615 = vmatprep.subr.mxu0 0.0
        %616 = vmatpush1.msra.mxu0 0.0
        %617 = vmatprep.subr.mxu0 0.0
        %618 = vmatpush1.msra.mxu0 0.0
        %619 = vmatprep.subr.mxu0 0.0
        %620 = vmatpush1.msra.mxu0 0.0
        %621 = vmatprep.subr.mxu0 0.0
        %622 = vmatpush1.msra.mxu0 0.0
        %623 = vmatprep.subr.mxu0 0.0
        %624 = vmatpush1.msra.mxu0 0.0
        %625 = vmatprep.subr.mxu0 0.0
        %626 = vmatpush1.msra.mxu0 0.0
        %627 = vmatprep.subr.mxu0 0.0
        %628 = vmatpush1.msra.mxu0 0.0
        %629 = vmatprep.subr.mxu0 0.0
        %630 = vmatpush1.msra.mxu0 0.0
        %631 = vmatprep.subr.mxu0 0.0
        %632 = vmatpush1.msra.mxu0 0.0
        %633 = vmatprep.mubr.f32.mxu0 0.0
        %634 = vmatmul.mubr.f32.gmra.mrb[0].mxu0 %v564
        %v635 = vpop.f32.mrb[0].mxu0
        %v636 = vadd.f32 0.0, %v635
        %v637 = vpop.f32.mrb[0].mxu0
        %638 = vmatprep.mubr.f32.mxu0 0.0
        %639 = vmatmul.mubr.f32.gmra.mrb[0].mxu0 %v567
        %v640 = vpop.f32.mrb[0].mxu0
        %v641 = vadd.f32 0.0, %v640
        %v642 = vpop.f32.mrb[0].mxu0
        %643 = vdwg.mxu0
        %644 = vmatprep.subr.mxu0 0.0
        %645 = vmatpush1.msra.mxu0 %v636
        %646 = vmatprep.subr.mxu0 0.0
        %647 = vmatpush1.msra.mxu0 %v641
        %648 = vmatprep.subr.mxu0 0.0
        %649 = vmatpush1.msra.mxu0 0.0
        %650 = vmatprep.subr.mxu0 0.0
        %651 = vmatpush1.msra.mxu0 0.0
        %652 = vmatprep.subr.mxu0 0.0
        %653 = vmatpush1.msra.mxu0 0.0
        %654 = vmatprep.subr.mxu0 0.0
        %655 = vmatpush1.msra.mxu0 0.0
        %656 = vmatprep.subr.mxu0 0.0
        %657 = vmatpush1.msra.mxu0 0.0
        %658 = vmatprep.subr.mxu0 0.0
        %659 = vmatpush1.msra.mxu0 0.0
        %660 = vmatprep.subr.mxu0 0.0
        %661 = vmatpush1.msra.mxu0 0.0
        %662 = vmatprep.subr.mxu0 0.0
        %663 = vmatpush1.msra.mxu0 0.0
        %664 = vmatprep.subr.mxu0 0.0
        %665 = vmatpush1.msra.mxu0 0.0
        %666 = vmatprep.subr.mxu0 0.0
        %667 = vmatpush1.msra.mxu0 0.0
        %668 = vmatprep.subr.mxu0 0.0
        %669 = vmatpush1.msra.mxu0 0.0
        %670 = vmatprep.subr.mxu0 0.0
        %671 = vmatpush1.msra.mxu0 0.0
        %672 = vmatprep.subr.mxu0 0.0
        %673 = vmatpush1.msra.mxu0 0.0
        %674 = vmatprep.subr.mxu0 0.0
        %675 = vmatpush1.msra.mxu0 0.0
        %676 = vmatprep.subr.mxu0 0.0
        %677 = vmatpush1.msra.mxu0 0.0
        %678 = vmatprep.subr.mxu0 0.0
        %679 = vmatpush1.msra.mxu0 0.0
        %680 = vmatprep.subr.mxu0 0.0
        %681 = vmatpush1.msra.mxu0 0.0
        %682 = vmatprep.subr.mxu0 0.0
        %683 = vmatpush1.msra.mxu0 0.0
        %684 = vmatprep.subr.mxu0 0.0
        %685 = vmatpush1.msra.mxu0 0.0
        %686 = vmatprep.subr.mxu0 0.0
        %687 = vmatpush1.msra.mxu0 0.0
        %688 = vmatprep.subr.mxu0 0.0
        %689 = vmatpush1.msra.mxu0 0.0
        %690 = vmatprep.subr.mxu0 0.0
        %691 = vmatpush1.msra.mxu0 0.0
        %692 = vmatprep.subr.mxu0 0.0
        %693 = vmatpush1.msra.mxu0 0.0
        %694 = vmatprep.subr.mxu0 0.0
        %695 = vmatpush1.msra.mxu0 0.0
        %696 = vmatprep.subr.mxu0 0.0
        %697 = vmatpush1.msra.mxu0 0.0
        %698 = vmatprep.subr.mxu0 0.0
        %699 = vmatpush1.msra.mxu0 0.0
        %700 = vmatprep.subr.mxu0 0.0
        %701 = vmatpush1.msra.mxu0 0.0
        %702 = vmatprep.subr.mxu0 0.0
        %703 = vmatpush1.msra.mxu0 0.0
        %704 = vmatprep.subr.mxu0 0.0
        %705 = vmatpush1.msra.mxu0 0.0
        %706 = vmatprep.subr.mxu0 0.0
        %707 = vmatpush1.msra.mxu0 0.0
        %708 = vmatprep.mubr.f32.mxu0 0.0
        %709 = vmatmul.mubr.f32.gmra.mrb[0].mxu0 %v481
        %v710 = vpop.f32.mrb[0].mxu0
        %v711 = vadd.f32 0.0, %v710
        %v712 = vpop.f32.mrb[0].mxu0
        %713 = vmatprep.mubr.f32.mxu0 0.0
        %714 = vmatmul.mubr.f32.gmra.mrb[0].mxu0 %v484
        %v715 = vpop.f32.mrb[0].mxu0
        %v716 = vadd.f32 0.0, %v715
        %v717 = vpop.f32.mrb[0].mxu0
        %718 = vdwg.mxu0
        %v719 = vmul.f32 %v711, 0.11111111
        %v720 = vmul.f32 %v716, 0.11111111
        %v721 = vmul.f32 %v337, %v337
        %v722 = vmul.f32 %v338, %v338
        %v724 = vsel %vm385, %v721, 0
        %v727 = vsel %vm385, %v722, 0
        %729 = vmatprep.subr.mxu0 0.0
        %730 = vmatpush1.msra.mxu0 %v366
        %731 = vmatprep.subr.mxu0 0.0
        %732 = vmatpush1.msra.mxu0 %v367
        %733 = vmatprep.subr.mxu0 0.0
        %734 = vmatpush1.msra.mxu0 0.0
        %735 = vmatprep.subr.mxu0 0.0
        %736 = vmatpush1.msra.mxu0 0.0
        %737 = vmatprep.subr.mxu0 0.0
        %738 = vmatpush1.msra.mxu0 0.0
        %739 = vmatprep.subr.mxu0 0.0
        %740 = vmatpush1.msra.mxu0 0.0
        %741 = vmatprep.subr.mxu0 0.0
        %742 = vmatpush1.msra.mxu0 0.0
        %743 = vmatprep.subr.mxu0 0.0
        %744 = vmatpush1.msra.mxu0 0.0
        %745 = vmatprep.subr.mxu0 0.0
        %746 = vmatpush1.msra.mxu0 0.0
        %747 = vmatprep.subr.mxu0 0.0
        %748 = vmatpush1.msra.mxu0 0.0
        %749 = vmatprep.subr.mxu0 0.0
        %750 = vmatpush1.msra.mxu0 0.0
        %751 = vmatprep.subr.mxu0 0.0
        %752 = vmatpush1.msra.mxu0 0.0
        %753 = vmatprep.subr.mxu0 0.0
        %754 = vmatpush1.msra.mxu0 0.0
        %755 = vmatprep.subr.mxu0 0.0
        %756 = vmatpush1.msra.mxu0 0.0
        %757 = vmatprep.subr.mxu0 0.0
        %758 = vmatpush1.msra.mxu0 0.0
        %759 = vmatprep.subr.mxu0 0.0
        %760 = vmatpush1.msra.mxu0 0.0
        %761 = vmatprep.subr.mxu0 0.0
        %762 = vmatpush1.msra.mxu0 0.0
        %763 = vmatprep.subr.mxu0 0.0
        %764 = vmatpush1.msra.mxu0 0.0
        %765 = vmatprep.subr.mxu0 0.0
        %766 = vmatpush1.msra.mxu0 0.0
        %767 = vmatprep.subr.mxu0 0.0
        %768 = vmatpush1.msra.mxu0 0.0
        %769 = vmatprep.subr.mxu0 0.0
        %770 = vmatpush1.msra.mxu0 0.0
        %771 = vmatprep.subr.mxu0 0.0
        %772 = vmatpush1.msra.mxu0 0.0
        %773 = vmatprep.subr.mxu0 0.0
        %774 = vmatpush1.msra.mxu0 0.0
        %775 = vmatprep.subr.mxu0 0.0
        %776 = vmatpush1.msra.mxu0 0.0
        %777 = vmatprep.subr.mxu0 0.0
        %778 = vmatpush1.msra.mxu0 0.0
        %779 = vmatprep.subr.mxu0 0.0
        %780 = vmatpush1.msra.mxu0 0.0
        %781 = vmatprep.subr.mxu0 0.0
        %782 = vmatpush1.msra.mxu0 0.0
        %783 = vmatprep.subr.mxu0 0.0
        %784 = vmatpush1.msra.mxu0 0.0
        %785 = vmatprep.subr.mxu0 0.0
        %786 = vmatpush1.msra.mxu0 0.0
        %787 = vmatprep.subr.mxu0 0.0
        %788 = vmatpush1.msra.mxu0 0.0
        %789 = vmatprep.subr.mxu0 0.0
        %790 = vmatpush1.msra.mxu0 0.0
        %791 = vmatprep.subr.mxu0 0.0
        %792 = vmatpush1.msra.mxu0 0.0
        %793 = vmatprep.mubr.f32.mxu0 0.0
        %794 = vmatmul.mubr.f32.gmra.mrb[0].mxu0 %v724
        %v795 = vpop.f32.mrb[0].mxu0
        %v796 = vadd.f32 0.0, %v795
        %v797 = vpop.f32.mrb[0].mxu0
        %798 = vmatprep.mubr.f32.mxu0 0.0
        %799 = vmatmul.mubr.f32.gmra.mrb[0].mxu0 %v727
        %v800 = vpop.f32.mrb[0].mxu0
        %v801 = vadd.f32 0.0, %v800
        %v802 = vpop.f32.mrb[0].mxu0
        %803 = vdwg.mxu0
        %804 = vmatprep.subr.mxu0 0.0
        %805 = vmatpush1.msra.mxu0 %v796
        %806 = vmatprep.subr.mxu0 0.0
        %807 = vmatpush1.msra.mxu0 %v801
        %808 = vmatprep.subr.mxu0 0.0
        %809 = vmatpush1.msra.mxu0 0.0
        %810 = vmatprep.subr.mxu0 0.0
        %811 = vmatpush1.msra.mxu0 0.0
        %812 = vmatprep.subr.mxu0 0.0
        %813 = vmatpush1.msra.mxu0 0.0
        %814 = vmatprep.subr.mxu0 0.0
        %815 = vmatpush1.msra.mxu0 0.0
        %816 = vmatprep.subr.mxu0 0.0
        %817 = vmatpush1.msra.mxu0 0.0
        %818 = vmatprep.subr.mxu0 0.0
        %819 = vmatpush1.msra.mxu0 0.0
        %820 = vmatprep.subr.mxu0 0.0
        %821 = vmatpush1.msra.mxu0 0.0
        %822 = vmatprep.subr.mxu0 0.0
        %823 = vmatpush1.msra.mxu0 0.0
        %824 = vmatprep.subr.mxu0 0.0
        %825 = vmatpush1.msra.mxu0 0.0
        %826 = vmatprep.subr.mxu0 0.0
        %827 = vmatpush1.msra.mxu0 0.0
        %828 = vmatprep.subr.mxu0 0.0
        %829 = vmatpush1.msra.mxu0 0.0
        %830 = vmatprep.subr.mxu0 0.0
        %831 = vmatpush1.msra.mxu0 0.0
        %832 = vmatprep.subr.mxu0 0.0
        %833 = vmatpush1.msra.mxu0 0.0
        %834 = vmatprep.subr.mxu0 0.0
        %835 = vmatpush1.msra.mxu0 0.0
        %836 = vmatprep.subr.mxu0 0.0
        %837 = vmatpush1.msra.mxu0 0.0
        %838 = vmatprep.subr.mxu0 0.0
        %839 = vmatpush1.msra.mxu0 0.0
        %840 = vmatprep.subr.mxu0 0.0
        %841 = vmatpush1.msra.mxu0 0.0
        %842 = vmatprep.subr.mxu0 0.0
        %843 = vmatpush1.msra.mxu0 0.0
        %844 = vmatprep.subr.mxu0 0.0
        %845 = vmatpush1.msra.mxu0 0.0
        %846 = vmatprep.subr.mxu0 0.0
        %847 = vmatpush1.msra.mxu0 0.0
        %848 = vmatprep.subr.mxu0 0.0
        %849 = vmatpush1.msra.mxu0 0.0
        %850 = vmatprep.subr.mxu0 0.0
        %851 = vmatpush1.msra.mxu0 0.0
        %852 = vmatprep.subr.mxu0 0.0
        %853 = vmatpush1.msra.mxu0 0.0
        %854 = vmatprep.subr.mxu0 0.0
        %855 = vmatpush1.msra.mxu0 0.0
        %856 = vmatprep.subr.mxu0 0.0
        %857 = vmatpush1.msra.mxu0 0.0
        %858 = vmatprep.subr.mxu0 0.0
        %859 = vmatpush1.msra.mxu0 0.0
        %860 = vmatprep.subr.mxu0 0.0
        %861 = vmatpush1.msra.mxu0 0.0
        %862 = vmatprep.subr.mxu0 0.0
        %863 = vmatpush1.msra.mxu0 0.0
        %864 = vmatprep.subr.mxu0 0.0
        %865 = vmatpush1.msra.mxu0 0.0
        %866 = vmatprep.subr.mxu0 0.0
        %867 = vmatpush1.msra.mxu0 0.0
        %868 = vmatprep.mubr.f32.mxu0 0.0
        %869 = vmatmul.mubr.f32.gmra.mrb[0].mxu0 %v481
        %v870 = vpop.f32.mrb[0].mxu0
        %v871 = vadd.f32 0.0, %v870
        %v872 = vpop.f32.mrb[0].mxu0
        %873 = vmatprep.mubr.f32.mxu0 0.0
        %874 = vmatmul.mubr.f32.gmra.mrb[0].mxu0 %v484
        %v875 = vpop.f32.mrb[0].mxu0
        %v876 = vadd.f32 0.0, %v875
        %v877 = vpop.f32.mrb[0].mxu0
        %878 = vdwg.mxu0
        %v879 = vmul.f32 %v871, 0.11111111
        %v880 = vmul.f32 %v876, 0.11111111
        %v881 = vmul.f32 %v561, %v561
        %v882 = vmul.f32 %v562, %v562
        %v883 = vsub.f32 %v879, %v881
        %v884 = vsub.f32 %v880, %v882
        %v885 = vmul.f32 %v343, %v343
        %v886 = vmul.f32 %v344, %v344
        %v888 = vsel %vm385, %v885, 0
        %v891 = vsel %vm385, %v886, 0
        %893 = vmatprep.subr.mxu0 0.0
        %894 = vmatpush1.msra.mxu0 %v366
        %895 = vmatprep.subr.mxu0 0.0
        %896 = vmatpush1.msra.mxu0 %v367
        %897 = vmatprep.subr.mxu0 0.0
        %898 = vmatpush1.msra.mxu0 0.0
        %899 = vmatprep.subr.mxu0 0.0
        %900 = vmatpush1.msra.mxu0 0.0
        %901 = vmatprep.subr.mxu0 0.0
        %902 = vmatpush1.msra.mxu0 0.0
        %903 = vmatprep.subr.mxu0 0.0
        %904 = vmatpush1.msra.mxu0 0.0
        %905 = vmatprep.subr.mxu0 0.0
        %906 = vmatpush1.msra.mxu0 0.0
        %907 = vmatprep.subr.mxu0 0.0
        %908 = vmatpush1.msra.mxu0 0.0
        %909 = vmatprep.subr.mxu0 0.0
        %910 = vmatpush1.msra.mxu0 0.0
        %911 = vmatprep.subr.mxu0 0.0
        %912 = vmatpush1.msra.mxu0 0.0
        %913 = vmatprep.subr.mxu0 0.0
        %914 = vmatpush1.msra.mxu0 0.0
        %915 = vmatprep.subr.mxu0 0.0
        %916 = vmatpush1.msra.mxu0 0.0
        %917 = vmatprep.subr.mxu0 0.0
        %918 = vmatpush1.msra.mxu0 0.0
        %919 = vmatprep.subr.mxu0 0.0
        %920 = vmatpush1.msra.mxu0 0.0
        %921 = vmatprep.subr.mxu0 0.0
        %922 = vmatpush1.msra.mxu0 0.0
        %923 = vmatprep.subr.mxu0 0.0
        %924 = vmatpush1.msra.mxu0 0.0
        %925 = vmatprep.subr.mxu0 0.0
        %926 = vmatpush1.msra.mxu0 0.0
        %927 = vmatprep.subr.mxu0 0.0
        %928 = vmatpush1.msra.mxu0 0.0
        %929 = vmatprep.subr.mxu0 0.0
        %930 = vmatpush1.msra.mxu0 0.0
        %931 = vmatprep.subr.mxu0 0.0
        %932 = vmatpush1.msra.mxu0 0.0
        %933 = vmatprep.subr.mxu0 0.0
        %934 = vmatpush1.msra.mxu0 0.0
        %935 = vmatprep.subr.mxu0 0.0
        %936 = vmatpush1.msra.mxu0 0.0
        %937 = vmatprep.subr.mxu0 0.0
        %938 = vmatpush1.msra.mxu0 0.0
        %939 = vmatprep.subr.mxu0 0.0
        %940 = vmatpush1.msra.mxu0 0.0
        %941 = vmatprep.subr.mxu0 0.0
        %942 = vmatpush1.msra.mxu0 0.0
        %943 = vmatprep.subr.mxu0 0.0
        %944 = vmatpush1.msra.mxu0 0.0
        %945 = vmatprep.subr.mxu0 0.0
        %946 = vmatpush1.msra.mxu0 0.0
        %947 = vmatprep.subr.mxu0 0.0
        %948 = vmatpush1.msra.mxu0 0.0
        %949 = vmatprep.subr.mxu0 0.0
        %950 = vmatpush1.msra.mxu0 0.0
        %951 = vmatprep.subr.mxu0 0.0
        %952 = vmatpush1.msra.mxu0 0.0
        %953 = vmatprep.subr.mxu0 0.0
        %954 = vmatpush1.msra.mxu0 0.0
        %955 = vmatprep.subr.mxu0 0.0
        %956 = vmatpush1.msra.mxu0 0.0
        %957 = vmatprep.mubr.f32.mxu0 0.0
        %958 = vmatmul.mubr.f32.gmra.mrb[0].mxu0 %v888
        %v959 = vpop.f32.mrb[0].mxu0
        %v960 = vadd.f32 0.0, %v959
        %v961 = vpop.f32.mrb[0].mxu0
        %962 = vmatprep.mubr.f32.mxu0 0.0
        %963 = vmatmul.mubr.f32.gmra.mrb[0].mxu0 %v891
        %v964 = vpop.f32.mrb[0].mxu0
        %v965 = vadd.f32 0.0, %v964
        %v966 = vpop.f32.mrb[0].mxu0
        %967 = vdwg.mxu0
        %968 = vmatprep.subr.mxu0 0.0
        %969 = vmatpush1.msra.mxu0 %v960
        %970 = vmatprep.subr.mxu0 0.0
        %971 = vmatpush1.msra.mxu0 %v965
        %972 = vmatprep.subr.mxu0 0.0
        %973 = vmatpush1.msra.mxu0 0.0
        %974 = vmatprep.subr.mxu0 0.0
        %975 = vmatpush1.msra.mxu0 0.0
        %976 = vmatprep.subr.mxu0 0.0
        %977 = vmatpush1.msra.mxu0 0.0
        %978 = vmatprep.subr.mxu0 0.0
        %979 = vmatpush1.msra.mxu0 0.0
        %980 = vmatprep.subr.mxu0 0.0
        %981 = vmatpush1.msra.mxu0 0.0
        %982 = vmatprep.subr.mxu0 0.0
        %983 = vmatpush1.msra.mxu0 0.0
        %984 = vmatprep.subr.mxu0 0.0
        %985 = vmatpush1.msra.mxu0 0.0
        %986 = vmatprep.subr.mxu0 0.0
        %987 = vmatpush1.msra.mxu0 0.0
        %988 = vmatprep.subr.mxu0 0.0
        %989 = vmatpush1.msra.mxu0 0.0
        %990 = vmatprep.subr.mxu0 0.0
        %991 = vmatpush1.msra.mxu0 0.0
        %992 = vmatprep.subr.mxu0 0.0
        %993 = vmatpush1.msra.mxu0 0.0
        %994 = vmatprep.subr.mxu0 0.0
        %995 = vmatpush1.msra.mxu0 0.0
        %996 = vmatprep.subr.mxu0 0.0
        %997 = vmatpush1.msra.mxu0 0.0
        %998 = vmatprep.subr.mxu0 0.0
        %999 = vmatpush1.msra.mxu0 0.0
        %1000 = vmatprep.subr.mxu0 0.0
        %1001 = vmatpush1.msra.mxu0 0.0
        %1002 = vmatprep.subr.mxu0 0.0
        %1003 = vmatpush1.msra.mxu0 0.0
        %1004 = vmatprep.subr.mxu0 0.0
        %1005 = vmatpush1.msra.mxu0 0.0
        %1006 = vmatprep.subr.mxu0 0.0
        %1007 = vmatpush1.msra.mxu0 0.0
        %1008 = vmatprep.subr.mxu0 0.0
        %1009 = vmatpush1.msra.mxu0 0.0
        %1010 = vmatprep.subr.mxu0 0.0
        %1011 = vmatpush1.msra.mxu0 0.0
        %1012 = vmatprep.subr.mxu0 0.0
        %1013 = vmatpush1.msra.mxu0 0.0
        %1014 = vmatprep.subr.mxu0 0.0
        %1015 = vmatpush1.msra.mxu0 0.0
        %1016 = vmatprep.subr.mxu0 0.0
        %1017 = vmatpush1.msra.mxu0 0.0
        %1018 = vmatprep.subr.mxu0 0.0
        %1019 = vmatpush1.msra.mxu0 0.0
        %1020 = vmatprep.subr.mxu0 0.0
        %1021 = vmatpush1.msra.mxu0 0.0
        %1022 = vmatprep.subr.mxu0 0.0
        %1023 = vmatpush1.msra.mxu0 0.0
        %1024 = vmatprep.subr.mxu0 0.0
        %1025 = vmatpush1.msra.mxu0 0.0
        %1026 = vmatprep.subr.mxu0 0.0
        %1027 = vmatpush1.msra.mxu0 0.0
        %1028 = vmatprep.subr.mxu0 0.0
        %1029 = vmatpush1.msra.mxu0 0.0
        %1030 = vmatprep.subr.mxu0 0.0
        %1031 = vmatpush1.msra.mxu0 0.0
        %1032 = vmatprep.mubr.f32.mxu0 0.0
        %1033 = vmatmul.mubr.f32.gmra.mrb[0].mxu0 %v481
        %v1034 = vpop.f32.mrb[0].mxu0
        %v1035 = vadd.f32 0.0, %v1034
        %v1036 = vpop.f32.mrb[0].mxu0
        %1037 = vmatprep.mubr.f32.mxu0 0.0
        %1038 = vmatmul.mubr.f32.gmra.mrb[0].mxu0 %v484
        %v1039 = vpop.f32.mrb[0].mxu0
        %v1040 = vadd.f32 0.0, %v1039
        %v1041 = vpop.f32.mrb[0].mxu0
        %1042 = vdwg.mxu0
        %v1043 = vmul.f32 %v1035, 0.11111111
        %v1044 = vmul.f32 %v1040, 0.11111111
        %v1045 = vmul.f32 %v719, %v719
        %v1046 = vmul.f32 %v720, %v720
        %v1047 = vsub.f32 %v1043, %v1045
        %v1048 = vsub.f32 %v1044, %v1046
        %v1049 = vmul.f32 %v337, %v343
        %v1050 = vmul.f32 %v338, %v344
        %v1052 = vsel %vm385, %v1049, 0
        %v1055 = vsel %vm385, %v1050, 0
        %1057 = vmatprep.subr.mxu0 0.0
        %1058 = vmatpush1.msra.mxu0 %v366
        %1059 = vmatprep.subr.mxu0 0.0
        %1060 = vmatpush1.msra.mxu0 %v367
        %1061 = vmatprep.subr.mxu0 0.0
        %1062 = vmatpush1.msra.mxu0 0.0
        %1063 = vmatprep.subr.mxu0 0.0
        %1064 = vmatpush1.msra.mxu0 0.0
        %1065 = vmatprep.subr.mxu0 0.0
        %1066 = vmatpush1.msra.mxu0 0.0
        %1067 = vmatprep.subr.mxu0 0.0
        %1068 = vmatpush1.msra.mxu0 0.0
        %1069 = vmatprep.subr.mxu0 0.0
        %1070 = vmatpush1.msra.mxu0 0.0
        %1071 = vmatprep.subr.mxu0 0.0
        %1072 = vmatpush1.msra.mxu0 0.0
        %1073 = vmatprep.subr.mxu0 0.0
        %1074 = vmatpush1.msra.mxu0 0.0
        %1075 = vmatprep.subr.mxu0 0.0
        %1076 = vmatpush1.msra.mxu0 0.0
        %1077 = vmatprep.subr.mxu0 0.0
        %1078 = vmatpush1.msra.mxu0 0.0
        %1079 = vmatprep.subr.mxu0 0.0
        %1080 = vmatpush1.msra.mxu0 0.0
        %1081 = vmatprep.subr.mxu0 0.0
        %1082 = vmatpush1.msra.mxu0 0.0
        %1083 = vmatprep.subr.mxu0 0.0
        %1084 = vmatpush1.msra.mxu0 0.0
        %1085 = vmatprep.subr.mxu0 0.0
        %1086 = vmatpush1.msra.mxu0 0.0
        %1087 = vmatprep.subr.mxu0 0.0
        %1088 = vmatpush1.msra.mxu0 0.0
        %1089 = vmatprep.subr.mxu0 0.0
        %1090 = vmatpush1.msra.mxu0 0.0
        %1091 = vmatprep.subr.mxu0 0.0
        %1092 = vmatpush1.msra.mxu0 0.0
        %1093 = vmatprep.subr.mxu0 0.0
        %1094 = vmatpush1.msra.mxu0 0.0
        %1095 = vmatprep.subr.mxu0 0.0
        %1096 = vmatpush1.msra.mxu0 0.0
        %1097 = vmatprep.subr.mxu0 0.0
        %1098 = vmatpush1.msra.mxu0 0.0
        %1099 = vmatprep.subr.mxu0 0.0
        %1100 = vmatpush1.msra.mxu0 0.0
        %1101 = vmatprep.subr.mxu0 0.0
        %1102 = vmatpush1.msra.mxu0 0.0
        %1103 = vmatprep.subr.mxu0 0.0
        %1104 = vmatpush1.msra.mxu0 0.0
        %1105 = vmatprep.subr.mxu0 0.0
        %1106 = vmatpush1.msra.mxu0 0.0
        %1107 = vmatprep.subr.mxu0 0.0
        %1108 = vmatpush1.msra.mxu0 0.0
        %1109 = vmatprep.subr.mxu0 0.0
        %1110 = vmatpush1.msra.mxu0 0.0
        %1111 = vmatprep.subr.mxu0 0.0
        %1112 = vmatpush1.msra.mxu0 0.0
        %1113 = vmatprep.subr.mxu0 0.0
        %1114 = vmatpush1.msra.mxu0 0.0
        %1115 = vmatprep.subr.mxu0 0.0
        %1116 = vmatpush1.msra.mxu0 0.0
        %1117 = vmatprep.subr.mxu0 0.0
        %1118 = vmatpush1.msra.mxu0 0.0
        %1119 = vmatprep.subr.mxu0 0.0
        %1120 = vmatpush1.msra.mxu0 0.0
        %1121 = vmatprep.mubr.f32.mxu0 0.0
        %1122 = vmatmul.mubr.f32.gmra.mrb[0].mxu0 %v1052
        %v1123 = vpop.f32.mrb[0].mxu0
        %v1124 = vadd.f32 0.0, %v1123
        %v1125 = vpop.f32.mrb[0].mxu0
        %1126 = vmatprep.mubr.f32.mxu0 0.0
        %1127 = vmatmul.mubr.f32.gmra.mrb[0].mxu0 %v1055
        %v1128 = vpop.f32.mrb[0].mxu0
        %v1129 = vadd.f32 0.0, %v1128
        %v1130 = vpop.f32.mrb[0].mxu0
        %1131 = vdwg.mxu0
        %1132 = vmatprep.subr.mxu0 0.0
        %1133 = vmatpush1.msra.mxu0 %v1124
        %1134 = vmatprep.subr.mxu0 0.0
        %1135 = vmatpush1.msra.mxu0 %v1129
        %1136 = vmatprep.subr.mxu0 0.0
        %1137 = vmatpush1.msra.mxu0 0.0
        %1138 = vmatprep.subr.mxu0 0.0
        %1139 = vmatpush1.msra.mxu0 0.0
        %1140 = vmatprep.subr.mxu0 0.0
        %1141 = vmatpush1.msra.mxu0 0.0
        %1142 = vmatprep.subr.mxu0 0.0
        %1143 = vmatpush1.msra.mxu0 0.0
        %1144 = vmatprep.subr.mxu0 0.0
        %1145 = vmatpush1.msra.mxu0 0.0
        %1146 = vmatprep.subr.mxu0 0.0
        %1147 = vmatpush1.msra.mxu0 0.0
        %1148 = vmatprep.subr.mxu0 0.0
        %1149 = vmatpush1.msra.mxu0 0.0
        %1150 = vmatprep.subr.mxu0 0.0
        %1151 = vmatpush1.msra.mxu0 0.0
        %1152 = vmatprep.subr.mxu0 0.0
        %1153 = vmatpush1.msra.mxu0 0.0
        %1154 = vmatprep.subr.mxu0 0.0
        %1155 = vmatpush1.msra.mxu0 0.0
        %1156 = vmatprep.subr.mxu0 0.0
        %1157 = vmatpush1.msra.mxu0 0.0
        %1158 = vmatprep.subr.mxu0 0.0
        %1159 = vmatpush1.msra.mxu0 0.0
        %1160 = vmatprep.subr.mxu0 0.0
        %1161 = vmatpush1.msra.mxu0 0.0
        %1162 = vmatprep.subr.mxu0 0.0
        %1163 = vmatpush1.msra.mxu0 0.0
        %1164 = vmatprep.subr.mxu0 0.0
        %1165 = vmatpush1.msra.mxu0 0.0
        %1166 = vmatprep.subr.mxu0 0.0
        %1167 = vmatpush1.msra.mxu0 0.0
        %1168 = vmatprep.subr.mxu0 0.0
        %1169 = vmatpush1.msra.mxu0 0.0
        %1170 = vmatprep.subr.mxu0 0.0
        %1171 = vmatpush1.msra.mxu0 0.0
        %1172 = vmatprep.subr.mxu0 0.0
        %1173 = vmatpush1.msra.mxu0 0.0
        %1174 = vmatprep.subr.mxu0 0.0
        %1175 = vmatpush1.msra.mxu0 0.0
        %1176 = vmatprep.subr.mxu0 0.0
        %1177 = vmatpush1.msra.mxu0 0.0
        %1178 = vmatprep.subr.mxu0 0.0
        %1179 = vmatpush1.msra.mxu0 0.0
        %1180 = vmatprep.subr.mxu0 0.0
        %1181 = vmatpush1.msra.mxu0 0.0
        %1182 = vmatprep.subr.mxu0 0.0
        %1183 = vmatpush1.msra.mxu0 0.0
        %1184 = vmatprep.subr.mxu0 0.0
        %1185 = vmatpush1.msra.mxu0 0.0
        %1186 = vmatprep.subr.mxu0 0.0
        %1187 = vmatpush1.msra.mxu0 0.0
        %1188 = vmatprep.subr.mxu0 0.0
        %1189 = vmatpush1.msra.mxu0 0.0
        %1190 = vmatprep.subr.mxu0 0.0
        %1191 = vmatpush1.msra.mxu0 0.0
        %1192 = vmatprep.subr.mxu0 0.0
        %1193 = vmatpush1.msra.mxu0 0.0
        %1194 = vmatprep.subr.mxu0 0.0
        %1195 = vmatpush1.msra.mxu0 0.0
        %1196 = vmatprep.mubr.f32.mxu0 0.0
        %1197 = vmatmul.mubr.f32.gmra.mrb[0].mxu0 %v481
        %v1198 = vpop.f32.mrb[0].mxu0
        %v1199 = vadd.f32 0.0, %v1198
        %v1200 = vpop.f32.mrb[0].mxu0
        %1201 = vmatprep.mubr.f32.mxu0 0.0
        %1202 = vmatmul.mubr.f32.gmra.mrb[0].mxu0 %v484
        %v1203 = vpop.f32.mrb[0].mxu0
        %v1204 = vadd.f32 0.0, %v1203
        %v1205 = vpop.f32.mrb[0].mxu0
        %1206 = vdwg.mxu0
        %v1207 = vmul.f32 %v1199, 0.11111111
        %v1208 = vmul.f32 %v1204, 0.11111111
        %v1209 = vmul.f32 %v561, %v719
        %v1210 = vmul.f32 %v562, %v720
        %v1211 = vsub.f32 %v1207, %v1209
        %v1212 = vsub.f32 %v1208, %v1210
        %v1213 = vmul.f32 %v561, 2.0
        %v1214 = vmul.f32 %v562, 2.0
        %v1215 = vmul.f32 %v1213, %v719
        %v1216 = vmul.f32 %v1214, %v720
        %v1217 = vadd.f32 %v1215, 0.0001
        %v1218 = vadd.f32 %v1216, 0.0001
        %v1219 = vmul.f32 %v1211, 2.0
        %v1220 = vmul.f32 %v1212, 2.0
        %v1221 = vadd.f32 %v1219, 0.0009
        %v1222 = vadd.f32 %v1220, 0.0009
        %v1223 = vmul.f32 %v1217, %v1221
        %v1224 = vmul.f32 %v1218, %v1222
        %v1225 = vadd.f32 %v881, %v1045
        %v1226 = vadd.f32 %v882, %v1046
        %v1227 = vadd.f32 %v1225, 0.0001
        %v1228 = vadd.f32 %v1226, 0.0001
        %v1229 = vadd.f32 %v883, %v1047
        %v1230 = vadd.f32 %v884, %v1048
        %v1231 = vadd.f32 %v1229, 0.0009
        %v1232 = vadd.f32 %v1230, 0.0009
        %v1233 = vmul.f32 %v1227, %v1231
        %v1234 = vmul.f32 %v1228, %v1232
        %v1235 = vrcp.pop %v1233
        %v1236 = vmul.f32 %v1223, %v1235
        %v1237 = vrcp.pop %v1234
        %v1238 = vmul.f32 %v1224, %v1237
        %v1239 = vsub.f32 1.0, %v1236
        %v1240 = vsub.f32 1.0, %v1238
        %v1241 = vmul.f32 %v1239, 0.5
        %v1242 = vmul.f32 %v1240, 0.5
        %v1243 = vsel %vm385, %v1241, 0.0
        %v1244 = vsel %vm385, %v1242, 0.0
        %v1245 = vadd.f32 %v1243, %v1244
        %1246 = vadd.xlane.f32.xlu0 %v1245
        %v1247 = vpop.xlane.xlu0 %1246
        %v1248 = vrot.slane %v1247, 4
        %v1249 = vadd.f32 %v1247, %v1248
        %v1250 = vrot.slane %v1249, 2
        %v1251 = vadd.f32 %v1249, %v1250
        %v1252 = vrot.slane %v1251, 1
        %v1253 = vadd.f32 %v1251, %v1252
        %s1254 = vtos %v1253
        %s1255 = sadd.f32 %s1254, 0.0
        %1256 = vmatprep.subr.mxu0 0.0
        %1257 = vmatpush1.msra.mxu0 %v379
        %1258 = vmatprep.subr.mxu0 0.0
        %1259 = vmatpush1.msra.mxu0 %v380
        %1260 = vmatprep.subr.mxu0 0.0
        %1261 = vmatpush1.msra.mxu0 0.0
        %1262 = vmatprep.subr.mxu0 0.0
        %1263 = vmatpush1.msra.mxu0 0.0
        %1264 = vmatprep.subr.mxu0 0.0
        %1265 = vmatpush1.msra.mxu0 0.0
        %1266 = vmatprep.subr.mxu0 0.0
        %1267 = vmatpush1.msra.mxu0 0.0
        %1268 = vmatprep.subr.mxu0 0.0
        %1269 = vmatpush1.msra.mxu0 0.0
        %1270 = vmatprep.subr.mxu0 0.0
        %1271 = vmatpush1.msra.mxu0 0.0
        %1272 = vmatprep.subr.mxu0 0.0
        %1273 = vmatpush1.msra.mxu0 0.0
        %1274 = vmatprep.subr.mxu0 0.0
        %1275 = vmatpush1.msra.mxu0 0.0
        %1276 = vmatprep.subr.mxu0 0.0
        %1277 = vmatpush1.msra.mxu0 0.0
        %1278 = vmatprep.subr.mxu0 0.0
        %1279 = vmatpush1.msra.mxu0 0.0
        %1280 = vmatprep.subr.mxu0 0.0
        %1281 = vmatpush1.msra.mxu0 0.0
        %1282 = vmatprep.subr.mxu0 0.0
        %1283 = vmatpush1.msra.mxu0 0.0
        %1284 = vmatprep.subr.mxu0 0.0
        %1285 = vmatpush1.msra.mxu0 0.0
        %1286 = vmatprep.subr.mxu0 0.0
        %1287 = vmatpush1.msra.mxu0 0.0
        %1288 = vmatprep.subr.mxu0 0.0
        %1289 = vmatpush1.msra.mxu0 0.0
        %1290 = vmatprep.subr.mxu0 0.0
        %1291 = vmatpush1.msra.mxu0 0.0
        %1292 = vmatprep.subr.mxu0 0.0
        %1293 = vmatpush1.msra.mxu0 0.0
        %1294 = vmatprep.subr.mxu0 0.0
        %1295 = vmatpush1.msra.mxu0 0.0
        %1296 = vmatprep.subr.mxu0 0.0
        %1297 = vmatpush1.msra.mxu0 0.0
        %1298 = vmatprep.subr.mxu0 0.0
        %1299 = vmatpush1.msra.mxu0 0.0
        %1300 = vmatprep.subr.mxu0 0.0
        %1301 = vmatpush1.msra.mxu0 0.0
        %1302 = vmatprep.subr.mxu0 0.0
        %1303 = vmatpush1.msra.mxu0 0.0
        %1304 = vmatprep.subr.mxu0 0.0
        %1305 = vmatpush1.msra.mxu0 0.0
        %1306 = vmatprep.subr.mxu0 0.0
        %1307 = vmatpush1.msra.mxu0 0.0
        %1308 = vmatprep.subr.mxu0 0.0
        %1309 = vmatpush1.msra.mxu0 0.0
        %1310 = vmatprep.subr.mxu0 0.0
        %1311 = vmatpush1.msra.mxu0 0.0
        %1312 = vmatprep.subr.mxu0 0.0
        %1313 = vmatpush1.msra.mxu0 0.0
        %1314 = vmatprep.subr.mxu0 0.0
        %1315 = vmatpush1.msra.mxu0 0.0
        %1316 = vmatprep.subr.mxu0 0.0
        %1317 = vmatpush1.msra.mxu0 0.0
        %1318 = vmatprep.subr.mxu0 0.0
        %1319 = vmatpush1.msra.mxu0 0.0
        %1320 = vmatprep.mubr.f32.mxu0 0.0
        %1321 = vmatmul.mubr.f32.gmra.mrb[0].mxu0 %v400
        %v1322 = vpop.f32.mrb[0].mxu0
        %v1323 = vadd.f32 0.0, %v1322
        %v1324 = vpop.f32.mrb[0].mxu0
        %1325 = vmatprep.mubr.f32.mxu0 0.0
        %1326 = vmatmul.mubr.f32.gmra.mrb[0].mxu0 %v403
        %v1327 = vpop.f32.mrb[0].mxu0
        %v1328 = vadd.f32 0.0, %v1327
        %v1329 = vpop.f32.mrb[0].mxu0
        %1330 = vdwg.mxu0
        %v1331 = vsub.f32 %v337, %v1323
        %v1332 = vsub.f32 %v338, %v1328
        %v1333 = vand.u32 2147483647, %v1331
        %v1334 = vand.u32 2147483647, %v1332
        %v1335 = vadd.f32 %v1333, 0.0
        %v1336 = vadd.f32 %v1334, 0.0
        %vm1337 = vcmask 1046528
        %v1338 = vrot.slane %v337, 1
        %v1339 = vrot.slane %v338, 1
        %v1340 = vsel %vm1337, %v1338, %v1339
        %v1343 = vsub.f32 %v337, %v1340
        %v1344 = vsub.f32 %v338, %v1339
        %v1345 = vand.u32 2147483647, %v1343
        %v1346 = vand.u32 2147483647, %v1344
        %v1347 = vadd.f32 %v1345, 0.0
        %v1348 = vadd.f32 %v1346, 0.0
        %v1349 = vsub.f32 %v339, %v345
        %v1350 = vsub.f32 %v340, %v346
        %v1351 = vand.u32 2147483647, %v1349
        %v1352 = vand.u32 2147483647, %v1350
        %v1353 = vsel %vm385, %v1351, 0.0
        %v1354 = vsel %vm385, %v1352, 0.0
        %v1355 = vadd.f32 %v1353, %v1354
        %1356 = vadd.xlane.f32.xlu0 %v1355
        %v1357 = vpop.xlane.xlu0 %1356
        %v1358 = vrot.slane %v1357, 4
        %v1359 = vadd.f32 %v1357, %v1358
        %v1360 = vrot.slane %v1359, 2
        %v1361 = vadd.f32 %v1359, %v1360
        %v1362 = vrot.slane %v1361, 1
        %v1363 = vadd.f32 %v1361, %v1362
        %s1364 = vtos %v1363
        %s1365 = sadd.f32 %s398, %s1364
        %v1367 = vsel %vm385, %v339, 0
        %v1370 = vsel %vm385, %v340, 0
        %1372 = vmatprep.subr.mxu0 0.0
        %1373 = vmatpush1.msra.mxu0 %v366
        %1374 = vmatprep.subr.mxu0 0.0
        %1375 = vmatpush1.msra.mxu0 %v367
        %1376 = vmatprep.subr.mxu0 0.0
        %1377 = vmatpush1.msra.mxu0 0.0
        %1378 = vmatprep.subr.mxu0 0.0
        %1379 = vmatpush1.msra.mxu0 0.0
        %1380 = vmatprep.subr.mxu0 0.0
        %1381 = vmatpush1.msra.mxu0 0.0
        %1382 = vmatprep.subr.mxu0 0.0
        %1383 = vmatpush1.msra.mxu0 0.0
        %1384 = vmatprep.subr.mxu0 0.0
        %1385 = vmatpush1.msra.mxu0 0.0
        %1386 = vmatprep.subr.mxu0 0.0
        %1387 = vmatpush1.msra.mxu0 0.0
        %1388 = vmatprep.subr.mxu0 0.0
        %1389 = vmatpush1.msra.mxu0 0.0
        %1390 = vmatprep.subr.mxu0 0.0
        %1391 = vmatpush1.msra.mxu0 0.0
        %1392 = vmatprep.subr.mxu0 0.0
        %1393 = vmatpush1.msra.mxu0 0.0
        %1394 = vmatprep.subr.mxu0 0.0
        %1395 = vmatpush1.msra.mxu0 0.0
        %1396 = vmatprep.subr.mxu0 0.0
        %1397 = vmatpush1.msra.mxu0 0.0
        %1398 = vmatprep.subr.mxu0 0.0
        %1399 = vmatpush1.msra.mxu0 0.0
        %1400 = vmatprep.subr.mxu0 0.0
        %1401 = vmatpush1.msra.mxu0 0.0
        %1402 = vmatprep.subr.mxu0 0.0
        %1403 = vmatpush1.msra.mxu0 0.0
        %1404 = vmatprep.subr.mxu0 0.0
        %1405 = vmatpush1.msra.mxu0 0.0
        %1406 = vmatprep.subr.mxu0 0.0
        %1407 = vmatpush1.msra.mxu0 0.0
        %1408 = vmatprep.subr.mxu0 0.0
        %1409 = vmatpush1.msra.mxu0 0.0
        %1410 = vmatprep.subr.mxu0 0.0
        %1411 = vmatpush1.msra.mxu0 0.0
        %1412 = vmatprep.subr.mxu0 0.0
        %1413 = vmatpush1.msra.mxu0 0.0
        %1414 = vmatprep.subr.mxu0 0.0
        %1415 = vmatpush1.msra.mxu0 0.0
        %1416 = vmatprep.subr.mxu0 0.0
        %1417 = vmatpush1.msra.mxu0 0.0
        %1418 = vmatprep.subr.mxu0 0.0
        %1419 = vmatpush1.msra.mxu0 0.0
        %1420 = vmatprep.subr.mxu0 0.0
        %1421 = vmatpush1.msra.mxu0 0.0
        %1422 = vmatprep.subr.mxu0 0.0
        %1423 = vmatpush1.msra.mxu0 0.0
        %1424 = vmatprep.subr.mxu0 0.0
        %1425 = vmatpush1.msra.mxu0 0.0
        %1426 = vmatprep.subr.mxu0 0.0
        %1427 = vmatpush1.msra.mxu0 0.0
        %1428 = vmatprep.subr.mxu0 0.0
        %1429 = vmatpush1.msra.mxu0 0.0
        %1430 = vmatprep.subr.mxu0 0.0
        %1431 = vmatpush1.msra.mxu0 0.0
        %1432 = vmatprep.subr.mxu0 0.0
        %1433 = vmatpush1.msra.mxu0 0.0
        %1434 = vmatprep.subr.mxu0 0.0
        %1435 = vmatpush1.msra.mxu0 0.0
        %1436 = vmatprep.mubr.f32.mxu0 0.0
        %1437 = vmatmul.mubr.f32.gmra.mrb[0].mxu0 %v1367
        %v1438 = vpop.f32.mrb[0].mxu0
        %v1439 = vadd.f32 0.0, %v1438
        %v1440 = vpop.f32.mrb[0].mxu0
        %1441 = vmatprep.mubr.f32.mxu0 0.0
        %1442 = vmatmul.mubr.f32.gmra.mrb[0].mxu0 %v1370
        %v1443 = vpop.f32.mrb[0].mxu0
        %v1444 = vadd.f32 0.0, %v1443
        %v1445 = vpop.f32.mrb[0].mxu0
        %1446 = vdwg.mxu0
        %1447 = vmatprep.subr.mxu0 0.0
        %1448 = vmatpush1.msra.mxu0 %v1439
        %1449 = vmatprep.subr.mxu0 0.0
        %1450 = vmatpush1.msra.mxu0 %v1444
        %1451 = vmatprep.subr.mxu0 0.0
        %1452 = vmatpush1.msra.mxu0 0.0
        %1453 = vmatprep.subr.mxu0 0.0
        %1454 = vmatpush1.msra.mxu0 0.0
        %1455 = vmatprep.subr.mxu0 0.0
        %1456 = vmatpush1.msra.mxu0 0.0
        %1457 = vmatprep.subr.mxu0 0.0
        %1458 = vmatpush1.msra.mxu0 0.0
        %1459 = vmatprep.subr.mxu0 0.0
        %1460 = vmatpush1.msra.mxu0 0.0
        %1461 = vmatprep.subr.mxu0 0.0
        %1462 = vmatpush1.msra.mxu0 0.0
        %1463 = vmatprep.subr.mxu0 0.0
        %1464 = vmatpush1.msra.mxu0 0.0
        %1465 = vmatprep.subr.mxu0 0.0
        %1466 = vmatpush1.msra.mxu0 0.0
        %1467 = vmatprep.subr.mxu0 0.0
        %1468 = vmatpush1.msra.mxu0 0.0
        %1469 = vmatprep.subr.mxu0 0.0
        %1470 = vmatpush1.msra.mxu0 0.0
        %1471 = vmatprep.subr.mxu0 0.0
        %1472 = vmatpush1.msra.mxu0 0.0
        %1473 = vmatprep.subr.mxu0 0.0
        %1474 = vmatpush1.msra.mxu0 0.0
        %1475 = vmatprep.subr.mxu0 0.0
        %1476 = vmatpush1.msra.mxu0 0.0
        %1477 = vmatprep.subr.mxu0 0.0
        %1478 = vmatpush1.msra.mxu0 0.0
        %1479 = vmatprep.subr.mxu0 0.0
        %1480 = vmatpush1.msra.mxu0 0.0
        %1481 = vmatprep.subr.mxu0 0.0
        %1482 = vmatpush1.msra.mxu0 0.0
        %1483 = vmatprep.subr.mxu0 0.0
        %1484 = vmatpush1.msra.mxu0 0.0
        %1485 = vmatprep.subr.mxu0 0.0
        %1486 = vmatpush1.msra.mxu0 0.0
        %1487 = vmatprep.subr.mxu0 0.0
        %1488 = vmatpush1.msra.mxu0 0.0
        %1489 = vmatprep.subr.mxu0 0.0
        %1490 = vmatpush1.msra.mxu0 0.0
        %1491 = vmatprep.subr.mxu0 0.0
        %1492 = vmatpush1.msra.mxu0 0.0
        %1493 = vmatprep.subr.mxu0 0.0
        %1494 = vmatpush1.msra.mxu0 0.0
        %1495 = vmatprep.subr.mxu0 0.0
        %1496 = vmatpush1.msra.mxu0 0.0
        %1497 = vmatprep.subr.mxu0 0.0
        %1498 = vmatpush1.msra.mxu0 0.0
        %1499 = vmatprep.subr.mxu0 0.0
        %1500 = vmatpush1.msra.mxu0 0.0
        %1501 = vmatprep.subr.mxu0 0.0
        %1502 = vmatpush1.msra.mxu0 0.0
        %1503 = vmatprep.subr.mxu0 0.0
        %1504 = vmatpush1.msra.mxu0 0.0
        %1505 = vmatprep.subr.mxu0 0.0
        %1506 = vmatpush1.msra.mxu0 0.0
        %1507 = vmatprep.subr.mxu0 0.0
        %1508 = vmatpush1.msra.mxu0 0.0
        %1509 = vmatprep.subr.mxu0 0.0
        %1510 = vmatpush1.msra.mxu0 0.0
        %1511 = vmatprep.mubr.f32.mxu0 0.0
        %1512 = vmatmul.mubr.f32.gmra.mrb[0].mxu0 %v481
        %v1513 = vpop.f32.mrb[0].mxu0
        %v1514 = vadd.f32 0.0, %v1513
        %v1515 = vpop.f32.mrb[0].mxu0
        %1516 = vmatprep.mubr.f32.mxu0 0.0
        %1517 = vmatmul.mubr.f32.gmra.mrb[0].mxu0 %v484
        %v1518 = vpop.f32.mrb[0].mxu0
        %v1519 = vadd.f32 0.0, %v1518
        %v1520 = vpop.f32.mrb[0].mxu0
        %1521 = vdwg.mxu0
        %v1522 = vmul.f32 %v1514, 0.11111111
        %v1523 = vmul.f32 %v1519, 0.11111111
        %v1525 = vsel %vm385, %v345, 0
        %v1528 = vsel %vm385, %v346, 0
        %1530 = vmatprep.subr.mxu0 0.0
        %1531 = vmatpush1.msra.mxu0 %v366
        %1532 = vmatprep.subr.mxu0 0.0
        %1533 = vmatpush1.msra.mxu0 %v367
        %1534 = vmatprep.subr.mxu0 0.0
        %1535 = vmatpush1.msra.mxu0 0.0
        %1536 = vmatprep.subr.mxu0 0.0
        %1537 = vmatpush1.msra.mxu0 0.0
        %1538 = vmatprep.subr.mxu0 0.0
        %1539 = vmatpush1.msra.mxu0 0.0
        %1540 = vmatprep.subr.mxu0 0.0
        %1541 = vmatpush1.msra.mxu0 0.0
        %1542 = vmatprep.subr.mxu0 0.0
        %1543 = vmatpush1.msra.mxu0 0.0
        %1544 = vmatprep.subr.mxu0 0.0
        %1545 = vmatpush1.msra.mxu0 0.0
        %1546 = vmatprep.subr.mxu0 0.0
        %1547 = vmatpush1.msra.mxu0 0.0
        %1548 = vmatprep.subr.mxu0 0.0
        %1549 = vmatpush1.msra.mxu0 0.0
        %1550 = vmatprep.subr.mxu0 0.0
        %1551 = vmatpush1.msra.mxu0 0.0
        %1552 = vmatprep.subr.mxu0 0.0
        %1553 = vmatpush1.msra.mxu0 0.0
        %1554 = vmatprep.subr.mxu0 0.0
        %1555 = vmatpush1.msra.mxu0 0.0
        %1556 = vmatprep.subr.mxu0 0.0
        %1557 = vmatpush1.msra.mxu0 0.0
        %1558 = vmatprep.subr.mxu0 0.0
        %1559 = vmatpush1.msra.mxu0 0.0
        %1560 = vmatprep.subr.mxu0 0.0
        %1561 = vmatpush1.msra.mxu0 0.0
        %1562 = vmatprep.subr.mxu0 0.0
        %1563 = vmatpush1.msra.mxu0 0.0
        %1564 = vmatprep.subr.mxu0 0.0
        %1565 = vmatpush1.msra.mxu0 0.0
        %1566 = vmatprep.subr.mxu0 0.0
        %1567 = vmatpush1.msra.mxu0 0.0
        %1568 = vmatprep.subr.mxu0 0.0
        %1569 = vmatpush1.msra.mxu0 0.0
        %1570 = vmatprep.subr.mxu0 0.0
        %1571 = vmatpush1.msra.mxu0 0.0
        %1572 = vmatprep.subr.mxu0 0.0
        %1573 = vmatpush1.msra.mxu0 0.0
        %1574 = vmatprep.subr.mxu0 0.0
        %1575 = vmatpush1.msra.mxu0 0.0
        %1576 = vmatprep.subr.mxu0 0.0
        %1577 = vmatpush1.msra.mxu0 0.0
        %1578 = vmatprep.subr.mxu0 0.0
        %1579 = vmatpush1.msra.mxu0 0.0
        %1580 = vmatprep.subr.mxu0 0.0
        %1581 = vmatpush1.msra.mxu0 0.0
        %1582 = vmatprep.subr.mxu0 0.0
        %1583 = vmatpush1.msra.mxu0 0.0
        %1584 = vmatprep.subr.mxu0 0.0
        %1585 = vmatpush1.msra.mxu0 0.0
        %1586 = vmatprep.subr.mxu0 0.0
        %1587 = vmatpush1.msra.mxu0 0.0
        %1588 = vmatprep.subr.mxu0 0.0
        %1589 = vmatpush1.msra.mxu0 0.0
        %1590 = vmatprep.subr.mxu0 0.0
        %1591 = vmatpush1.msra.mxu0 0.0
        %1592 = vmatprep.subr.mxu0 0.0
        %1593 = vmatpush1.msra.mxu0 0.0
        %1594 = vmatprep.mubr.f32.mxu0 0.0
        %1595 = vmatmul.mubr.f32.gmra.mrb[0].mxu0 %v1525
        %v1596 = vpop.f32.mrb[0].mxu0
        %v1597 = vadd.f32 0.0, %v1596
        %v1598 = vpop.f32.mrb[0].mxu0
        %1599 = vmatprep.mubr.f32.mxu0 0.0
        %1600 = vmatmul.mubr.f32.gmra.mrb[0].mxu0 %v1528
        %v1601 = vpop.f32.mrb[0].mxu0
        %v1602 = vadd.f32 0.0, %v1601
        %v1603 = vpop.f32.mrb[0].mxu0
        %1604 = vdwg.mxu0
        %1605 = vmatprep.subr.mxu0 0.0
        %1606 = vmatpush1.msra.mxu0 %v1597
        %1607 = vmatprep.subr.mxu0 0.0
        %1608 = vmatpush1.msra.mxu0 %v1602
        %1609 = vmatprep.subr.mxu0 0.0
        %1610 = vmatpush1.msra.mxu0 0.0
        %1611 = vmatprep.subr.mxu0 0.0
        %1612 = vmatpush1.msra.mxu0 0.0
        %1613 = vmatprep.subr.mxu0 0.0
        %1614 = vmatpush1.msra.mxu0 0.0
        %1615 = vmatprep.subr.mxu0 0.0
        %1616 = vmatpush1.msra.mxu0 0.0
        %1617 = vmatprep.subr.mxu0 0.0
        %1618 = vmatpush1.msra.mxu0 0.0
        %1619 = vmatprep.subr.mxu0 0.0
        %1620 = vmatpush1.msra.mxu0 0.0
        %1621 = vmatprep.subr.mxu0 0.0
        %1622 = vmatpush1.msra.mxu0 0.0
        %1623 = vmatprep.subr.mxu0 0.0
        %1624 = vmatpush1.msra.mxu0 0.0
        %1625 = vmatprep.subr.mxu0 0.0
        %1626 = vmatpush1.msra.mxu0 0.0
        %1627 = vmatprep.subr.mxu0 0.0
        %1628 = vmatpush1.msra.mxu0 0.0
        %1629 = vmatprep.subr.mxu0 0.0
        %1630 = vmatpush1.msra.mxu0 0.0
        %1631 = vmatprep.subr.mxu0 0.0
        %1632 = vmatpush1.msra.mxu0 0.0
        %1633 = vmatprep.subr.mxu0 0.0
        %1634 = vmatpush1.msra.mxu0 0.0
        %1635 = vmatprep.subr.mxu0 0.0
        %1636 = vmatpush1.msra.mxu0 0.0
        %1637 = vmatprep.subr.mxu0 0.0
        %1638 = vmatpush1.msra.mxu0 0.0
        %1639 = vmatprep.subr.mxu0 0.0
        %1640 = vmatpush1.msra.mxu0 0.0
        %1641 = vmatprep.subr.mxu0 0.0
        %1642 = vmatpush1.msra.mxu0 0.0
        %1643 = vmatprep.subr.mxu0 0.0
        %1644 = vmatpush1.msra.mxu0 0.0
        %1645 = vmatprep.subr.mxu0 0.0
        %1646 = vmatpush1.msra.mxu0 0.0
        %1647 = vmatprep.subr.mxu0 0.0
        %1648 = vmatpush1.msra.mxu0 0.0
        %1649 = vmatprep.subr.mxu0 0.0
        %1650 = vmatpush1.msra.mxu0 0.0
        %1651 = vmatprep.subr.mxu0 0.0
        %1652 = vmatpush1.msra.mxu0 0.0
        %1653 = vmatprep.subr.mxu0 0.0
        %1654 = vmatpush1.msra.mxu0 0.0
        %1655 = vmatprep.subr.mxu0 0.0
        %1656 = vmatpush1.msra.mxu0 0.0
        %1657 = vmatprep.subr.mxu0 0.0
        %1658 = vmatpush1.msra.mxu0 0.0
        %1659 = vmatprep.subr.mxu0 0.0
        %1660 = vmatpush1.msra.mxu0 0.0
        %1661 = vmatprep.subr.mxu0 0.0
        %1662 = vmatpush1.msra.mxu0 0.0
        %1663 = vmatprep.subr.mxu0 0.0
        %1664 = vmatpush1.msra.mxu0 0.0
        %1665 = vmatprep.subr.mxu0 0.0
        %1666 = vmatpush1.msra.mxu0 0.0
        %1667 = vmatprep.subr.mxu0 0.0
        %1668 = vmatpush1.msra.mxu0 0.0
        %1669 = vmatprep.mubr.f32.mxu0 0.0
        %1670 = vmatmul.mubr.f32.gmra.mrb[0].mxu0 %v481
        %v1671 = vpop.f32.mrb[0].mxu0
        %v1672 = vadd.f32 0.0, %v1671
        %v1673 = vpop.f32.mrb[0].mxu0
        %1674 = vmatprep.mubr.f32.mxu0 0.0
        %1675 = vmatmul.mubr.f32.gmra.mrb[0].mxu0 %v484
        %v1676 = vpop.f32.mrb[0].mxu0
        %v1677 = vadd.f32 0.0, %v1676
        %v1678 = vpop.f32.mrb[0].mxu0
        %1679 = vdwg.mxu0
        %v1680 = vmul.f32 %v1672, 0.11111111
        %v1681 = vmul.f32 %v1677, 0.11111111
        %v1682 = vmul.f32 %v339, %v339
        %v1683 = vmul.f32 %v340, %v340
        %v1685 = vsel %vm385, %v1682, 0
        %v1688 = vsel %vm385, %v1683, 0
        %1690 = vmatprep.subr.mxu0 0.0
        %1691 = vmatpush1.msra.mxu0 %v366
        %1692 = vmatprep.subr.mxu0 0.0
        %1693 = vmatpush1.msra.mxu0 %v367
        %1694 = vmatprep.subr.mxu0 0.0
        %1695 = vmatpush1.msra.mxu0 0.0
        %1696 = vmatprep.subr.mxu0 0.0
        %1697 = vmatpush1.msra.mxu0 0.0
        %1698 = vmatprep.subr.mxu0 0.0
        %1699 = vmatpush1.msra.mxu0 0.0
        %1700 = vmatprep.subr.mxu0 0.0
        %1701 = vmatpush1.msra.mxu0 0.0
        %1702 = vmatprep.subr.mxu0 0.0
        %1703 = vmatpush1.msra.mxu0 0.0
        %1704 = vmatprep.subr.mxu0 0.0
        %1705 = vmatpush1.msra.mxu0 0.0
        %1706 = vmatprep.subr.mxu0 0.0
        %1707 = vmatpush1.msra.mxu0 0.0
        %1708 = vmatprep.subr.mxu0 0.0
        %1709 = vmatpush1.msra.mxu0 0.0
        %1710 = vmatprep.subr.mxu0 0.0
        %1711 = vmatpush1.msra.mxu0 0.0
        %1712 = vmatprep.subr.mxu0 0.0
        %1713 = vmatpush1.msra.mxu0 0.0
        %1714 = vmatprep.subr.mxu0 0.0
        %1715 = vmatpush1.msra.mxu0 0.0
        %1716 = vmatprep.subr.mxu0 0.0
        %1717 = vmatpush1.msra.mxu0 0.0
        %1718 = vmatprep.subr.mxu0 0.0
        %1719 = vmatpush1.msra.mxu0 0.0
        %1720 = vmatprep.subr.mxu0 0.0
        %1721 = vmatpush1.msra.mxu0 0.0
        %1722 = vmatprep.subr.mxu0 0.0
        %1723 = vmatpush1.msra.mxu0 0.0
        %1724 = vmatprep.subr.mxu0 0.0
        %1725 = vmatpush1.msra.mxu0 0.0
        %1726 = vmatprep.subr.mxu0 0.0
        %1727 = vmatpush1.msra.mxu0 0.0
        %1728 = vmatprep.subr.mxu0 0.0
        %1729 = vmatpush1.msra.mxu0 0.0
        %1730 = vmatprep.subr.mxu0 0.0
        %1731 = vmatpush1.msra.mxu0 0.0
        %1732 = vmatprep.subr.mxu0 0.0
        %1733 = vmatpush1.msra.mxu0 0.0
        %1734 = vmatprep.subr.mxu0 0.0
        %1735 = vmatpush1.msra.mxu0 0.0
        %1736 = vmatprep.subr.mxu0 0.0
        %1737 = vmatpush1.msra.mxu0 0.0
        %1738 = vmatprep.subr.mxu0 0.0
        %1739 = vmatpush1.msra.mxu0 0.0
        %1740 = vmatprep.subr.mxu0 0.0
        %1741 = vmatpush1.msra.mxu0 0.0
        %1742 = vmatprep.subr.mxu0 0.0
        %1743 = vmatpush1.msra.mxu0 0.0
        %1744 = vmatprep.subr.mxu0 0.0
        %1745 = vmatpush1.msra.mxu0 0.0
        %1746 = vmatprep.subr.mxu0 0.0
        %1747 = vmatpush1.msra.mxu0 0.0
        %1748 = vmatprep.subr.mxu0 0.0
        %1749 = vmatpush1.msra.mxu0 0.0
        %1750 = vmatprep.subr.mxu0 0.0
        %1751 = vmatpush1.msra.mxu0 0.0
        %1752 = vmatprep.subr.mxu0 0.0
        %1753 = vmatpush1.msra.mxu0 0.0
        %1754 = vmatprep.mubr.f32.mxu0 0.0
        %1755 = vmatmul.mubr.f32.gmra.mrb[0].mxu0 %v1685
        %v1756 = vpop.f32.mrb[0].mxu0
        %v1757 = vadd.f32 0.0, %v1756
        %v1758 = vpop.f32.mrb[0].mxu0
        %1759 = vmatprep.mubr.f32.mxu0 0.0
        %1760 = vmatmul.mubr.f32.gmra.mrb[0].mxu0 %v1688
        %v1761 = vpop.f32.mrb[0].mxu0
        %v1762 = vadd.f32 0.0, %v1761
        %v1763 = vpop.f32.mrb[0].mxu0
        %1764 = vdwg.mxu0
        %1765 = vmatprep.subr.mxu0 0.0
        %1766 = vmatpush1.msra.mxu0 %v1757
        %1767 = vmatprep.subr.mxu0 0.0
        %1768 = vmatpush1.msra.mxu0 %v1762
        %1769 = vmatprep.subr.mxu0 0.0
        %1770 = vmatpush1.msra.mxu0 0.0
        %1771 = vmatprep.subr.mxu0 0.0
        %1772 = vmatpush1.msra.mxu0 0.0
        %1773 = vmatprep.subr.mxu0 0.0
        %1774 = vmatpush1.msra.mxu0 0.0
        %1775 = vmatprep.subr.mxu0 0.0
        %1776 = vmatpush1.msra.mxu0 0.0
        %1777 = vmatprep.subr.mxu0 0.0
        %1778 = vmatpush1.msra.mxu0 0.0
        %1779 = vmatprep.subr.mxu0 0.0
        %1780 = vmatpush1.msra.mxu0 0.0
        %1781 = vmatprep.subr.mxu0 0.0
        %1782 = vmatpush1.msra.mxu0 0.0
        %1783 = vmatprep.subr.mxu0 0.0
        %1784 = vmatpush1.msra.mxu0 0.0
        %1785 = vmatprep.subr.mxu0 0.0
        %1786 = vmatpush1.msra.mxu0 0.0
        %1787 = vmatprep.subr.mxu0 0.0
        %1788 = vmatpush1.msra.mxu0 0.0
        %1789 = vmatprep.subr.mxu0 0.0
        %1790 = vmatpush1.msra.mxu0 0.0
        %1791 = vmatprep.subr.mxu0 0.0
        %1792 = vmatpush1.msra.mxu0 0.0
        %1793 = vmatprep.subr.mxu0 0.0
        %1794 = vmatpush1.msra.mxu0 0.0
        %1795 = vmatprep.subr.mxu0 0.0
        %1796 = vmatpush1.msra.mxu0 0.0
        %1797 = vmatprep.subr.mxu0 0.0
        %1798 = vmatpush1.msra.mxu0 0.0
        %1799 = vmatprep.subr.mxu0 0.0
        %1800 = vmatpush1.msra.mxu0 0.0
        %1801 = vmatprep.subr.mxu0 0.0
        %1802 = vmatpush1.msra.mxu0 0.0
        %1803 = vmatprep.subr.mxu0 0.0
        %1804 = vmatpush1.msra.mxu0 0.0
        %1805 = vmatprep.subr.mxu0 0.0
        %1806 = vmatpush1.msra.mxu0 0.0
        %1807 = vmatprep.subr.mxu0 0.0
        %1808 = vmatpush1.msra.mxu0 0.0
        %1809 = vmatprep.subr.mxu0 0.0
        %1810 = vmatpush1.msra.mxu0 0.0
        %1811 = vmatprep.subr.mxu0 0.0
        %1812 = vmatpush1.msra.mxu0 0.0
        %1813 = vmatprep.subr.mxu0 0.0
        %1814 = vmatpush1.msra.mxu0 0.0
        %1815 = vmatprep.subr.mxu0 0.0
        %1816 = vmatpush1.msra.mxu0 0.0
        %1817 = vmatprep.subr.mxu0 0.0
        %1818 = vmatpush1.msra.mxu0 0.0
        %1819 = vmatprep.subr.mxu0 0.0
        %1820 = vmatpush1.msra.mxu0 0.0
        %1821 = vmatprep.subr.mxu0 0.0
        %1822 = vmatpush1.msra.mxu0 0.0
        %1823 = vmatprep.subr.mxu0 0.0
        %1824 = vmatpush1.msra.mxu0 0.0
        %1825 = vmatprep.subr.mxu0 0.0
        %1826 = vmatpush1.msra.mxu0 0.0
        %1827 = vmatprep.subr.mxu0 0.0
        %1828 = vmatpush1.msra.mxu0 0.0
        %1829 = vmatprep.mubr.f32.mxu0 0.0
        %1830 = vmatmul.mubr.f32.gmra.mrb[0].mxu0 %v481
        %v1831 = vpop.f32.mrb[0].mxu0
        %v1832 = vadd.f32 0.0, %v1831
        %v1833 = vpop.f32.mrb[0].mxu0
        %1834 = vmatprep.mubr.f32.mxu0 0.0
        %1835 = vmatmul.mubr.f32.gmra.mrb[0].mxu0 %v484
        %v1836 = vpop.f32.mrb[0].mxu0
        %v1837 = vadd.f32 0.0, %v1836
        %v1838 = vpop.f32.mrb[0].mxu0
        %1839 = vdwg.mxu0
        %v1840 = vmul.f32 %v1832, 0.11111111
        %v1841 = vmul.f32 %v1837, 0.11111111
        %v1842 = vmul.f32 %v1522, %v1522
        %v1843 = vmul.f32 %v1523, %v1523
        %v1844 = vsub.f32 %v1840, %v1842
        %v1845 = vsub.f32 %v1841, %v1843
        %v1846 = vmul.f32 %v345, %v345
        %v1847 = vmul.f32 %v346, %v346
        %v1849 = vsel %vm385, %v1846, 0
        %v1852 = vsel %vm385, %v1847, 0
        %1854 = vmatprep.subr.mxu0 0.0
        %1855 = vmatpush1.msra.mxu0 %v366
        %1856 = vmatprep.subr.mxu0 0.0
        %1857 = vmatpush1.msra.mxu0 %v367
        %1858 = vmatprep.subr.mxu0 0.0
        %1859 = vmatpush1.msra.mxu0 0.0
        %1860 = vmatprep.subr.mxu0 0.0
        %1861 = vmatpush1.msra.mxu0 0.0
        %1862 = vmatprep.subr.mxu0 0.0
        %1863 = vmatpush1.msra.mxu0 0.0
        %1864 = vmatprep.subr.mxu0 0.0
        %1865 = vmatpush1.msra.mxu0 0.0
        %1866 = vmatprep.subr.mxu0 0.0
        %1867 = vmatpush1.msra.mxu0 0.0
        %1868 = vmatprep.subr.mxu0 0.0
        %1869 = vmatpush1.msra.mxu0 0.0
        %1870 = vmatprep.subr.mxu0 0.0
        %1871 = vmatpush1.msra.mxu0 0.0
        %1872 = vmatprep.subr.mxu0 0.0
        %1873 = vmatpush1.msra.mxu0 0.0
        %1874 = vmatprep.subr.mxu0 0.0
        %1875 = vmatpush1.msra.mxu0 0.0
        %1876 = vmatprep.subr.mxu0 0.0
        %1877 = vmatpush1.msra.mxu0 0.0
        %1878 = vmatprep.subr.mxu0 0.0
        %1879 = vmatpush1.msra.mxu0 0.0
        %1880 = vmatprep.subr.mxu0 0.0
        %1881 = vmatpush1.msra.mxu0 0.0
        %1882 = vmatprep.subr.mxu0 0.0
        %1883 = vmatpush1.msra.mxu0 0.0
        %1884 = vmatprep.subr.mxu0 0.0
        %1885 = vmatpush1.msra.mxu0 0.0
        %1886 = vmatprep.subr.mxu0 0.0
        %1887 = vmatpush1.msra.mxu0 0.0
        %1888 = vmatprep.subr.mxu0 0.0
        %1889 = vmatpush1.msra.mxu0 0.0
        %1890 = vmatprep.subr.mxu0 0.0
        %1891 = vmatpush1.msra.mxu0 0.0
        %1892 = vmatprep.subr.mxu0 0.0
        %1893 = vmatpush1.msra.mxu0 0.0
        %1894 = vmatprep.subr.mxu0 0.0
        %1895 = vmatpush1.msra.mxu0 0.0
        %1896 = vmatprep.subr.mxu0 0.0
        %1897 = vmatpush1.msra.mxu0 0.0
        %1898 = vmatprep.subr.mxu0 0.0
        %1899 = vmatpush1.msra.mxu0 0.0
        %1900 = vmatprep.subr.mxu0 0.0
        %1901 = vmatpush1.msra.mxu0 0.0
        %1902 = vmatprep.subr.mxu0 0.0
        %1903 = vmatpush1.msra.mxu0 0.0
        %1904 = vmatprep.subr.mxu0 0.0
        %1905 = vmatpush1.msra.mxu0 0.0
        %1906 = vmatprep.subr.mxu0 0.0
        %1907 = vmatpush1.msra.mxu0 0.0
        %1908 = vmatprep.subr.mxu0 0.0
        %1909 = vmatpush1.msra.mxu0 0.0
        %1910 = vmatprep.subr.mxu0 0.0
        %1911 = vmatpush1.msra.mxu0 0.0
        %1912 = vmatprep.subr.mxu0 0.0
        %1913 = vmatpush1.msra.mxu0 0.0
        %1914 = vmatprep.subr.mxu0 0.0
        %1915 = vmatpush1.msra.mxu0 0.0
        %1916 = vmatprep.subr.mxu0 0.0
        %1917 = vmatpush1.msra.mxu0 0.0
        %1918 = vmatprep.mubr.f32.mxu0 0.0
        %1919 = vmatmul.mubr.f32.gmra.mrb[0].mxu0 %v1849
        %v1920 = vpop.f32.mrb[0].mxu0
        %v1921 = vadd.f32 0.0, %v1920
        %v1922 = vpop.f32.mrb[0].mxu0
        %1923 = vmatprep.mubr.f32.mxu0 0.0
        %1924 = vmatmul.mubr.f32.gmra.mrb[0].mxu0 %v1852
        %v1925 = vpop.f32.mrb[0].mxu0
        %v1926 = vadd.f32 0.0, %v1925
        %v1927 = vpop.f32.mrb[0].mxu0
        %1928 = vdwg.mxu0
        %1929 = vmatprep.subr.mxu0 0.0
        %1930 = vmatpush1.msra.mxu0 %v1921
        %1931 = vmatprep.subr.mxu0 0.0
        %1932 = vmatpush1.msra.mxu0 %v1926
        %1933 = vmatprep.subr.mxu0 0.0
        %1934 = vmatpush1.msra.mxu0 0.0
        %1935 = vmatprep.subr.mxu0 0.0
        %1936 = vmatpush1.msra.mxu0 0.0
        %1937 = vmatprep.subr.mxu0 0.0
        %1938 = vmatpush1.msra.mxu0 0.0
        %1939 = vmatprep.subr.mxu0 0.0
        %1940 = vmatpush1.msra.mxu0 0.0
        %1941 = vmatprep.subr.mxu0 0.0
        %1942 = vmatpush1.msra.mxu0 0.0
        %1943 = vmatprep.subr.mxu0 0.0
        %1944 = vmatpush1.msra.mxu0 0.0
        %1945 = vmatprep.subr.mxu0 0.0
        %1946 = vmatpush1.msra.mxu0 0.0
        %1947 = vmatprep.subr.mxu0 0.0
        %1948 = vmatpush1.msra.mxu0 0.0
        %1949 = vmatprep.subr.mxu0 0.0
        %1950 = vmatpush1.msra.mxu0 0.0
        %1951 = vmatprep.subr.mxu0 0.0
        %1952 = vmatpush1.msra.mxu0 0.0
        %1953 = vmatprep.subr.mxu0 0.0
        %1954 = vmatpush1.msra.mxu0 0.0
        %1955 = vmatprep.subr.mxu0 0.0
        %1956 = vmatpush1.msra.mxu0 0.0
        %1957 = vmatprep.subr.mxu0 0.0
        %1958 = vmatpush1.msra.mxu0 0.0
        %1959 = vmatprep.subr.mxu0 0.0
        %1960 = vmatpush1.msra.mxu0 0.0
        %1961 = vmatprep.subr.mxu0 0.0
        %1962 = vmatpush1.msra.mxu0 0.0
        %1963 = vmatprep.subr.mxu0 0.0
        %1964 = vmatpush1.msra.mxu0 0.0
        %1965 = vmatprep.subr.mxu0 0.0
        %1966 = vmatpush1.msra.mxu0 0.0
        %1967 = vmatprep.subr.mxu0 0.0
        %1968 = vmatpush1.msra.mxu0 0.0
        %1969 = vmatprep.subr.mxu0 0.0
        %1970 = vmatpush1.msra.mxu0 0.0
        %1971 = vmatprep.subr.mxu0 0.0
        %1972 = vmatpush1.msra.mxu0 0.0
        %1973 = vmatprep.subr.mxu0 0.0
        %1974 = vmatpush1.msra.mxu0 0.0
        %1975 = vmatprep.subr.mxu0 0.0
        %1976 = vmatpush1.msra.mxu0 0.0
        %1977 = vmatprep.subr.mxu0 0.0
        %1978 = vmatpush1.msra.mxu0 0.0
        %1979 = vmatprep.subr.mxu0 0.0
        %1980 = vmatpush1.msra.mxu0 0.0
        %1981 = vmatprep.subr.mxu0 0.0
        %1982 = vmatpush1.msra.mxu0 0.0
        %1983 = vmatprep.subr.mxu0 0.0
        %1984 = vmatpush1.msra.mxu0 0.0
        %1985 = vmatprep.subr.mxu0 0.0
        %1986 = vmatpush1.msra.mxu0 0.0
        %1987 = vmatprep.subr.mxu0 0.0
        %1988 = vmatpush1.msra.mxu0 0.0
        %1989 = vmatprep.subr.mxu0 0.0
        %1990 = vmatpush1.msra.mxu0 0.0
        %1991 = vmatprep.subr.mxu0 0.0
        %1992 = vmatpush1.msra.mxu0 0.0
        %1993 = vmatprep.mubr.f32.mxu0 0.0
        %1994 = vmatmul.mubr.f32.gmra.mrb[0].mxu0 %v481
        %v1995 = vpop.f32.mrb[0].mxu0
        %v1996 = vadd.f32 0.0, %v1995
        %v1997 = vpop.f32.mrb[0].mxu0
        %1998 = vmatprep.mubr.f32.mxu0 0.0
        %1999 = vmatmul.mubr.f32.gmra.mrb[0].mxu0 %v484
        %v2000 = vpop.f32.mrb[0].mxu0
        %v2001 = vadd.f32 0.0, %v2000
        %v2002 = vpop.f32.mrb[0].mxu0
        %2003 = vdwg.mxu0
        %v2004 = vmul.f32 %v1996, 0.11111111
        %v2005 = vmul.f32 %v2001, 0.11111111
        %v2006 = vmul.f32 %v1680, %v1680
        %v2007 = vmul.f32 %v1681, %v1681
        %v2008 = vsub.f32 %v2004, %v2006
        %v2009 = vsub.f32 %v2005, %v2007
        %v2010 = vmul.f32 %v339, %v345
        %v2011 = vmul.f32 %v340, %v346
        %v2013 = vsel %vm385, %v2010, 0
        %v2016 = vsel %vm385, %v2011, 0
        %2018 = vmatprep.subr.mxu0 0.0
        %2019 = vmatpush1.msra.mxu0 %v366
        %2020 = vmatprep.subr.mxu0 0.0
        %2021 = vmatpush1.msra.mxu0 %v367
        %2022 = vmatprep.subr.mxu0 0.0
        %2023 = vmatpush1.msra.mxu0 0.0
        %2024 = vmatprep.subr.mxu0 0.0
        %2025 = vmatpush1.msra.mxu0 0.0
        %2026 = vmatprep.subr.mxu0 0.0
        %2027 = vmatpush1.msra.mxu0 0.0
        %2028 = vmatprep.subr.mxu0 0.0
        %2029 = vmatpush1.msra.mxu0 0.0
        %2030 = vmatprep.subr.mxu0 0.0
        %2031 = vmatpush1.msra.mxu0 0.0
        %2032 = vmatprep.subr.mxu0 0.0
        %2033 = vmatpush1.msra.mxu0 0.0
        %2034 = vmatprep.subr.mxu0 0.0
        %2035 = vmatpush1.msra.mxu0 0.0
        %2036 = vmatprep.subr.mxu0 0.0
        %2037 = vmatpush1.msra.mxu0 0.0
        %2038 = vmatprep.subr.mxu0 0.0
        %2039 = vmatpush1.msra.mxu0 0.0
        %2040 = vmatprep.subr.mxu0 0.0
        %2041 = vmatpush1.msra.mxu0 0.0
        %2042 = vmatprep.subr.mxu0 0.0
        %2043 = vmatpush1.msra.mxu0 0.0
        %2044 = vmatprep.subr.mxu0 0.0
        %2045 = vmatpush1.msra.mxu0 0.0
        %2046 = vmatprep.subr.mxu0 0.0
        %2047 = vmatpush1.msra.mxu0 0.0
        %2048 = vmatprep.subr.mxu0 0.0
        %2049 = vmatpush1.msra.mxu0 0.0
        %2050 = vmatprep.subr.mxu0 0.0
        %2051 = vmatpush1.msra.mxu0 0.0
        %2052 = vmatprep.subr.mxu0 0.0
        %2053 = vmatpush1.msra.mxu0 0.0
        %2054 = vmatprep.subr.mxu0 0.0
        %2055 = vmatpush1.msra.mxu0 0.0
        %2056 = vmatprep.subr.mxu0 0.0
        %2057 = vmatpush1.msra.mxu0 0.0
        %2058 = vmatprep.subr.mxu0 0.0
        %2059 = vmatpush1.msra.mxu0 0.0
        %2060 = vmatprep.subr.mxu0 0.0
        %2061 = vmatpush1.msra.mxu0 0.0
        %2062 = vmatprep.subr.mxu0 0.0
        %2063 = vmatpush1.msra.mxu0 0.0
        %2064 = vmatprep.subr.mxu0 0.0
        %2065 = vmatpush1.msra.mxu0 0.0
        %2066 = vmatprep.subr.mxu0 0.0
        %2067 = vmatpush1.msra.mxu0 0.0
        %2068 = vmatprep.subr.mxu0 0.0
        %2069 = vmatpush1.msra.mxu0 0.0
        %2070 = vmatprep.subr.mxu0 0.0
        %2071 = vmatpush1.msra.mxu0 0.0
        %2072 = vmatprep.subr.mxu0 0.0
        %2073 = vmatpush1.msra.mxu0 0.0
        %2074 = vmatprep.subr.mxu0 0.0
        %2075 = vmatpush1.msra.mxu0 0.0
        %2076 = vmatprep.subr.mxu0 0.0
        %2077 = vmatpush1.msra.mxu0 0.0
        %2078 = vmatprep.subr.mxu0 0.0
        %2079 = vmatpush1.msra.mxu0 0.0
        %2080 = vmatprep.subr.mxu0 0.0
        %2081 = vmatpush1.msra.mxu0 0.0
        %2082 = vmatprep.mubr.f32.mxu0 0.0
        %2083 = vmatmul.mubr.f32.gmra.mrb[0].mxu0 %v2013
        %v2084 = vpop.f32.mrb[0].mxu0
        %v2085 = vadd.f32 0.0, %v2084
        %v2086 = vpop.f32.mrb[0].mxu0
        %2087 = vmatprep.mubr.f32.mxu0 0.0
        %2088 = vmatmul.mubr.f32.gmra.mrb[0].mxu0 %v2016
        %v2089 = vpop.f32.mrb[0].mxu0
        %v2090 = vadd.f32 0.0, %v2089
        %v2091 = vpop.f32.mrb[0].mxu0
        %2092 = vdwg.mxu0
        %2093 = vmatprep.subr.mxu0 0.0
        %2094 = vmatpush1.msra.mxu0 %v2085
        %2095 = vmatprep.subr.mxu0 0.0
        %2096 = vmatpush1.msra.mxu0 %v2090
        %2097 = vmatprep.subr.mxu0 0.0
        %2098 = vmatpush1.msra.mxu0 0.0
        %2099 = vmatprep.subr.mxu0 0.0
        %2100 = vmatpush1.msra.mxu0 0.0
        %2101 = vmatprep.subr.mxu0 0.0
        %2102 = vmatpush1.msra.mxu0 0.0
        %2103 = vmatprep.subr.mxu0 0.0
        %2104 = vmatpush1.msra.mxu0 0.0
        %2105 = vmatprep.subr.mxu0 0.0
        %2106 = vmatpush1.msra.mxu0 0.0
        %2107 = vmatprep.subr.mxu0 0.0
        %2108 = vmatpush1.msra.mxu0 0.0
        %2109 = vmatprep.subr.mxu0 0.0
        %2110 = vmatpush1.msra.mxu0 0.0
        %2111 = vmatprep.subr.mxu0 0.0
        %2112 = vmatpush1.msra.mxu0 0.0
        %2113 = vmatprep.subr.mxu0 0.0
        %2114 = vmatpush1.msra.mxu0 0.0
        %2115 = vmatprep.subr.mxu0 0.0
        %2116 = vmatpush1.msra.mxu0 0.0
        %2117 = vmatprep.subr.mxu0 0.0
        %2118 = vmatpush1.msra.mxu0 0.0
        %2119 = vmatprep.subr.mxu0 0.0
        %2120 = vmatpush1.msra.mxu0 0.0
        %2121 = vmatprep.subr.mxu0 0.0
        %2122 = vmatpush1.msra.mxu0 0.0
        %2123 = vmatprep.subr.mxu0 0.0
        %2124 = vmatpush1.msra.mxu0 0.0
        %2125 = vmatprep.subr.mxu0 0.0
        %2126 = vmatpush1.msra.mxu0 0.0
        %2127 = vmatprep.subr.mxu0 0.0
        %2128 = vmatpush1.msra.mxu0 0.0
        %2129 = vmatprep.subr.mxu0 0.0
        %2130 = vmatpush1.msra.mxu0 0.0
        %2131 = vmatprep.subr.mxu0 0.0
        %2132 = vmatpush1.msra.mxu0 0.0
        %2133 = vmatprep.subr.mxu0 0.0
        %2134 = vmatpush1.msra.mxu0 0.0
        %2135 = vmatprep.subr.mxu0 0.0
        %2136 = vmatpush1.msra.mxu0 0.0
        %2137 = vmatprep.subr.mxu0 0.0
        %2138 = vmatpush1.msra.mxu0 0.0
        %2139 = vmatprep.subr.mxu0 0.0
        %2140 = vmatpush1.msra.mxu0 0.0
        %2141 = vmatprep.subr.mxu0 0.0
        %2142 = vmatpush1.msra.mxu0 0.0
        %2143 = vmatprep.subr.mxu0 0.0
        %2144 = vmatpush1.msra.mxu0 0.0
        %2145 = vmatprep.subr.mxu0 0.0
        %2146 = vmatpush1.msra.mxu0 0.0
        %2147 = vmatprep.subr.mxu0 0.0
        %2148 = vmatpush1.msra.mxu0 0.0
        %2149 = vmatprep.subr.mxu0 0.0
        %2150 = vmatpush1.msra.mxu0 0.0
        %2151 = vmatprep.subr.mxu0 0.0
        %2152 = vmatpush1.msra.mxu0 0.0
        %2153 = vmatprep.subr.mxu0 0.0
        %2154 = vmatpush1.msra.mxu0 0.0
        %2155 = vmatprep.subr.mxu0 0.0
        %2156 = vmatpush1.msra.mxu0 0.0
        %2157 = vmatprep.mubr.f32.mxu0 0.0
        %2158 = vmatmul.mubr.f32.gmra.mrb[0].mxu0 %v481
        %v2159 = vpop.f32.mrb[0].mxu0
        %v2160 = vadd.f32 0.0, %v2159
        %v2161 = vpop.f32.mrb[0].mxu0
        %2162 = vmatprep.mubr.f32.mxu0 0.0
        %2163 = vmatmul.mubr.f32.gmra.mrb[0].mxu0 %v484
        %v2164 = vpop.f32.mrb[0].mxu0
        %v2165 = vadd.f32 0.0, %v2164
        %v2166 = vpop.f32.mrb[0].mxu0
        %2167 = vdwg.mxu0
        %v2168 = vmul.f32 %v2160, 0.11111111
        %v2169 = vmul.f32 %v2165, 0.11111111
        %v2170 = vmul.f32 %v1522, %v1680
        %v2171 = vmul.f32 %v1523, %v1681
        %v2172 = vsub.f32 %v2168, %v2170
        %v2173 = vsub.f32 %v2169, %v2171
        %v2174 = vmul.f32 %v1522, 2.0
        %v2175 = vmul.f32 %v1523, 2.0
        %v2176 = vmul.f32 %v2174, %v1680
        %v2177 = vmul.f32 %v2175, %v1681
        %v2178 = vadd.f32 %v2176, 0.0001
        %v2179 = vadd.f32 %v2177, 0.0001
        %v2180 = vmul.f32 %v2172, 2.0
        %v2181 = vmul.f32 %v2173, 2.0
        %v2182 = vadd.f32 %v2180, 0.0009
        %v2183 = vadd.f32 %v2181, 0.0009
        %v2184 = vmul.f32 %v2178, %v2182
        %v2185 = vmul.f32 %v2179, %v2183
        %v2186 = vadd.f32 %v1842, %v2006
        %v2187 = vadd.f32 %v1843, %v2007
        %v2188 = vadd.f32 %v2186, 0.0001
        %v2189 = vadd.f32 %v2187, 0.0001
        %v2190 = vadd.f32 %v1844, %v2008
        %v2191 = vadd.f32 %v1845, %v2009
        %v2192 = vadd.f32 %v2190, 0.0009
        %v2193 = vadd.f32 %v2191, 0.0009
        %v2194 = vmul.f32 %v2188, %v2192
        %v2195 = vmul.f32 %v2189, %v2193
        %v2196 = vrcp.pop %v2194
        %v2197 = vmul.f32 %v2184, %v2196
        %v2198 = vrcp.pop %v2195
        %v2199 = vmul.f32 %v2185, %v2198
        %v2200 = vsub.f32 1.0, %v2197
        %v2201 = vsub.f32 1.0, %v2199
        %v2202 = vmul.f32 %v2200, 0.5
        %v2203 = vmul.f32 %v2201, 0.5
        %v2204 = vsel %vm385, %v2202, 0.0
        %v2205 = vsel %vm385, %v2203, 0.0
        %v2206 = vadd.f32 %v2204, %v2205
        %2207 = vadd.xlane.f32.xlu0 %v2206
        %v2208 = vpop.xlane.xlu0 %2207
        %v2209 = vrot.slane %v2208, 4
        %v2210 = vadd.f32 %v2208, %v2209
        %v2211 = vrot.slane %v2210, 2
        %v2212 = vadd.f32 %v2210, %v2211
        %v2213 = vrot.slane %v2212, 1
        %v2214 = vadd.f32 %v2212, %v2213
        %s2215 = vtos %v2214
        %s2216 = sadd.f32 %s1255, %s2215
        %2217 = vmatprep.subr.mxu0 0.0
        %2218 = vmatpush1.msra.mxu0 %v379
        %2219 = vmatprep.subr.mxu0 0.0
        %2220 = vmatpush1.msra.mxu0 %v380
        %2221 = vmatprep.subr.mxu0 0.0
        %2222 = vmatpush1.msra.mxu0 0.0
        %2223 = vmatprep.subr.mxu0 0.0
        %2224 = vmatpush1.msra.mxu0 0.0
        %2225 = vmatprep.subr.mxu0 0.0
        %2226 = vmatpush1.msra.mxu0 0.0
        %2227 = vmatprep.subr.mxu0 0.0
        %2228 = vmatpush1.msra.mxu0 0.0
        %2229 = vmatprep.subr.mxu0 0.0
        %2230 = vmatpush1.msra.mxu0 0.0
        %2231 = vmatprep.subr.mxu0 0.0
        %2232 = vmatpush1.msra.mxu0 0.0
        %2233 = vmatprep.subr.mxu0 0.0
        %2234 = vmatpush1.msra.mxu0 0.0
        %2235 = vmatprep.subr.mxu0 0.0
        %2236 = vmatpush1.msra.mxu0 0.0
        %2237 = vmatprep.subr.mxu0 0.0
        %2238 = vmatpush1.msra.mxu0 0.0
        %2239 = vmatprep.subr.mxu0 0.0
        %2240 = vmatpush1.msra.mxu0 0.0
        %2241 = vmatprep.subr.mxu0 0.0
        %2242 = vmatpush1.msra.mxu0 0.0
        %2243 = vmatprep.subr.mxu0 0.0
        %2244 = vmatpush1.msra.mxu0 0.0
        %2245 = vmatprep.subr.mxu0 0.0
        %2246 = vmatpush1.msra.mxu0 0.0
        %2247 = vmatprep.subr.mxu0 0.0
        %2248 = vmatpush1.msra.mxu0 0.0
        %2249 = vmatprep.subr.mxu0 0.0
        %2250 = vmatpush1.msra.mxu0 0.0
        %2251 = vmatprep.subr.mxu0 0.0
        %2252 = vmatpush1.msra.mxu0 0.0
        %2253 = vmatprep.subr.mxu0 0.0
        %2254 = vmatpush1.msra.mxu0 0.0
        %2255 = vmatprep.subr.mxu0 0.0
        %2256 = vmatpush1.msra.mxu0 0.0
        %2257 = vmatprep.subr.mxu0 0.0
        %2258 = vmatpush1.msra.mxu0 0.0
        %2259 = vmatprep.subr.mxu0 0.0
        %2260 = vmatpush1.msra.mxu0 0.0
        %2261 = vmatprep.subr.mxu0 0.0
        %2262 = vmatpush1.msra.mxu0 0.0
        %2263 = vmatprep.subr.mxu0 0.0
        %2264 = vmatpush1.msra.mxu0 0.0
        %2265 = vmatprep.subr.mxu0 0.0
        %2266 = vmatpush1.msra.mxu0 0.0
        %2267 = vmatprep.subr.mxu0 0.0
        %2268 = vmatpush1.msra.mxu0 0.0
        %2269 = vmatprep.subr.mxu0 0.0
        %2270 = vmatpush1.msra.mxu0 0.0
        %2271 = vmatprep.subr.mxu0 0.0
        %2272 = vmatpush1.msra.mxu0 0.0
        %2273 = vmatprep.subr.mxu0 0.0
        %2274 = vmatpush1.msra.mxu0 0.0
        %2275 = vmatprep.subr.mxu0 0.0
        %2276 = vmatpush1.msra.mxu0 0.0
        %2277 = vmatprep.subr.mxu0 0.0
        %2278 = vmatpush1.msra.mxu0 0.0
        %2279 = vmatprep.subr.mxu0 0.0
        %2280 = vmatpush1.msra.mxu0 0.0
        %2281 = vmatprep.mubr.f32.mxu0 0.0
        %2282 = vmatmul.mubr.f32.gmra.mrb[0].mxu0 %v1367
        %v2283 = vpop.f32.mrb[0].mxu0
        %v2284 = vadd.f32 0.0, %v2283
        %v2285 = vpop.f32.mrb[0].mxu0
        %2286 = vmatprep.mubr.f32.mxu0 0.0
        %2287 = vmatmul.mubr.f32.gmra.mrb[0].mxu0 %v1370
        %v2288 = vpop.f32.mrb[0].mxu0
        %v2289 = vadd.f32 0.0, %v2288
        %v2290 = vpop.f32.mrb[0].mxu0
        %2291 = vdwg.mxu0
        %v2292 = vsub.f32 %v339, %v2284
        %v2293 = vsub.f32 %v340, %v2289
        %v2294 = vand.u32 2147483647, %v2292
        %v2295 = vand.u32 2147483647, %v2293
        %v2296 = vadd.f32 %v1335, %v2294
        %v2297 = vadd.f32 %v1336, %v2295
        %v2298 = vrot.slane %v339, 1
        %v2299 = vrot.slane %v340, 1
        %v2300 = vsel %vm1337, %v2298, %v2299
        %v2303 = vsub.f32 %v339, %v2300
        %v2304 = vsub.f32 %v340, %v2299
        %v2305 = vand.u32 2147483647, %v2303
        %v2306 = vand.u32 2147483647, %v2304
        %v2307 = vadd.f32 %v1347, %v2305
        %v2308 = vadd.f32 %v1348, %v2306
        %v2309 = vsub.f32 %v341, %v347
        %v2310 = vsub.f32 %v342, %v348
        %v2311 = vand.u32 2147483647, %v2309
        %v2312 = vand.u32 2147483647, %v2310
        %v2313 = vsel %vm385, %v2311, 0.0
        %v2314 = vsel %vm385, %v2312, 0.0
        %v2315 = vadd.f32 %v2313, %v2314
        %2316 = vadd.xlane.f32.xlu0 %v2315
        %v2317 = vpop.xlane.xlu0 %2316
        %v2318 = vrot.slane %v2317, 4
        %v2319 = vadd.f32 %v2317, %v2318
        %v2320 = vrot.slane %v2319, 2
        %v2321 = vadd.f32 %v2319, %v2320
        %v2322 = vrot.slane %v2321, 1
        %v2323 = vadd.f32 %v2321, %v2322
        %s2324 = vtos %v2323
        %s2325 = sadd.f32 %s1365, %s2324
        %v2327 = vsel %vm385, %v341, 0
        %v2330 = vsel %vm385, %v342, 0
        %2332 = vmatprep.subr.mxu0 0.0
        %2333 = vmatpush1.msra.mxu0 %v366
        %2334 = vmatprep.subr.mxu0 0.0
        %2335 = vmatpush1.msra.mxu0 %v367
        %2336 = vmatprep.subr.mxu0 0.0
        %2337 = vmatpush1.msra.mxu0 0.0
        %2338 = vmatprep.subr.mxu0 0.0
        %2339 = vmatpush1.msra.mxu0 0.0
        %2340 = vmatprep.subr.mxu0 0.0
        %2341 = vmatpush1.msra.mxu0 0.0
        %2342 = vmatprep.subr.mxu0 0.0
        %2343 = vmatpush1.msra.mxu0 0.0
        %2344 = vmatprep.subr.mxu0 0.0
        %2345 = vmatpush1.msra.mxu0 0.0
        %2346 = vmatprep.subr.mxu0 0.0
        %2347 = vmatpush1.msra.mxu0 0.0
        %2348 = vmatprep.subr.mxu0 0.0
        %2349 = vmatpush1.msra.mxu0 0.0
        %2350 = vmatprep.subr.mxu0 0.0
        %2351 = vmatpush1.msra.mxu0 0.0
        %2352 = vmatprep.subr.mxu0 0.0
        %2353 = vmatpush1.msra.mxu0 0.0
        %2354 = vmatprep.subr.mxu0 0.0
        %2355 = vmatpush1.msra.mxu0 0.0
        %2356 = vmatprep.subr.mxu0 0.0
        %2357 = vmatpush1.msra.mxu0 0.0
        %2358 = vmatprep.subr.mxu0 0.0
        %2359 = vmatpush1.msra.mxu0 0.0
        %2360 = vmatprep.subr.mxu0 0.0
        %2361 = vmatpush1.msra.mxu0 0.0
        %2362 = vmatprep.subr.mxu0 0.0
        %2363 = vmatpush1.msra.mxu0 0.0
        %2364 = vmatprep.subr.mxu0 0.0
        %2365 = vmatpush1.msra.mxu0 0.0
        %2366 = vmatprep.subr.mxu0 0.0
        %2367 = vmatpush1.msra.mxu0 0.0
        %2368 = vmatprep.subr.mxu0 0.0
        %2369 = vmatpush1.msra.mxu0 0.0
        %2370 = vmatprep.subr.mxu0 0.0
        %2371 = vmatpush1.msra.mxu0 0.0
        %2372 = vmatprep.subr.mxu0 0.0
        %2373 = vmatpush1.msra.mxu0 0.0
        %2374 = vmatprep.subr.mxu0 0.0
        %2375 = vmatpush1.msra.mxu0 0.0
        %2376 = vmatprep.subr.mxu0 0.0
        %2377 = vmatpush1.msra.mxu0 0.0
        %2378 = vmatprep.subr.mxu0 0.0
        %2379 = vmatpush1.msra.mxu0 0.0
        %2380 = vmatprep.subr.mxu0 0.0
        %2381 = vmatpush1.msra.mxu0 0.0
        %2382 = vmatprep.subr.mxu0 0.0
        %2383 = vmatpush1.msra.mxu0 0.0
        %2384 = vmatprep.subr.mxu0 0.0
        %2385 = vmatpush1.msra.mxu0 0.0
        %2386 = vmatprep.subr.mxu0 0.0
        %2387 = vmatpush1.msra.mxu0 0.0
        %2388 = vmatprep.subr.mxu0 0.0
        %2389 = vmatpush1.msra.mxu0 0.0
        %2390 = vmatprep.subr.mxu0 0.0
        %2391 = vmatpush1.msra.mxu0 0.0
        %2392 = vmatprep.subr.mxu0 0.0
        %2393 = vmatpush1.msra.mxu0 0.0
        %2394 = vmatprep.subr.mxu0 0.0
        %2395 = vmatpush1.msra.mxu0 0.0
        %2396 = vmatprep.mubr.f32.mxu0 0.0
        %2397 = vmatmul.mubr.f32.gmra.mrb[0].mxu0 %v2327
        %v2398 = vpop.f32.mrb[0].mxu0
        %v2399 = vadd.f32 0.0, %v2398
        %v2400 = vpop.f32.mrb[0].mxu0
        %2401 = vmatprep.mubr.f32.mxu0 0.0
        %2402 = vmatmul.mubr.f32.gmra.mrb[0].mxu0 %v2330
        %v2403 = vpop.f32.mrb[0].mxu0
        %v2404 = vadd.f32 0.0, %v2403
        %v2405 = vpop.f32.mrb[0].mxu0
        %2406 = vdwg.mxu0
        %2407 = vmatprep.subr.mxu0 0.0
        %2408 = vmatpush1.msra.mxu0 %v2399
        %2409 = vmatprep.subr.mxu0 0.0
        %2410 = vmatpush1.msra.mxu0 %v2404
        %2411 = vmatprep.subr.mxu0 0.0
        %2412 = vmatpush1.msra.mxu0 0.0
        %2413 = vmatprep.subr.mxu0 0.0
        %2414 = vmatpush1.msra.mxu0 0.0
        %2415 = vmatprep.subr.mxu0 0.0
        %2416 = vmatpush1.msra.mxu0 0.0
        %2417 = vmatprep.subr.mxu0 0.0
        %2418 = vmatpush1.msra.mxu0 0.0
        %2419 = vmatprep.subr.mxu0 0.0
        %2420 = vmatpush1.msra.mxu0 0.0
        %2421 = vmatprep.subr.mxu0 0.0
        %2422 = vmatpush1.msra.mxu0 0.0
        %2423 = vmatprep.subr.mxu0 0.0
        %2424 = vmatpush1.msra.mxu0 0.0
        %2425 = vmatprep.subr.mxu0 0.0
        %2426 = vmatpush1.msra.mxu0 0.0
        %2427 = vmatprep.subr.mxu0 0.0
        %2428 = vmatpush1.msra.mxu0 0.0
        %2429 = vmatprep.subr.mxu0 0.0
        %2430 = vmatpush1.msra.mxu0 0.0
        %2431 = vmatprep.subr.mxu0 0.0
        %2432 = vmatpush1.msra.mxu0 0.0
        %2433 = vmatprep.subr.mxu0 0.0
        %2434 = vmatpush1.msra.mxu0 0.0
        %2435 = vmatprep.subr.mxu0 0.0
        %2436 = vmatpush1.msra.mxu0 0.0
        %2437 = vmatprep.subr.mxu0 0.0
        %2438 = vmatpush1.msra.mxu0 0.0
        %2439 = vmatprep.subr.mxu0 0.0
        %2440 = vmatpush1.msra.mxu0 0.0
        %2441 = vmatprep.subr.mxu0 0.0
        %2442 = vmatpush1.msra.mxu0 0.0
        %2443 = vmatprep.subr.mxu0 0.0
        %2444 = vmatpush1.msra.mxu0 0.0
        %2445 = vmatprep.subr.mxu0 0.0
        %2446 = vmatpush1.msra.mxu0 0.0
        %2447 = vmatprep.subr.mxu0 0.0
        %2448 = vmatpush1.msra.mxu0 0.0
        %2449 = vmatprep.subr.mxu0 0.0
        %2450 = vmatpush1.msra.mxu0 0.0
        %2451 = vmatprep.subr.mxu0 0.0
        %2452 = vmatpush1.msra.mxu0 0.0
        %2453 = vmatprep.subr.mxu0 0.0
        %2454 = vmatpush1.msra.mxu0 0.0
        %2455 = vmatprep.subr.mxu0 0.0
        %2456 = vmatpush1.msra.mxu0 0.0
        %2457 = vmatprep.subr.mxu0 0.0
        %2458 = vmatpush1.msra.mxu0 0.0
        %2459 = vmatprep.subr.mxu0 0.0
        %2460 = vmatpush1.msra.mxu0 0.0
        %2461 = vmatprep.subr.mxu0 0.0
        %2462 = vmatpush1.msra.mxu0 0.0
        %2463 = vmatprep.subr.mxu0 0.0
        %2464 = vmatpush1.msra.mxu0 0.0
        %2465 = vmatprep.subr.mxu0 0.0
        %2466 = vmatpush1.msra.mxu0 0.0
        %2467 = vmatprep.subr.mxu0 0.0
        %2468 = vmatpush1.msra.mxu0 0.0
        %2469 = vmatprep.subr.mxu0 0.0
        %2470 = vmatpush1.msra.mxu0 0.0
        %2471 = vmatprep.mubr.f32.mxu0 0.0
        %2472 = vmatmul.mubr.f32.gmra.mrb[0].mxu0 %v481
        %v2473 = vpop.f32.mrb[0].mxu0
        %v2474 = vadd.f32 0.0, %v2473
        %v2475 = vpop.f32.mrb[0].mxu0
        %2476 = vmatprep.mubr.f32.mxu0 0.0
        %2477 = vmatmul.mubr.f32.gmra.mrb[0].mxu0 %v484
        %v2478 = vpop.f32.mrb[0].mxu0
        %v2479 = vadd.f32 0.0, %v2478
        %v2480 = vpop.f32.mrb[0].mxu0
        %2481 = vdwg.mxu0
        %v2482 = vmul.f32 %v2474, 0.11111111
        %v2483 = vmul.f32 %v2479, 0.11111111
        %v2485 = vsel %vm385, %v347, 0
        %v2488 = vsel %vm385, %v348, 0
        %2490 = vmatprep.subr.mxu0 0.0
        %2491 = vmatpush1.msra.mxu0 %v366
        %2492 = vmatprep.subr.mxu0 0.0
        %2493 = vmatpush1.msra.mxu0 %v367
        %2494 = vmatprep.subr.mxu0 0.0
        %2495 = vmatpush1.msra.mxu0 0.0
        %2496 = vmatprep.subr.mxu0 0.0
        %2497 = vmatpush1.msra.mxu0 0.0
        %2498 = vmatprep.subr.mxu0 0.0
        %2499 = vmatpush1.msra.mxu0 0.0
        %2500 = vmatprep.subr.mxu0 0.0
        %2501 = vmatpush1.msra.mxu0 0.0
        %2502 = vmatprep.subr.mxu0 0.0
        %2503 = vmatpush1.msra.mxu0 0.0
        %2504 = vmatprep.subr.mxu0 0.0
        %2505 = vmatpush1.msra.mxu0 0.0
        %2506 = vmatprep.subr.mxu0 0.0
        %2507 = vmatpush1.msra.mxu0 0.0
        %2508 = vmatprep.subr.mxu0 0.0
        %2509 = vmatpush1.msra.mxu0 0.0
        %2510 = vmatprep.subr.mxu0 0.0
        %2511 = vmatpush1.msra.mxu0 0.0
        %2512 = vmatprep.subr.mxu0 0.0
        %2513 = vmatpush1.msra.mxu0 0.0
        %2514 = vmatprep.subr.mxu0 0.0
        %2515 = vmatpush1.msra.mxu0 0.0
        %2516 = vmatprep.subr.mxu0 0.0
        %2517 = vmatpush1.msra.mxu0 0.0
        %2518 = vmatprep.subr.mxu0 0.0
        %2519 = vmatpush1.msra.mxu0 0.0
        %2520 = vmatprep.subr.mxu0 0.0
        %2521 = vmatpush1.msra.mxu0 0.0
        %2522 = vmatprep.subr.mxu0 0.0
        %2523 = vmatpush1.msra.mxu0 0.0
        %2524 = vmatprep.subr.mxu0 0.0
        %2525 = vmatpush1.msra.mxu0 0.0
        %2526 = vmatprep.subr.mxu0 0.0
        %2527 = vmatpush1.msra.mxu0 0.0
        %2528 = vmatprep.subr.mxu0 0.0
        %2529 = vmatpush1.msra.mxu0 0.0
        %2530 = vmatprep.subr.mxu0 0.0
        %2531 = vmatpush1.msra.mxu0 0.0
        %2532 = vmatprep.subr.mxu0 0.0
        %2533 = vmatpush1.msra.mxu0 0.0
        %2534 = vmatprep.subr.mxu0 0.0
        %2535 = vmatpush1.msra.mxu0 0.0
        %2536 = vmatprep.subr.mxu0 0.0
        %2537 = vmatpush1.msra.mxu0 0.0
        %2538 = vmatprep.subr.mxu0 0.0
        %2539 = vmatpush1.msra.mxu0 0.0
        %2540 = vmatprep.subr.mxu0 0.0
        %2541 = vmatpush1.msra.mxu0 0.0
        %2542 = vmatprep.subr.mxu0 0.0
        %2543 = vmatpush1.msra.mxu0 0.0
        %2544 = vmatprep.subr.mxu0 0.0
        %2545 = vmatpush1.msra.mxu0 0.0
        %2546 = vmatprep.subr.mxu0 0.0
        %2547 = vmatpush1.msra.mxu0 0.0
        %2548 = vmatprep.subr.mxu0 0.0
        %2549 = vmatpush1.msra.mxu0 0.0
        %2550 = vmatprep.subr.mxu0 0.0
        %2551 = vmatpush1.msra.mxu0 0.0
        %2552 = vmatprep.subr.mxu0 0.0
        %2553 = vmatpush1.msra.mxu0 0.0
        %2554 = vmatprep.mubr.f32.mxu0 0.0
        %2555 = vmatmul.mubr.f32.gmra.mrb[0].mxu0 %v2485
        %v2556 = vpop.f32.mrb[0].mxu0
        %v2557 = vadd.f32 0.0, %v2556
        %v2558 = vpop.f32.mrb[0].mxu0
        %2559 = vmatprep.mubr.f32.mxu0 0.0
        %2560 = vmatmul.mubr.f32.gmra.mrb[0].mxu0 %v2488
        %v2561 = vpop.f32.mrb[0].mxu0
        %v2562 = vadd.f32 0.0, %v2561
        %v2563 = vpop.f32.mrb[0].mxu0
        %2564 = vdwg.mxu0
        %2565 = vmatprep.subr.mxu0 0.0
        %2566 = vmatpush1.msra.mxu0 %v2557
        %2567 = vmatprep.subr.mxu0 0.0
        %2568 = vmatpush1.msra.mxu0 %v2562
        %2569 = vmatprep.subr.mxu0 0.0
        %2570 = vmatpush1.msra.mxu0 0.0
        %2571 = vmatprep.subr.mxu0 0.0
        %2572 = vmatpush1.msra.mxu0 0.0
        %2573 = vmatprep.subr.mxu0 0.0
        %2574 = vmatpush1.msra.mxu0 0.0
        %2575 = vmatprep.subr.mxu0 0.0
        %2576 = vmatpush1.msra.mxu0 0.0
        %2577 = vmatprep.subr.mxu0 0.0
        %2578 = vmatpush1.msra.mxu0 0.0
        %2579 = vmatprep.subr.mxu0 0.0
        %2580 = vmatpush1.msra.mxu0 0.0
        %2581 = vmatprep.subr.mxu0 0.0
        %2582 = vmatpush1.msra.mxu0 0.0
        %2583 = vmatprep.subr.mxu0 0.0
        %2584 = vmatpush1.msra.mxu0 0.0
        %2585 = vmatprep.subr.mxu0 0.0
        %2586 = vmatpush1.msra.mxu0 0.0
        %2587 = vmatprep.subr.mxu0 0.0
        %2588 = vmatpush1.msra.mxu0 0.0
        %2589 = vmatprep.subr.mxu0 0.0
        %2590 = vmatpush1.msra.mxu0 0.0
        %2591 = vmatprep.subr.mxu0 0.0
        %2592 = vmatpush1.msra.mxu0 0.0
        %2593 = vmatprep.subr.mxu0 0.0
        %2594 = vmatpush1.msra.mxu0 0.0
        %2595 = vmatprep.subr.mxu0 0.0
        %2596 = vmatpush1.msra.mxu0 0.0
        %2597 = vmatprep.subr.mxu0 0.0
        %2598 = vmatpush1.msra.mxu0 0.0
        %2599 = vmatprep.subr.mxu0 0.0
        %2600 = vmatpush1.msra.mxu0 0.0
        %2601 = vmatprep.subr.mxu0 0.0
        %2602 = vmatpush1.msra.mxu0 0.0
        %2603 = vmatprep.subr.mxu0 0.0
        %2604 = vmatpush1.msra.mxu0 0.0
        %2605 = vmatprep.subr.mxu0 0.0
        %2606 = vmatpush1.msra.mxu0 0.0
        %2607 = vmatprep.subr.mxu0 0.0
        %2608 = vmatpush1.msra.mxu0 0.0
        %2609 = vmatprep.subr.mxu0 0.0
        %2610 = vmatpush1.msra.mxu0 0.0
        %2611 = vmatprep.subr.mxu0 0.0
        %2612 = vmatpush1.msra.mxu0 0.0
        %2613 = vmatprep.subr.mxu0 0.0
        %2614 = vmatpush1.msra.mxu0 0.0
        %2615 = vmatprep.subr.mxu0 0.0
        %2616 = vmatpush1.msra.mxu0 0.0
        %2617 = vmatprep.subr.mxu0 0.0
        %2618 = vmatpush1.msra.mxu0 0.0
        %2619 = vmatprep.subr.mxu0 0.0
        %2620 = vmatpush1.msra.mxu0 0.0
        %2621 = vmatprep.subr.mxu0 0.0
        %2622 = vmatpush1.msra.mxu0 0.0
        %2623 = vmatprep.subr.mxu0 0.0
        %2624 = vmatpush1.msra.mxu0 0.0
        %2625 = vmatprep.subr.mxu0 0.0
        %2626 = vmatpush1.msra.mxu0 0.0
        %2627 = vmatprep.subr.mxu0 0.0
        %2628 = vmatpush1.msra.mxu0 0.0
        %2629 = vmatprep.mubr.f32.mxu0 0.0
        %2630 = vmatmul.mubr.f32.gmra.mrb[0].mxu0 %v481
        %v2631 = vpop.f32.mrb[0].mxu0
        %v2632 = vadd.f32 0.0, %v2631
        %v2633 = vpop.f32.mrb[0].mxu0
        %2634 = vmatprep.mubr.f32.mxu0 0.0
        %2635 = vmatmul.mubr.f32.gmra.mrb[0].mxu0 %v484
        %v2636 = vpop.f32.mrb[0].mxu0
        %v2637 = vadd.f32 0.0, %v2636
        %v2638 = vpop.f32.mrb[0].mxu0
        %2639 = vdwg.mxu0
        %v2640 = vmul.f32 %v2632, 0.11111111
        %v2641 = vmul.f32 %v2637, 0.11111111
        %v2642 = vmul.f32 %v341, %v341
        %v2643 = vmul.f32 %v342, %v342
        %v2645 = vsel %vm385, %v2642, 0
        %v2648 = vsel %vm385, %v2643, 0
        %2650 = vmatprep.subr.mxu0 0.0
        %2651 = vmatpush1.msra.mxu0 %v366
        %2652 = vmatprep.subr.mxu0 0.0
        %2653 = vmatpush1.msra.mxu0 %v367
        %2654 = vmatprep.subr.mxu0 0.0
        %2655 = vmatpush1.msra.mxu0 0.0
        %2656 = vmatprep.subr.mxu0 0.0
        %2657 = vmatpush1.msra.mxu0 0.0
        %2658 = vmatprep.subr.mxu0 0.0
        %2659 = vmatpush1.msra.mxu0 0.0
        %2660 = vmatprep.subr.mxu0 0.0
        %2661 = vmatpush1.msra.mxu0 0.0
        %2662 = vmatprep.subr.mxu0 0.0
        %2663 = vmatpush1.msra.mxu0 0.0
        %2664 = vmatprep.subr.mxu0 0.0
        %2665 = vmatpush1.msra.mxu0 0.0
        %2666 = vmatprep.subr.mxu0 0.0
        %2667 = vmatpush1.msra.mxu0 0.0
        %2668 = vmatprep.subr.mxu0 0.0
        %2669 = vmatpush1.msra.mxu0 0.0
        %2670 = vmatprep.subr.mxu0 0.0
        %2671 = vmatpush1.msra.mxu0 0.0
        %2672 = vmatprep.subr.mxu0 0.0
        %2673 = vmatpush1.msra.mxu0 0.0
        %2674 = vmatprep.subr.mxu0 0.0
        %2675 = vmatpush1.msra.mxu0 0.0
        %2676 = vmatprep.subr.mxu0 0.0
        %2677 = vmatpush1.msra.mxu0 0.0
        %2678 = vmatprep.subr.mxu0 0.0
        %2679 = vmatpush1.msra.mxu0 0.0
        %2680 = vmatprep.subr.mxu0 0.0
        %2681 = vmatpush1.msra.mxu0 0.0
        %2682 = vmatprep.subr.mxu0 0.0
        %2683 = vmatpush1.msra.mxu0 0.0
        %2684 = vmatprep.subr.mxu0 0.0
        %2685 = vmatpush1.msra.mxu0 0.0
        %2686 = vmatprep.subr.mxu0 0.0
        %2687 = vmatpush1.msra.mxu0 0.0
        %2688 = vmatprep.subr.mxu0 0.0
        %2689 = vmatpush1.msra.mxu0 0.0
        %2690 = vmatprep.subr.mxu0 0.0
        %2691 = vmatpush1.msra.mxu0 0.0
        %2692 = vmatprep.subr.mxu0 0.0
        %2693 = vmatpush1.msra.mxu0 0.0
        %2694 = vmatprep.subr.mxu0 0.0
        %2695 = vmatpush1.msra.mxu0 0.0
        %2696 = vmatprep.subr.mxu0 0.0
        %2697 = vmatpush1.msra.mxu0 0.0
        %2698 = vmatprep.subr.mxu0 0.0
        %2699 = vmatpush1.msra.mxu0 0.0
        %2700 = vmatprep.subr.mxu0 0.0
        %2701 = vmatpush1.msra.mxu0 0.0
        %2702 = vmatprep.subr.mxu0 0.0
        %2703 = vmatpush1.msra.mxu0 0.0
        %2704 = vmatprep.subr.mxu0 0.0
        %2705 = vmatpush1.msra.mxu0 0.0
        %2706 = vmatprep.subr.mxu0 0.0
        %2707 = vmatpush1.msra.mxu0 0.0
        %2708 = vmatprep.subr.mxu0 0.0
        %2709 = vmatpush1.msra.mxu0 0.0
        %2710 = vmatprep.subr.mxu0 0.0
        %2711 = vmatpush1.msra.mxu0 0.0
        %2712 = vmatprep.subr.mxu0 0.0
        %2713 = vmatpush1.msra.mxu0 0.0
        %2714 = vmatprep.mubr.f32.mxu0 0.0
        %2715 = vmatmul.mubr.f32.gmra.mrb[0].mxu0 %v2645
        %v2716 = vpop.f32.mrb[0].mxu0
        %v2717 = vadd.f32 0.0, %v2716
        %v2718 = vpop.f32.mrb[0].mxu0
        %2719 = vmatprep.mubr.f32.mxu0 0.0
        %2720 = vmatmul.mubr.f32.gmra.mrb[0].mxu0 %v2648
        %v2721 = vpop.f32.mrb[0].mxu0
        %v2722 = vadd.f32 0.0, %v2721
        %v2723 = vpop.f32.mrb[0].mxu0
        %2724 = vdwg.mxu0
        %2725 = vmatprep.subr.mxu0 0.0
        %2726 = vmatpush1.msra.mxu0 %v2717
        %2727 = vmatprep.subr.mxu0 0.0
        %2728 = vmatpush1.msra.mxu0 %v2722
        %2729 = vmatprep.subr.mxu0 0.0
        %2730 = vmatpush1.msra.mxu0 0.0
        %2731 = vmatprep.subr.mxu0 0.0
        %2732 = vmatpush1.msra.mxu0 0.0
        %2733 = vmatprep.subr.mxu0 0.0
        %2734 = vmatpush1.msra.mxu0 0.0
        %2735 = vmatprep.subr.mxu0 0.0
        %2736 = vmatpush1.msra.mxu0 0.0
        %2737 = vmatprep.subr.mxu0 0.0
        %2738 = vmatpush1.msra.mxu0 0.0
        %2739 = vmatprep.subr.mxu0 0.0
        %2740 = vmatpush1.msra.mxu0 0.0
        %2741 = vmatprep.subr.mxu0 0.0
        %2742 = vmatpush1.msra.mxu0 0.0
        %2743 = vmatprep.subr.mxu0 0.0
        %2744 = vmatpush1.msra.mxu0 0.0
        %2745 = vmatprep.subr.mxu0 0.0
        %2746 = vmatpush1.msra.mxu0 0.0
        %2747 = vmatprep.subr.mxu0 0.0
        %2748 = vmatpush1.msra.mxu0 0.0
        %2749 = vmatprep.subr.mxu0 0.0
        %2750 = vmatpush1.msra.mxu0 0.0
        %2751 = vmatprep.subr.mxu0 0.0
        %2752 = vmatpush1.msra.mxu0 0.0
        %2753 = vmatprep.subr.mxu0 0.0
        %2754 = vmatpush1.msra.mxu0 0.0
        %2755 = vmatprep.subr.mxu0 0.0
        %2756 = vmatpush1.msra.mxu0 0.0
        %2757 = vmatprep.subr.mxu0 0.0
        %2758 = vmatpush1.msra.mxu0 0.0
        %2759 = vmatprep.subr.mxu0 0.0
        %2760 = vmatpush1.msra.mxu0 0.0
        %2761 = vmatprep.subr.mxu0 0.0
        %2762 = vmatpush1.msra.mxu0 0.0
        %2763 = vmatprep.subr.mxu0 0.0
        %2764 = vmatpush1.msra.mxu0 0.0
        %2765 = vmatprep.subr.mxu0 0.0
        %2766 = vmatpush1.msra.mxu0 0.0
        %2767 = vmatprep.subr.mxu0 0.0
        %2768 = vmatpush1.msra.mxu0 0.0
        %2769 = vmatprep.subr.mxu0 0.0
        %2770 = vmatpush1.msra.mxu0 0.0
        %2771 = vmatprep.subr.mxu0 0.0
        %2772 = vmatpush1.msra.mxu0 0.0
        %2773 = vmatprep.subr.mxu0 0.0
        %2774 = vmatpush1.msra.mxu0 0.0
        %2775 = vmatprep.subr.mxu0 0.0
        %2776 = vmatpush1.msra.mxu0 0.0
        %2777 = vmatprep.subr.mxu0 0.0
        %2778 = vmatpush1.msra.mxu0 0.0
        %2779 = vmatprep.subr.mxu0 0.0
        %2780 = vmatpush1.msra.mxu0 0.0
        %2781 = vmatprep.subr.mxu0 0.0
        %2782 = vmatpush1.msra.mxu0 0.0
        %2783 = vmatprep.subr.mxu0 0.0
        %2784 = vmatpush1.msra.mxu0 0.0
        %2785 = vmatprep.subr.mxu0 0.0
        %2786 = vmatpush1.msra.mxu0 0.0
        %2787 = vmatprep.subr.mxu0 0.0
        %2788 = vmatpush1.msra.mxu0 0.0
        %2789 = vmatprep.mubr.f32.mxu0 0.0
        %2790 = vmatmul.mubr.f32.gmra.mrb[0].mxu0 %v481
        %v2791 = vpop.f32.mrb[0].mxu0
        %v2792 = vadd.f32 0.0, %v2791
        %v2793 = vpop.f32.mrb[0].mxu0
        %2794 = vmatprep.mubr.f32.mxu0 0.0
        %2795 = vmatmul.mubr.f32.gmra.mrb[0].mxu0 %v484
        %v2796 = vpop.f32.mrb[0].mxu0
        %v2797 = vadd.f32 0.0, %v2796
        %v2798 = vpop.f32.mrb[0].mxu0
        %2799 = vdwg.mxu0
        %v2800 = vmul.f32 %v2792, 0.11111111
        %v2801 = vmul.f32 %v2797, 0.11111111
        %v2802 = vmul.f32 %v2482, %v2482
        %v2803 = vmul.f32 %v2483, %v2483
        %v2804 = vsub.f32 %v2800, %v2802
        %v2805 = vsub.f32 %v2801, %v2803
        %v2806 = vmul.f32 %v347, %v347
        %v2807 = vmul.f32 %v348, %v348
        %v2809 = vsel %vm385, %v2806, 0
        %v2812 = vsel %vm385, %v2807, 0
        %2814 = vmatprep.subr.mxu0 0.0
        %2815 = vmatpush1.msra.mxu0 %v366
        %2816 = vmatprep.subr.mxu0 0.0
        %2817 = vmatpush1.msra.mxu0 %v367
        %2818 = vmatprep.subr.mxu0 0.0
        %2819 = vmatpush1.msra.mxu0 0.0
        %2820 = vmatprep.subr.mxu0 0.0
        %2821 = vmatpush1.msra.mxu0 0.0
        %2822 = vmatprep.subr.mxu0 0.0
        %2823 = vmatpush1.msra.mxu0 0.0
        %2824 = vmatprep.subr.mxu0 0.0
        %2825 = vmatpush1.msra.mxu0 0.0
        %2826 = vmatprep.subr.mxu0 0.0
        %2827 = vmatpush1.msra.mxu0 0.0
        %2828 = vmatprep.subr.mxu0 0.0
        %2829 = vmatpush1.msra.mxu0 0.0
        %2830 = vmatprep.subr.mxu0 0.0
        %2831 = vmatpush1.msra.mxu0 0.0
        %2832 = vmatprep.subr.mxu0 0.0
        %2833 = vmatpush1.msra.mxu0 0.0
        %2834 = vmatprep.subr.mxu0 0.0
        %2835 = vmatpush1.msra.mxu0 0.0
        %2836 = vmatprep.subr.mxu0 0.0
        %2837 = vmatpush1.msra.mxu0 0.0
        %2838 = vmatprep.subr.mxu0 0.0
        %2839 = vmatpush1.msra.mxu0 0.0
        %2840 = vmatprep.subr.mxu0 0.0
        %2841 = vmatpush1.msra.mxu0 0.0
        %2842 = vmatprep.subr.mxu0 0.0
        %2843 = vmatpush1.msra.mxu0 0.0
        %2844 = vmatprep.subr.mxu0 0.0
        %2845 = vmatpush1.msra.mxu0 0.0
        %2846 = vmatprep.subr.mxu0 0.0
        %2847 = vmatpush1.msra.mxu0 0.0
        %2848 = vmatprep.subr.mxu0 0.0
        %2849 = vmatpush1.msra.mxu0 0.0
        %2850 = vmatprep.subr.mxu0 0.0
        %2851 = vmatpush1.msra.mxu0 0.0
        %2852 = vmatprep.subr.mxu0 0.0
        %2853 = vmatpush1.msra.mxu0 0.0
        %2854 = vmatprep.subr.mxu0 0.0
        %2855 = vmatpush1.msra.mxu0 0.0
        %2856 = vmatprep.subr.mxu0 0.0
        %2857 = vmatpush1.msra.mxu0 0.0
        %2858 = vmatprep.subr.mxu0 0.0
        %2859 = vmatpush1.msra.mxu0 0.0
        %2860 = vmatprep.subr.mxu0 0.0
        %2861 = vmatpush1.msra.mxu0 0.0
        %2862 = vmatprep.subr.mxu0 0.0
        %2863 = vmatpush1.msra.mxu0 0.0
        %2864 = vmatprep.subr.mxu0 0.0
        %2865 = vmatpush1.msra.mxu0 0.0
        %2866 = vmatprep.subr.mxu0 0.0
        %2867 = vmatpush1.msra.mxu0 0.0
        %2868 = vmatprep.subr.mxu0 0.0
        %2869 = vmatpush1.msra.mxu0 0.0
        %2870 = vmatprep.subr.mxu0 0.0
        %2871 = vmatpush1.msra.mxu0 0.0
        %2872 = vmatprep.subr.mxu0 0.0
        %2873 = vmatpush1.msra.mxu0 0.0
        %2874 = vmatprep.subr.mxu0 0.0
        %2875 = vmatpush1.msra.mxu0 0.0
        %2876 = vmatprep.subr.mxu0 0.0
        %2877 = vmatpush1.msra.mxu0 0.0
        %2878 = vmatprep.mubr.f32.mxu0 0.0
        %2879 = vmatmul.mubr.f32.gmra.mrb[0].mxu0 %v2809
        %v2880 = vpop.f32.mrb[0].mxu0
        %v2881 = vadd.f32 0.0, %v2880
        %v2882 = vpop.f32.mrb[0].mxu0
        %2883 = vmatprep.mubr.f32.mxu0 0.0
        %2884 = vmatmul.mubr.f32.gmra.mrb[0].mxu0 %v2812
        %v2885 = vpop.f32.mrb[0].mxu0
        %v2886 = vadd.f32 0.0, %v2885
        %v2887 = vpop.f32.mrb[0].mxu0
        %2888 = vdwg.mxu0
        %2889 = vmatprep.subr.mxu0 0.0
        %2890 = vmatpush1.msra.mxu0 %v2881
        %2891 = vmatprep.subr.mxu0 0.0
        %2892 = vmatpush1.msra.mxu0 %v2886
        %2893 = vmatprep.subr.mxu0 0.0
        %2894 = vmatpush1.msra.mxu0 0.0
        %2895 = vmatprep.subr.mxu0 0.0
        %2896 = vmatpush1.msra.mxu0 0.0
        %2897 = vmatprep.subr.mxu0 0.0
        %2898 = vmatpush1.msra.mxu0 0.0
        %2899 = vmatprep.subr.mxu0 0.0
        %2900 = vmatpush1.msra.mxu0 0.0
        %2901 = vmatprep.subr.mxu0 0.0
        %2902 = vmatpush1.msra.mxu0 0.0
        %2903 = vmatprep.subr.mxu0 0.0
        %2904 = vmatpush1.msra.mxu0 0.0
        %2905 = vmatprep.subr.mxu0 0.0
        %2906 = vmatpush1.msra.mxu0 0.0
        %2907 = vmatprep.subr.mxu0 0.0
        %2908 = vmatpush1.msra.mxu0 0.0
        %2909 = vmatprep.subr.mxu0 0.0
        %2910 = vmatpush1.msra.mxu0 0.0
        %2911 = vmatprep.subr.mxu0 0.0
        %2912 = vmatpush1.msra.mxu0 0.0
        %2913 = vmatprep.subr.mxu0 0.0
        %2914 = vmatpush1.msra.mxu0 0.0
        %2915 = vmatprep.subr.mxu0 0.0
        %2916 = vmatpush1.msra.mxu0 0.0
        %2917 = vmatprep.subr.mxu0 0.0
        %2918 = vmatpush1.msra.mxu0 0.0
        %2919 = vmatprep.subr.mxu0 0.0
        %2920 = vmatpush1.msra.mxu0 0.0
        %2921 = vmatprep.subr.mxu0 0.0
        %2922 = vmatpush1.msra.mxu0 0.0
        %2923 = vmatprep.subr.mxu0 0.0
        %2924 = vmatpush1.msra.mxu0 0.0
        %2925 = vmatprep.subr.mxu0 0.0
        %2926 = vmatpush1.msra.mxu0 0.0
        %2927 = vmatprep.subr.mxu0 0.0
        %2928 = vmatpush1.msra.mxu0 0.0
        %2929 = vmatprep.subr.mxu0 0.0
        %2930 = vmatpush1.msra.mxu0 0.0
        %2931 = vmatprep.subr.mxu0 0.0
        %2932 = vmatpush1.msra.mxu0 0.0
        %2933 = vmatprep.subr.mxu0 0.0
        %2934 = vmatpush1.msra.mxu0 0.0
        %2935 = vmatprep.subr.mxu0 0.0
        %2936 = vmatpush1.msra.mxu0 0.0
        %2937 = vmatprep.subr.mxu0 0.0
        %2938 = vmatpush1.msra.mxu0 0.0
        %2939 = vmatprep.subr.mxu0 0.0
        %2940 = vmatpush1.msra.mxu0 0.0
        %2941 = vmatprep.subr.mxu0 0.0
        %2942 = vmatpush1.msra.mxu0 0.0
        %2943 = vmatprep.subr.mxu0 0.0
        %2944 = vmatpush1.msra.mxu0 0.0
        %2945 = vmatprep.subr.mxu0 0.0
        %2946 = vmatpush1.msra.mxu0 0.0
        %2947 = vmatprep.subr.mxu0 0.0
        %2948 = vmatpush1.msra.mxu0 0.0
        %2949 = vmatprep.subr.mxu0 0.0
        %2950 = vmatpush1.msra.mxu0 0.0
        %2951 = vmatprep.subr.mxu0 0.0
        %2952 = vmatpush1.msra.mxu0 0.0
        %2953 = vmatprep.mubr.f32.mxu0 0.0
        %2954 = vmatmul.mubr.f32.gmra.mrb[0].mxu0 %v481
        %v2955 = vpop.f32.mrb[0].mxu0
        %v2956 = vadd.f32 0.0, %v2955
        %v2957 = vpop.f32.mrb[0].mxu0
        %2958 = vmatprep.mubr.f32.mxu0 0.0
        %2959 = vmatmul.mubr.f32.gmra.mrb[0].mxu0 %v484
        %v2960 = vpop.f32.mrb[0].mxu0
        %v2961 = vadd.f32 0.0, %v2960
        %v2962 = vpop.f32.mrb[0].mxu0
        %2963 = vdwg.mxu0
        %v2964 = vmul.f32 %v2956, 0.11111111
        %v2965 = vmul.f32 %v2961, 0.11111111
        %v2966 = vmul.f32 %v2640, %v2640
        %v2967 = vmul.f32 %v2641, %v2641
        %v2968 = vsub.f32 %v2964, %v2966
        %v2969 = vsub.f32 %v2965, %v2967
        %v2970 = vmul.f32 %v341, %v347
        %v2971 = vmul.f32 %v342, %v348
        %v2973 = vsel %vm385, %v2970, 0
        %v2976 = vsel %vm385, %v2971, 0
        %2978 = vmatprep.subr.mxu0 0.0
        %2979 = vmatpush1.msra.mxu0 %v366
        %2980 = vmatprep.subr.mxu0 0.0
        %2981 = vmatpush1.msra.mxu0 %v367
        %2982 = vmatprep.subr.mxu0 0.0
        %2983 = vmatpush1.msra.mxu0 0.0
        %2984 = vmatprep.subr.mxu0 0.0
        %2985 = vmatpush1.msra.mxu0 0.0
        %2986 = vmatprep.subr.mxu0 0.0
        %2987 = vmatpush1.msra.mxu0 0.0
        %2988 = vmatprep.subr.mxu0 0.0
        %2989 = vmatpush1.msra.mxu0 0.0
        %2990 = vmatprep.subr.mxu0 0.0
        %2991 = vmatpush1.msra.mxu0 0.0
        %2992 = vmatprep.subr.mxu0 0.0
        %2993 = vmatpush1.msra.mxu0 0.0
        %2994 = vmatprep.subr.mxu0 0.0
        %2995 = vmatpush1.msra.mxu0 0.0
        %2996 = vmatprep.subr.mxu0 0.0
        %2997 = vmatpush1.msra.mxu0 0.0
        %2998 = vmatprep.subr.mxu0 0.0
        %2999 = vmatpush1.msra.mxu0 0.0
        %3000 = vmatprep.subr.mxu0 0.0
        %3001 = vmatpush1.msra.mxu0 0.0
        %3002 = vmatprep.subr.mxu0 0.0
        %3003 = vmatpush1.msra.mxu0 0.0
        %3004 = vmatprep.subr.mxu0 0.0
        %3005 = vmatpush1.msra.mxu0 0.0
        %3006 = vmatprep.subr.mxu0 0.0
        %3007 = vmatpush1.msra.mxu0 0.0
        %3008 = vmatprep.subr.mxu0 0.0
        %3009 = vmatpush1.msra.mxu0 0.0
        %3010 = vmatprep.subr.mxu0 0.0
        %3011 = vmatpush1.msra.mxu0 0.0
        %3012 = vmatprep.subr.mxu0 0.0
        %3013 = vmatpush1.msra.mxu0 0.0
        %3014 = vmatprep.subr.mxu0 0.0
        %3015 = vmatpush1.msra.mxu0 0.0
        %3016 = vmatprep.subr.mxu0 0.0
        %3017 = vmatpush1.msra.mxu0 0.0
        %3018 = vmatprep.subr.mxu0 0.0
        %3019 = vmatpush1.msra.mxu0 0.0
        %3020 = vmatprep.subr.mxu0 0.0
        %3021 = vmatpush1.msra.mxu0 0.0
        %3022 = vmatprep.subr.mxu0 0.0
        %3023 = vmatpush1.msra.mxu0 0.0
        %3024 = vmatprep.subr.mxu0 0.0
        %3025 = vmatpush1.msra.mxu0 0.0
        %3026 = vmatprep.subr.mxu0 0.0
        %3027 = vmatpush1.msra.mxu0 0.0
        %3028 = vmatprep.subr.mxu0 0.0
        %3029 = vmatpush1.msra.mxu0 0.0
        %3030 = vmatprep.subr.mxu0 0.0
        %3031 = vmatpush1.msra.mxu0 0.0
        %3032 = vmatprep.subr.mxu0 0.0
        %3033 = vmatpush1.msra.mxu0 0.0
        %3034 = vmatprep.subr.mxu0 0.0
        %3035 = vmatpush1.msra.mxu0 0.0
        %3036 = vmatprep.subr.mxu0 0.0
        %3037 = vmatpush1.msra.mxu0 0.0
        %3038 = vmatprep.subr.mxu0 0.0
        %3039 = vmatpush1.msra.mxu0 0.0
        %3040 = vmatprep.subr.mxu0 0.0
        %3041 = vmatpush1.msra.mxu0 0.0
        %3042 = vmatprep.mubr.f32.mxu0 0.0
        %3043 = vmatmul.mubr.f32.gmra.mrb[0].mxu0 %v2973
        %v3044 = vpop.f32.mrb[0].mxu0
        %v3045 = vadd.f32 0.0, %v3044
        %v3046 = vpop.f32.mrb[0].mxu0
        %3047 = vmatprep.mubr.f32.mxu0 0.0
        %3048 = vmatmul.mubr.f32.gmra.mrb[0].mxu0 %v2976
        %v3049 = vpop.f32.mrb[0].mxu0
        %v3050 = vadd.f32 0.0, %v3049
        %v3051 = vpop.f32.mrb[0].mxu0
        %3052 = vdwg.mxu0
        %3053 = vmatprep.subr.mxu0 0.0
        %3054 = vmatpush1.msra.mxu0 %v3045
        %3055 = vmatprep.subr.mxu0 0.0
        %3056 = vmatpush1.msra.mxu0 %v3050
        %3057 = vmatprep.subr.mxu0 0.0
        %3058 = vmatpush1.msra.mxu0 0.0
        %3059 = vmatprep.subr.mxu0 0.0
        %3060 = vmatpush1.msra.mxu0 0.0
        %3061 = vmatprep.subr.mxu0 0.0
        %3062 = vmatpush1.msra.mxu0 0.0
        %3063 = vmatprep.subr.mxu0 0.0
        %3064 = vmatpush1.msra.mxu0 0.0
        %3065 = vmatprep.subr.mxu0 0.0
        %3066 = vmatpush1.msra.mxu0 0.0
        %3067 = vmatprep.subr.mxu0 0.0
        %3068 = vmatpush1.msra.mxu0 0.0
        %3069 = vmatprep.subr.mxu0 0.0
        %3070 = vmatpush1.msra.mxu0 0.0
        %3071 = vmatprep.subr.mxu0 0.0
        %3072 = vmatpush1.msra.mxu0 0.0
        %3073 = vmatprep.subr.mxu0 0.0
        %3074 = vmatpush1.msra.mxu0 0.0
        %3075 = vmatprep.subr.mxu0 0.0
        %3076 = vmatpush1.msra.mxu0 0.0
        %3077 = vmatprep.subr.mxu0 0.0
        %3078 = vmatpush1.msra.mxu0 0.0
        %3079 = vmatprep.subr.mxu0 0.0
        %3080 = vmatpush1.msra.mxu0 0.0
        %3081 = vmatprep.subr.mxu0 0.0
        %3082 = vmatpush1.msra.mxu0 0.0
        %3083 = vmatprep.subr.mxu0 0.0
        %3084 = vmatpush1.msra.mxu0 0.0
        %3085 = vmatprep.subr.mxu0 0.0
        %3086 = vmatpush1.msra.mxu0 0.0
        %3087 = vmatprep.subr.mxu0 0.0
        %3088 = vmatpush1.msra.mxu0 0.0
        %3089 = vmatprep.subr.mxu0 0.0
        %3090 = vmatpush1.msra.mxu0 0.0
        %3091 = vmatprep.subr.mxu0 0.0
        %3092 = vmatpush1.msra.mxu0 0.0
        %3093 = vmatprep.subr.mxu0 0.0
        %3094 = vmatpush1.msra.mxu0 0.0
        %3095 = vmatprep.subr.mxu0 0.0
        %3096 = vmatpush1.msra.mxu0 0.0
        %3097 = vmatprep.subr.mxu0 0.0
        %3098 = vmatpush1.msra.mxu0 0.0
        %3099 = vmatprep.subr.mxu0 0.0
        %3100 = vmatpush1.msra.mxu0 0.0
        %3101 = vmatprep.subr.mxu0 0.0
        %3102 = vmatpush1.msra.mxu0 0.0
        %3103 = vmatprep.subr.mxu0 0.0
        %3104 = vmatpush1.msra.mxu0 0.0
        %3105 = vmatprep.subr.mxu0 0.0
        %3106 = vmatpush1.msra.mxu0 0.0
        %3107 = vmatprep.subr.mxu0 0.0
        %3108 = vmatpush1.msra.mxu0 0.0
        %3109 = vmatprep.subr.mxu0 0.0
        %3110 = vmatpush1.msra.mxu0 0.0
        %3111 = vmatprep.subr.mxu0 0.0
        %3112 = vmatpush1.msra.mxu0 0.0
        %3113 = vmatprep.subr.mxu0 0.0
        %3114 = vmatpush1.msra.mxu0 0.0
        %3115 = vmatprep.subr.mxu0 0.0
        %3116 = vmatpush1.msra.mxu0 0.0
        %3117 = vmatprep.mubr.f32.mxu0 0.0
        %3118 = vmatmul.mubr.f32.gmra.mrb[0].mxu0 %v481
        %v3119 = vpop.f32.mrb[0].mxu0
        %v3120 = vadd.f32 0.0, %v3119
        %v3121 = vpop.f32.mrb[0].mxu0
        %3122 = vmatprep.mubr.f32.mxu0 0.0
        %3123 = vmatmul.mubr.f32.gmra.mrb[0].mxu0 %v484
        %v3124 = vpop.f32.mrb[0].mxu0
        %v3125 = vadd.f32 0.0, %v3124
        %v3126 = vpop.f32.mrb[0].mxu0
        %3127 = vdwg.mxu0
        %v3128 = vmul.f32 %v3120, 0.11111111
        %v3129 = vmul.f32 %v3125, 0.11111111
        %v3130 = vmul.f32 %v2482, %v2640
        %v3131 = vmul.f32 %v2483, %v2641
        %v3132 = vsub.f32 %v3128, %v3130
        %v3133 = vsub.f32 %v3129, %v3131
        %v3134 = vmul.f32 %v2482, 2.0
        %v3135 = vmul.f32 %v2483, 2.0
        %v3136 = vmul.f32 %v3134, %v2640
        %v3137 = vmul.f32 %v3135, %v2641
        %v3138 = vadd.f32 %v3136, 0.0001
        %v3139 = vadd.f32 %v3137, 0.0001
        %v3140 = vmul.f32 %v3132, 2.0
        %v3141 = vmul.f32 %v3133, 2.0
        %v3142 = vadd.f32 %v3140, 0.0009
        %v3143 = vadd.f32 %v3141, 0.0009
        %v3144 = vmul.f32 %v3138, %v3142
        %v3145 = vmul.f32 %v3139, %v3143
        %v3146 = vadd.f32 %v2802, %v2966
        %v3147 = vadd.f32 %v2803, %v2967
        %v3148 = vadd.f32 %v3146, 0.0001
        %v3149 = vadd.f32 %v3147, 0.0001
        %v3150 = vadd.f32 %v2804, %v2968
        %v3151 = vadd.f32 %v2805, %v2969
        %v3152 = vadd.f32 %v3150, 0.0009
        %v3153 = vadd.f32 %v3151, 0.0009
        %v3154 = vmul.f32 %v3148, %v3152
        %v3155 = vmul.f32 %v3149, %v3153
        %v3156 = vrcp.pop %v3154
        %v3157 = vmul.f32 %v3144, %v3156
        %v3158 = vrcp.pop %v3155
        %v3159 = vmul.f32 %v3145, %v3158
        %v3160 = vsub.f32 1.0, %v3157
        %v3161 = vsub.f32 1.0, %v3159
        %v3162 = vmul.f32 %v3160, 0.5
        %v3163 = vmul.f32 %v3161, 0.5
        %v3164 = vsel %vm385, %v3162, 0.0
        %v3165 = vsel %vm385, %v3163, 0.0
        %v3166 = vadd.f32 %v3164, %v3165
        %3167 = vadd.xlane.f32.xlu0 %v3166
        %v3168 = vpop.xlane.xlu0 %3167
        %v3169 = vrot.slane %v3168, 4
        %v3170 = vadd.f32 %v3168, %v3169
        %v3171 = vrot.slane %v3170, 2
        %v3172 = vadd.f32 %v3170, %v3171
        %v3173 = vrot.slane %v3172, 1
        %v3174 = vadd.f32 %v3172, %v3173
        %s3175 = vtos %v3174
        %s3176 = sadd.f32 %s2216, %s3175
        %3177 = vmatprep.subr.mxu0 0.0
        %3178 = vmatpush1.msra.mxu0 %v379
        %3179 = vmatprep.subr.mxu0 0.0
        %3180 = vmatpush1.msra.mxu0 %v380
        %3181 = vmatprep.subr.mxu0 0.0
        %3182 = vmatpush1.msra.mxu0 0.0
        %3183 = vmatprep.subr.mxu0 0.0
        %3184 = vmatpush1.msra.mxu0 0.0
        %3185 = vmatprep.subr.mxu0 0.0
        %3186 = vmatpush1.msra.mxu0 0.0
        %3187 = vmatprep.subr.mxu0 0.0
        %3188 = vmatpush1.msra.mxu0 0.0
        %3189 = vmatprep.subr.mxu0 0.0
        %3190 = vmatpush1.msra.mxu0 0.0
        %3191 = vmatprep.subr.mxu0 0.0
        %3192 = vmatpush1.msra.mxu0 0.0
        %3193 = vmatprep.subr.mxu0 0.0
        %3194 = vmatpush1.msra.mxu0 0.0
        %3195 = vmatprep.subr.mxu0 0.0
        %3196 = vmatpush1.msra.mxu0 0.0
        %3197 = vmatprep.subr.mxu0 0.0
        %3198 = vmatpush1.msra.mxu0 0.0
        %3199 = vmatprep.subr.mxu0 0.0
        %3200 = vmatpush1.msra.mxu0 0.0
        %3201 = vmatprep.subr.mxu0 0.0
        %3202 = vmatpush1.msra.mxu0 0.0
        %3203 = vmatprep.subr.mxu0 0.0
        %3204 = vmatpush1.msra.mxu0 0.0
        %3205 = vmatprep.subr.mxu0 0.0
        %3206 = vmatpush1.msra.mxu0 0.0
        %3207 = vmatprep.subr.mxu0 0.0
        %3208 = vmatpush1.msra.mxu0 0.0
        %3209 = vmatprep.subr.mxu0 0.0
        %3210 = vmatpush1.msra.mxu0 0.0
        %3211 = vmatprep.subr.mxu0 0.0
        %3212 = vmatpush1.msra.mxu0 0.0
        %3213 = vmatprep.subr.mxu0 0.0
        %3214 = vmatpush1.msra.mxu0 0.0
        %3215 = vmatprep.subr.mxu0 0.0
        %3216 = vmatpush1.msra.mxu0 0.0
        %3217 = vmatprep.subr.mxu0 0.0
        %3218 = vmatpush1.msra.mxu0 0.0
        %3219 = vmatprep.subr.mxu0 0.0
        %3220 = vmatpush1.msra.mxu0 0.0
        %3221 = vmatprep.subr.mxu0 0.0
        %3222 = vmatpush1.msra.mxu0 0.0
        %3223 = vmatprep.subr.mxu0 0.0
        %3224 = vmatpush1.msra.mxu0 0.0
        %3225 = vmatprep.subr.mxu0 0.0
        %3226 = vmatpush1.msra.mxu0 0.0
        %3227 = vmatprep.subr.mxu0 0.0
        %3228 = vmatpush1.msra.mxu0 0.0
        %3229 = vmatprep.subr.mxu0 0.0
        %3230 = vmatpush1.msra.mxu0 0.0
        %3231 = vmatprep.subr.mxu0 0.0
        %3232 = vmatpush1.msra.mxu0 0.0
        %3233 = vmatprep.subr.mxu0 0.0
        %3234 = vmatpush1.msra.mxu0 0.0
        %3235 = vmatprep.subr.mxu0 0.0
        %3236 = vmatpush1.msra.mxu0 0.0
        %3237 = vmatprep.subr.mxu0 0.0
        %3238 = vmatpush1.msra.mxu0 0.0
        %3239 = vmatprep.subr.mxu0 0.0
        %3240 = vmatpush1.msra.mxu0 0.0
        %3241 = vmatprep.mubr.f32.mxu0 0.0
        %3242 = vmatmul.mubr.f32.gmra.mrb[0].mxu0 %v2327
        %v3243 = vpop.f32.mrb[0].mxu0
        %v3244 = vadd.f32 0.0, %v3243
        %v3245 = vpop.f32.mrb[0].mxu0
        %3246 = vmatprep.mubr.f32.mxu0 0.0
        %3247 = vmatmul.mubr.f32.gmra.mrb[0].mxu0 %v2330
        %v3248 = vpop.f32.mrb[0].mxu0
        %v3249 = vadd.f32 0.0, %v3248
        %v3250 = vpop.f32.mrb[0].mxu0
        %3251 = vdwg.mxu0
        %v3252 = vsub.f32 %v341, %v3244
        %v3253 = vsub.f32 %v342, %v3249
        %v3254 = vand.u32 2147483647, %v3252
        %v3255 = vand.u32 2147483647, %v3253
        %v3256 = vadd.f32 %v2296, %v3254
        %v3257 = vadd.f32 %v2297, %v3255
        %v3258 = vrot.slane %v341, 1
        %v3259 = vrot.slane %v342, 1
        %v3260 = vsel %vm1337, %v3258, %v3259
        %v3263 = vsub.f32 %v341, %v3260
        %v3264 = vsub.f32 %v342, %v3259
        %v3265 = vand.u32 2147483647, %v3263
        %v3266 = vand.u32 2147483647, %v3264
        %v3267 = vadd.f32 %v2307, %v3265
        %v3268 = vadd.f32 %v2308, %v3266
        %v3269 = vmul.f32 %v3256, -3.3333333
        %v3270 = vmul.f32 %v3257, -3.3333333
        %v3271 = vmul.f32 %v3269, 1.442695
        %v3272 = vpow.pop %v3271
        %v3273 = vmul.f32 %v3270, 1.442695
        %v3274 = vpow.pop %v3273
        %v3275 = vmul.f32 %v3267, -3.3333333
        %v3276 = vmul.f32 %v3268, -3.3333333
        %v3277 = vmul.f32 %v3275, 1.442695
        %v3278 = vpow.pop %v3277
        %v3279 = vmul.f32 %v3276, 1.442695
        %v3280 = vpow.pop %v3279
        %v3282 = vsel %vm385, %v333, 0
        %v3285 = vsel %vm385, %v334, 0
        %3287 = vmatprep.subr.mxu0 0.0
        %3288 = vmatpush1.msra.mxu0 %v379
        %3289 = vmatprep.subr.mxu0 0.0
        %3290 = vmatpush1.msra.mxu0 %v380
        %3291 = vmatprep.subr.mxu0 0.0
        %3292 = vmatpush1.msra.mxu0 0.0
        %3293 = vmatprep.subr.mxu0 0.0
        %3294 = vmatpush1.msra.mxu0 0.0
        %3295 = vmatprep.subr.mxu0 0.0
        %3296 = vmatpush1.msra.mxu0 0.0
        %3297 = vmatprep.subr.mxu0 0.0
        %3298 = vmatpush1.msra.mxu0 0.0
        %3299 = vmatprep.subr.mxu0 0.0
        %3300 = vmatpush1.msra.mxu0 0.0
        %3301 = vmatprep.subr.mxu0 0.0
        %3302 = vmatpush1.msra.mxu0 0.0
        %3303 = vmatprep.subr.mxu0 0.0
        %3304 = vmatpush1.msra.mxu0 0.0
        %3305 = vmatprep.subr.mxu0 0.0
        %3306 = vmatpush1.msra.mxu0 0.0
        %3307 = vmatprep.subr.mxu0 0.0
        %3308 = vmatpush1.msra.mxu0 0.0
        %3309 = vmatprep.subr.mxu0 0.0
        %3310 = vmatpush1.msra.mxu0 0.0
        %3311 = vmatprep.subr.mxu0 0.0
        %3312 = vmatpush1.msra.mxu0 0.0
        %3313 = vmatprep.subr.mxu0 0.0
        %3314 = vmatpush1.msra.mxu0 0.0
        %3315 = vmatprep.subr.mxu0 0.0
        %3316 = vmatpush1.msra.mxu0 0.0
        %3317 = vmatprep.subr.mxu0 0.0
        %3318 = vmatpush1.msra.mxu0 0.0
        %3319 = vmatprep.subr.mxu0 0.0
        %3320 = vmatpush1.msra.mxu0 0.0
        %3321 = vmatprep.subr.mxu0 0.0
        %3322 = vmatpush1.msra.mxu0 0.0
        %3323 = vmatprep.subr.mxu0 0.0
        %3324 = vmatpush1.msra.mxu0 0.0
        %3325 = vmatprep.subr.mxu0 0.0
        %3326 = vmatpush1.msra.mxu0 0.0
        %3327 = vmatprep.subr.mxu0 0.0
        %3328 = vmatpush1.msra.mxu0 0.0
        %3329 = vmatprep.subr.mxu0 0.0
        %3330 = vmatpush1.msra.mxu0 0.0
        %3331 = vmatprep.subr.mxu0 0.0
        %3332 = vmatpush1.msra.mxu0 0.0
        %3333 = vmatprep.subr.mxu0 0.0
        %3334 = vmatpush1.msra.mxu0 0.0
        %3335 = vmatprep.subr.mxu0 0.0
        %3336 = vmatpush1.msra.mxu0 0.0
        %3337 = vmatprep.subr.mxu0 0.0
        %3338 = vmatpush1.msra.mxu0 0.0
        %3339 = vmatprep.subr.mxu0 0.0
        %3340 = vmatpush1.msra.mxu0 0.0
        %3341 = vmatprep.subr.mxu0 0.0
        %3342 = vmatpush1.msra.mxu0 0.0
        %3343 = vmatprep.subr.mxu0 0.0
        %3344 = vmatpush1.msra.mxu0 0.0
        %3345 = vmatprep.subr.mxu0 0.0
        %3346 = vmatpush1.msra.mxu0 0.0
        %3347 = vmatprep.subr.mxu0 0.0
        %3348 = vmatpush1.msra.mxu0 0.0
        %3349 = vmatprep.subr.mxu0 0.0
        %3350 = vmatpush1.msra.mxu0 0.0
        %3351 = vmatprep.mubr.f32.mxu0 0.0
        %3352 = vmatmul.mubr.f32.gmra.mrb[0].mxu0 %v3282
        %v3353 = vpop.f32.mrb[0].mxu0
        %v3354 = vadd.f32 0.0, %v3353
        %v3355 = vpop.f32.mrb[0].mxu0
        %3356 = vmatprep.mubr.f32.mxu0 0.0
        %3357 = vmatmul.mubr.f32.gmra.mrb[0].mxu0 %v3285
        %v3358 = vpop.f32.mrb[0].mxu0
        %v3359 = vadd.f32 0.0, %v3358
        %v3360 = vpop.f32.mrb[0].mxu0
        %3361 = vdwg.mxu0
        %v3362 = vsub.f32 %v333, %v3354
        %v3363 = vsub.f32 %v334, %v3359
        %v3365 = vsel %vm385, %v3362, 0
        %v3368 = vsel %vm385, %v3363, 0
        %3370 = vmatprep.subr.mxu0 0.0
        %3371 = vmatpush1.msra.mxu0 %v379
        %3372 = vmatprep.subr.mxu0 0.0
        %3373 = vmatpush1.msra.mxu0 %v380
        %3374 = vmatprep.subr.mxu0 0.0
        %3375 = vmatpush1.msra.mxu0 0.0
        %3376 = vmatprep.subr.mxu0 0.0
        %3377 = vmatpush1.msra.mxu0 0.0
        %3378 = vmatprep.subr.mxu0 0.0
        %3379 = vmatpush1.msra.mxu0 0.0
        %3380 = vmatprep.subr.mxu0 0.0
        %3381 = vmatpush1.msra.mxu0 0.0
        %3382 = vmatprep.subr.mxu0 0.0
        %3383 = vmatpush1.msra.mxu0 0.0
        %3384 = vmatprep.subr.mxu0 0.0
        %3385 = vmatpush1.msra.mxu0 0.0
        %3386 = vmatprep.subr.mxu0 0.0
        %3387 = vmatpush1.msra.mxu0 0.0
        %3388 = vmatprep.subr.mxu0 0.0
        %3389 = vmatpush1.msra.mxu0 0.0
        %3390 = vmatprep.subr.mxu0 0.0
        %3391 = vmatpush1.msra.mxu0 0.0
        %3392 = vmatprep.subr.mxu0 0.0
        %3393 = vmatpush1.msra.mxu0 0.0
        %3394 = vmatprep.subr.mxu0 0.0
        %3395 = vmatpush1.msra.mxu0 0.0
        %3396 = vmatprep.subr.mxu0 0.0
        %3397 = vmatpush1.msra.mxu0 0.0
        %3398 = vmatprep.subr.mxu0 0.0
        %3399 = vmatpush1.msra.mxu0 0.0
        %3400 = vmatprep.subr.mxu0 0.0
        %3401 = vmatpush1.msra.mxu0 0.0
        %3402 = vmatprep.subr.mxu0 0.0
        %3403 = vmatpush1.msra.mxu0 0.0
        %3404 = vmatprep.subr.mxu0 0.0
        %3405 = vmatpush1.msra.mxu0 0.0
        %3406 = vmatprep.subr.mxu0 0.0
        %3407 = vmatpush1.msra.mxu0 0.0
        %3408 = vmatprep.subr.mxu0 0.0
        %3409 = vmatpush1.msra.mxu0 0.0
        %3410 = vmatprep.subr.mxu0 0.0
        %3411 = vmatpush1.msra.mxu0 0.0
        %3412 = vmatprep.subr.mxu0 0.0
        %3413 = vmatpush1.msra.mxu0 0.0
        %3414 = vmatprep.subr.mxu0 0.0
        %3415 = vmatpush1.msra.mxu0 0.0
        %3416 = vmatprep.subr.mxu0 0.0
        %3417 = vmatpush1.msra.mxu0 0.0
        %3418 = vmatprep.subr.mxu0 0.0
        %3419 = vmatpush1.msra.mxu0 0.0
        %3420 = vmatprep.subr.mxu0 0.0
        %3421 = vmatpush1.msra.mxu0 0.0
        %3422 = vmatprep.subr.mxu0 0.0
        %3423 = vmatpush1.msra.mxu0 0.0
        %3424 = vmatprep.subr.mxu0 0.0
        %3425 = vmatpush1.msra.mxu0 0.0
        %3426 = vmatprep.subr.mxu0 0.0
        %3427 = vmatpush1.msra.mxu0 0.0
        %3428 = vmatprep.subr.mxu0 0.0
        %3429 = vmatpush1.msra.mxu0 0.0
        %3430 = vmatprep.subr.mxu0 0.0
        %3431 = vmatpush1.msra.mxu0 0.0
        %3432 = vmatprep.subr.mxu0 0.0
        %3433 = vmatpush1.msra.mxu0 0.0
        %3434 = vmatprep.mubr.f32.mxu0 0.0
        %3435 = vmatmul.mubr.f32.gmra.mrb[0].mxu0 %v3365
        %v3436 = vpop.f32.mrb[0].mxu0
        %v3437 = vadd.f32 0.0, %v3436
        %v3438 = vpop.f32.mrb[0].mxu0
        %3439 = vmatprep.mubr.f32.mxu0 0.0
        %3440 = vmatmul.mubr.f32.gmra.mrb[0].mxu0 %v3368
        %v3441 = vpop.f32.mrb[0].mxu0
        %v3442 = vadd.f32 0.0, %v3441
        %v3443 = vpop.f32.mrb[0].mxu0
        %3444 = vdwg.mxu0
        %v3445 = vsub.f32 %v3362, %v3437
        %v3446 = vsub.f32 %v3363, %v3442
        %v3447 = vrot.slane %v333, 1
        %v3448 = vrot.slane %v334, 1
        %v3449 = vsel %vm1337, %v3447, %v3448
        %v3452 = vsub.f32 %v333, %v3449
        %v3453 = vsub.f32 %v334, %v3448
        %v3456 = vrot.slane %v3452, 1
        %v3457 = vrot.slane %v3453, 1
        %v3458 = vsel %vm1337, %v3456, %v3457
        %v3461 = vsub.f32 %v3452, %v3458
        %v3462 = vsub.f32 %v3453, %v3457
        %vm3463 = vcmp.lt.s32.totalorder %v353, 14
        %v3464 = vsel %vm3463, 1, 0
        %v3465 = vcvt.s32.f32 %v3464
        %v3466 = vand.u32 2147483647, %v3362
        %v3467 = vand.u32 2147483647, %v3363
        %v3468 = vmul.f32 %v3466, %v3272
        %v3469 = vmul.f32 %v3467, %v3274
        %v3470 = vmul.f32 %v3468, %v3465
        %v3471 = vmul.f32 %v3469, %v3465
        %v3472 = vsel %vm385, %v3470, 0.0
        %v3473 = vsel %vm385, %v3471, 0.0
        %v3474 = vadd.f32 %v3472, %v3473
        %3475 = vadd.xlane.f32.xlu0 %v3474
        %v3476 = vpop.xlane.xlu0 %3475
        %v3477 = vrot.slane %v3476, 4
        %v3478 = vadd.f32 %v3476, %v3477
        %v3479 = vrot.slane %v3478, 2
        %v3480 = vadd.f32 %v3478, %v3479
        %v3481 = vrot.slane %v3480, 1
        %v3482 = vadd.f32 %v3480, %v3481
        %s3483 = vtos %v3482
        %v3484 = vand.u32 2147483647, %v3445
        %v3485 = vand.u32 2147483647, %v3446
        %v3486 = vmul.f32 %v3484, %v3272
        %v3487 = vmul.f32 %v3485, %v3274
        %v3488 = vmul.f32 %v3486, %v3465
        %v3489 = vmul.f32 %v3487, %v3465
        %v3490 = vsel %vm385, %v3488, 0.0
        %v3491 = vsel %vm385, %v3489, 0.0
        %v3492 = vadd.f32 %v3490, %v3491
        %3493 = vadd.xlane.f32.xlu0 %v3492
        %v3494 = vpop.xlane.xlu0 %3493
        %v3495 = vrot.slane %v3494, 4
        %v3496 = vadd.f32 %v3494, %v3495
        %v3497 = vrot.slane %v3496, 2
        %v3498 = vadd.f32 %v3496, %v3497
        %v3499 = vrot.slane %v3498, 1
        %v3500 = vadd.f32 %v3498, %v3499
        %s3501 = vtos %v3500
        %v3502 = vand.u32 2147483647, %v3452
        %v3503 = vand.u32 2147483647, %v3453
        %v3504 = vmul.f32 %v3502, %v3278
        %v3505 = vmul.f32 %v3503, %v3280
        %v3506 = vsel %vm385, %v3504, 0.0
        %vm3507 = vcmask 128000
        %v3508 = vsel %vm3507, %v3505, 0.0
        %v3509 = vadd.f32 %v3506, %v3508
        %3510 = vadd.xlane.f32.xlu0 %v3509
        %v3511 = vpop.xlane.xlu0 %3510
        %v3512 = vrot.slane %v3511, 4
        %v3513 = vadd.f32 %v3511, %v3512
        %v3514 = vrot.slane %v3513, 2
        %v3515 = vadd.f32 %v3513, %v3514
        %v3516 = vrot.slane %v3515, 1
        %v3517 = vadd.f32 %v3515, %v3516
        %s3518 = vtos %v3517
        %v3519 = vand.u32 2147483647, %v3461
        %v3520 = vand.u32 2147483647, %v3462
        %v3521 = vmul.f32 %v3519, %v3278
        %v3522 = vmul.f32 %v3520, %v3280
        %v3523 = vsel %vm385, %v3521, 0.0
        %v3524 = vsel %vm3507, %v3522, 0.0
        %v3525 = vadd.f32 %v3523, %v3524
        %3526 = vadd.xlane.f32.xlu0 %v3525
        %v3527 = vpop.xlane.xlu0 %3526
        %v3528 = vrot.slane %v3527, 4
        %v3529 = vadd.f32 %v3527, %v3528
        %v3530 = vrot.slane %v3529, 2
        %v3531 = vadd.f32 %v3529, %v3530
        %v3532 = vrot.slane %v3531, 1
        %v3533 = vadd.f32 %v3531, %v3532
        %s3534 = vtos %v3533
        %vm3535 = vcmp.gt.f32.partialorder %v335, 0.0
        %vm3536 = vcmp.gt.f32.partialorder %v336, 0.0
        %v3537 = vsel %vm3535, 1, 0
        %v3538 = vsel %vm3536, 1, 0
        %v3539 = vcvt.s32.f32 %v3537
        %v3540 = vcvt.s32.f32 %v3538
        %v3541 = vsel %vm385, %v3539, 0.0
        %v3542 = vsel %vm385, %v3540, 0.0
        %v3543 = vadd.f32 %v3541, %v3542
        %3544 = vadd.xlane.f32.xlu0 %v3543
        %v3545 = vpop.xlane.xlu0 %3544
        %v3546 = vrot.slane %v3545, 4
        %v3547 = vadd.f32 %v3545, %v3546
        %v3548 = vrot.slane %v3547, 2
        %v3549 = vadd.f32 %v3547, %v3548
        %v3550 = vrot.slane %v3549, 1
        %v3551 = vadd.f32 %v3549, %v3550
        %s3552 = vtos %v3551
        %v3553 = vsub.f32 %v333, %v335
        %v3554 = vsub.f32 %v334, %v336
        %v3555 = vand.u32 2147483647, %v3553
        %v3556 = vand.u32 2147483647, %v3554
        %v3557 = vmul.f32 %v3555, %v3539
        %v3558 = vmul.f32 %v3556, %v3540
        %v3559 = vsel %vm385, %v3557, 0.0
        %v3560 = vsel %vm385, %v3558, 0.0
        %v3561 = vadd.f32 %v3559, %v3560
        %3562 = vadd.xlane.f32.xlu0 %v3561
        %v3563 = vpop.xlane.xlu0 %3562
        %v3564 = vrot.slane %v3563, 4
        %v3565 = vadd.f32 %v3563, %v3564
        %v3566 = vrot.slane %v3565, 2
        %v3567 = vadd.f32 %v3565, %v3566
        %v3568 = vrot.slane %v3567, 1
        %v3569 = vadd.f32 %v3567, %v3568
        %s3570 = vtos %v3569
        %v3571 = vmul.f32 %v335, %v3539
        %v3572 = vmul.f32 %v336, %v3540
        %v3573 = vsel %vm385, %v3571, 0.0
        %v3574 = vsel %vm385, %v3572, 0.0
        %v3575 = vadd.f32 %v3573, %v3574
        %3576 = vadd.xlane.f32.xlu0 %v3575
        %v3577 = vpop.xlane.xlu0 %3576
        %v3578 = vrot.slane %v3577, 4
        %v3579 = vadd.f32 %v3577, %v3578
        %v3580 = vrot.slane %v3579, 2
        %v3581 = vadd.f32 %v3579, %v3580
        %v3582 = vrot.slane %v3581, 1
        %v3583 = vadd.f32 %v3581, %v3582
        %s3584 = vtos %v3583
        %v3585 = vmul.f32 %v335, %v335
        %v3586 = vmul.f32 %v336, %v336
        %v3587 = vmul.f32 %v3585, %v3539
        %v3588 = vmul.f32 %v3586, %v3540
        %v3589 = vsel %vm385, %v3587, 0.0
        %v3590 = vsel %vm385, %v3588, 0.0
        %v3591 = vadd.f32 %v3589, %v3590
        %3592 = vadd.xlane.f32.xlu0 %v3591
        %v3593 = vpop.xlane.xlu0 %3592
        %v3594 = vrot.slane %v3593, 4
        %v3595 = vadd.f32 %v3593, %v3594
        %v3596 = vrot.slane %v3595, 2
        %v3597 = vadd.f32 %v3595, %v3596
        %v3598 = vrot.slane %v3597, 1
        %v3599 = vadd.f32 %v3597, %v3598
        %s3600 = vtos %v3599
        %v3602 = vsel %vm385, %v3539, 0
        %v3605 = vsel %vm385, %v3540, 0
        %3607 = vmatprep.subr.mxu0 0.0
        %3608 = vmatpush1.msra.mxu0 %v372
        %3609 = vmatprep.subr.mxu0 0.0
        %3610 = vmatpush1.msra.mxu0 %v373
        %3611 = vmatprep.subr.mxu0 0.0
        %3612 = vmatpush1.msra.mxu0 0.0
        %3613 = vmatprep.subr.mxu0 0.0
        %3614 = vmatpush1.msra.mxu0 0.0
        %3615 = vmatprep.subr.mxu0 0.0
        %3616 = vmatpush1.msra.mxu0 0.0
        %3617 = vmatprep.subr.mxu0 0.0
        %3618 = vmatpush1.msra.mxu0 0.0
        %3619 = vmatprep.subr.mxu0 0.0
        %3620 = vmatpush1.msra.mxu0 0.0
        %3621 = vmatprep.subr.mxu0 0.0
        %3622 = vmatpush1.msra.mxu0 0.0
        %3623 = vmatprep.subr.mxu0 0.0
        %3624 = vmatpush1.msra.mxu0 0.0
        %3625 = vmatprep.subr.mxu0 0.0
        %3626 = vmatpush1.msra.mxu0 0.0
        %3627 = vmatprep.subr.mxu0 0.0
        %3628 = vmatpush1.msra.mxu0 0.0
        %3629 = vmatprep.subr.mxu0 0.0
        %3630 = vmatpush1.msra.mxu0 0.0
        %3631 = vmatprep.subr.mxu0 0.0
        %3632 = vmatpush1.msra.mxu0 0.0
        %3633 = vmatprep.subr.mxu0 0.0
        %3634 = vmatpush1.msra.mxu0 0.0
        %3635 = vmatprep.subr.mxu0 0.0
        %3636 = vmatpush1.msra.mxu0 0.0
        %3637 = vmatprep.subr.mxu0 0.0
        %3638 = vmatpush1.msra.mxu0 0.0
        %3639 = vmatprep.subr.mxu0 0.0
        %3640 = vmatpush1.msra.mxu0 0.0
        %3641 = vmatprep.subr.mxu0 0.0
        %3642 = vmatpush1.msra.mxu0 0.0
        %3643 = vmatprep.subr.mxu0 0.0
        %3644 = vmatpush1.msra.mxu0 0.0
        %3645 = vmatprep.subr.mxu0 0.0
        %3646 = vmatpush1.msra.mxu0 0.0
        %3647 = vmatprep.subr.mxu0 0.0
        %3648 = vmatpush1.msra.mxu0 0.0
        %3649 = vmatprep.subr.mxu0 0.0
        %3650 = vmatpush1.msra.mxu0 0.0
        %3651 = vmatprep.subr.mxu0 0.0
        %3652 = vmatpush1.msra.mxu0 0.0
        %3653 = vmatprep.subr.mxu0 0.0
        %3654 = vmatpush1.msra.mxu0 0.0
        %3655 = vmatprep.subr.mxu0 0.0
        %3656 = vmatpush1.msra.mxu0 0.0
        %3657 = vmatprep.subr.mxu0 0.0
        %3658 = vmatpush1.msra.mxu0 0.0
        %3659 = vmatprep.subr.mxu0 0.0
        %3660 = vmatpush1.msra.mxu0 0.0
        %3661 = vmatprep.subr.mxu0 0.0
        %3662 = vmatpush1.msra.mxu0 0.0
        %3663 = vmatprep.subr.mxu0 0.0
        %3664 = vmatpush1.msra.mxu0 0.0
        %3665 = vmatprep.subr.mxu0 0.0
        %3666 = vmatpush1.msra.mxu0 0.0
        %3667 = vmatprep.subr.mxu0 0.0
        %3668 = vmatpush1.msra.mxu0 0.0
        %3669 = vmatprep.subr.mxu0 0.0
        %3670 = vmatpush1.msra.mxu0 0.0
        %3671 = vmatprep.mubr.f32.mxu0 0.0
        %3672 = vmatmul.mubr.f32.gmra.mrb[0].mxu0 %v3602
        %v3673 = vpop.f32.mrb[0].mxu0
        %v3674 = vadd.f32 0.0, %v3673
        %v3675 = vpop.f32.mrb[0].mxu0
        %3676 = vmatprep.mubr.f32.mxu0 0.0
        %3677 = vmatmul.mubr.f32.gmra.mrb[0].mxu0 %v3605
        %v3678 = vpop.f32.mrb[0].mxu0
        %v3679 = vadd.f32 0.0, %v3678
        %v3680 = vpop.f32.mrb[0].mxu0
        %3681 = vdwg.mxu0
        %v3683 = vsel %vm385, %v372, 0
        %v3686 = vsel %vm385, %v373, 0
        %3688 = vmatprep.subr.mxu0 0.0
        %3689 = vmatpush1.msra.mxu0 %v3674
        %3690 = vmatprep.subr.mxu0 0.0
        %3691 = vmatpush1.msra.mxu0 %v3679
        %3692 = vmatprep.subr.mxu0 0.0
        %3693 = vmatpush1.msra.mxu0 0.0
        %3694 = vmatprep.subr.mxu0 0.0
        %3695 = vmatpush1.msra.mxu0 0.0
        %3696 = vmatprep.subr.mxu0 0.0
        %3697 = vmatpush1.msra.mxu0 0.0
        %3698 = vmatprep.subr.mxu0 0.0
        %3699 = vmatpush1.msra.mxu0 0.0
        %3700 = vmatprep.subr.mxu0 0.0
        %3701 = vmatpush1.msra.mxu0 0.0
        %3702 = vmatprep.subr.mxu0 0.0
        %3703 = vmatpush1.msra.mxu0 0.0
        %3704 = vmatprep.subr.mxu0 0.0
        %3705 = vmatpush1.msra.mxu0 0.0
        %3706 = vmatprep.subr.mxu0 0.0
        %3707 = vmatpush1.msra.mxu0 0.0
        %3708 = vmatprep.subr.mxu0 0.0
        %3709 = vmatpush1.msra.mxu0 0.0
        %3710 = vmatprep.subr.mxu0 0.0
        %3711 = vmatpush1.msra.mxu0 0.0
        %3712 = vmatprep.subr.mxu0 0.0
        %3713 = vmatpush1.msra.mxu0 0.0
        %3714 = vmatprep.subr.mxu0 0.0
        %3715 = vmatpush1.msra.mxu0 0.0
        %3716 = vmatprep.subr.mxu0 0.0
        %3717 = vmatpush1.msra.mxu0 0.0
        %3718 = vmatprep.subr.mxu0 0.0
        %3719 = vmatpush1.msra.mxu0 0.0
        %3720 = vmatprep.subr.mxu0 0.0
        %3721 = vmatpush1.msra.mxu0 0.0
        %3722 = vmatprep.subr.mxu0 0.0
        %3723 = vmatpush1.msra.mxu0 0.0
        %3724 = vmatprep.subr.mxu0 0.0
        %3725 = vmatpush1.msra.mxu0 0.0
        %3726 = vmatprep.subr.mxu0 0.0
        %3727 = vmatpush1.msra.mxu0 0.0
        %3728 = vmatprep.subr.mxu0 0.0
        %3729 = vmatpush1.msra.mxu0 0.0
        %3730 = vmatprep.subr.mxu0 0.0
        %3731 = vmatpush1.msra.mxu0 0.0
        %3732 = vmatprep.subr.mxu0 0.0
        %3733 = vmatpush1.msra.mxu0 0.0
        %3734 = vmatprep.subr.mxu0 0.0
        %3735 = vmatpush1.msra.mxu0 0.0
        %3736 = vmatprep.subr.mxu0 0.0
        %3737 = vmatpush1.msra.mxu0 0.0
        %3738 = vmatprep.subr.mxu0 0.0
        %3739 = vmatpush1.msra.mxu0 0.0
        %3740 = vmatprep.subr.mxu0 0.0
        %3741 = vmatpush1.msra.mxu0 0.0
        %3742 = vmatprep.subr.mxu0 0.0
        %3743 = vmatpush1.msra.mxu0 0.0
        %3744 = vmatprep.subr.mxu0 0.0
        %3745 = vmatpush1.msra.mxu0 0.0
        %3746 = vmatprep.subr.mxu0 0.0
        %3747 = vmatpush1.msra.mxu0 0.0
        %3748 = vmatprep.subr.mxu0 0.0
        %3749 = vmatpush1.msra.mxu0 0.0
        %3750 = vmatprep.subr.mxu0 0.0
        %3751 = vmatpush1.msra.mxu0 0.0
        %3752 = vmatprep.mubr.f32.mxu0 0.0
        %3753 = vmatmul.mubr.f32.gmra.mrb[0].mxu0 %v3683
        %v3754 = vpop.f32.mrb[0].mxu0
        %v3755 = vadd.f32 0.0, %v3754
        %v3756 = vpop.f32.mrb[0].mxu0
        %3757 = vmatprep.mubr.f32.mxu0 0.0
        %3758 = vmatmul.mubr.f32.gmra.mrb[0].mxu0 %v3686
        %v3759 = vpop.f32.mrb[0].mxu0
        %v3760 = vadd.f32 0.0, %v3759
        %v3761 = vpop.f32.mrb[0].mxu0
        %3762 = vdwg.mxu0
        %vm3763 = vcmp.gt.f32.partialorder %v3755, 0.5
        %vm3764 = vcmp.gt.f32.partialorder %v3760, 0.5
        %v3765 = vsel %vm3763, 1, 0
        %v3766 = vsel %vm3764, 1, 0
        %v3767 = vcvt.s32.f32 %v3765
        %v3768 = vcvt.s32.f32 %v3766
        %v3769 = vsel %vm385, %v3767, 0.0
        %v3770 = vsel %vm385, %v3768, 0.0
        %v3771 = vadd.f32 %v3769, %v3770
        %3772 = vadd.xlane.f32.xlu0 %v3771
        %v3773 = vpop.xlane.xlu0 %3772
        %v3774 = vrot.slane %v3773, 4
        %v3775 = vadd.f32 %v3773, %v3774
        %v3776 = vrot.slane %v3775, 2
        %v3777 = vadd.f32 %v3775, %v3776
        %v3778 = vrot.slane %v3777, 1
        %v3779 = vadd.f32 %v3777, %v3778
        %s3780 = vtos %v3779
        %v3781 = vmul.f32 %v333, %v3767
        %v3782 = vmul.f32 %v334, %v3768
        %v3783 = vsel %vm385, %v3781, 0.0
        %v3784 = vsel %vm385, %v3782, 0.0
        %v3785 = vadd.f32 %v3783, %v3784
        %3786 = vadd.xlane.f32.xlu0 %v3785
        %v3787 = vpop.xlane.xlu0 %3786
        %v3788 = vrot.slane %v3787, 4
        %v3789 = vadd.f32 %v3787, %v3788
        %v3790 = vrot.slane %v3789, 2
        %v3791 = vadd.f32 %v3789, %v3790
        %v3792 = vrot.slane %v3791, 1
        %v3793 = vadd.f32 %v3791, %v3792
        %s3794 = vtos %v3793
        %v3795 = vmul.f32 %v333, %v333
        %v3796 = vmul.f32 %v334, %v334
        %v3797 = vmul.f32 %v3795, %v3767
        %v3798 = vmul.f32 %v3796, %v3768
        %v3799 = vsel %vm385, %v3797, 0.0
        %v3800 = vsel %vm385, %v3798, 0.0
        %v3801 = vadd.f32 %v3799, %v3800
        %3802 = vadd.xlane.f32.xlu0 %v3801
        %v3803 = vpop.xlane.xlu0 %3802
        %v3804 = vrot.slane %v3803, 4
        %v3805 = vadd.f32 %v3803, %v3804
        %v3806 = vrot.slane %v3805, 2
        %v3807 = vadd.f32 %v3805, %v3806
        %v3808 = vrot.slane %v3807, 1
        %v3809 = vadd.f32 %v3807, %v3808
        %s3810 = vtos %v3809
        %vm3811 = vcmp.eq.s32.totalorder %v350, 0
        %vm3812 = vcmp.eq.s32.totalorder %v351, 0
        %v3813 = vstv %s2325
        %v3814 = vsel %vm3811, %v3813, 0.0
        %v3815 = vsel %vm3812, %v3813, 0.0
        %vm3816 = vcmp.eq.s32.totalorder %v350, 1
        %vm3817 = vcmp.eq.s32.totalorder %v351, 1
        %v3818 = vstv %s3176
        %v3819 = vsel %vm3816, %v3818, %v3814
        %v3820 = vsel %vm3817, %v3818, %v3815
        %vm3821 = vcmp.eq.s32.totalorder %v350, 2
        %vm3822 = vcmp.eq.s32.totalorder %v351, 2
        %v3823 = vstv %s3552
        %v3824 = vsel %vm3821, %v3823, %v3819
        %v3825 = vsel %vm3822, %v3823, %v3820
        %vm3826 = vcmp.eq.s32.totalorder %v350, 3
        %vm3827 = vcmp.eq.s32.totalorder %v351, 3
        %v3828 = vstv %s3570
        %v3829 = vsel %vm3826, %v3828, %v3824
        %v3830 = vsel %vm3827, %v3828, %v3825
        %vm3831 = vcmp.eq.s32.totalorder %v350, 4
        %vm3832 = vcmp.eq.s32.totalorder %v351, 4
        %v3833 = vstv %s3584
        %v3834 = vsel %vm3831, %v3833, %v3829
        %v3835 = vsel %vm3832, %v3833, %v3830
        %vm3836 = vcmp.eq.s32.totalorder %v350, 5
        %vm3837 = vcmp.eq.s32.totalorder %v351, 5
        %v3838 = vstv %s3600
        %v3839 = vsel %vm3836, %v3838, %v3834
        %v3840 = vsel %vm3837, %v3838, %v3835
        %vm3841 = vcmp.eq.s32.totalorder %v350, 6
        %vm3842 = vcmp.eq.s32.totalorder %v351, 6
        %v3843 = vstv %s3483
        %v3844 = vsel %vm3841, %v3843, %v3839
        %v3845 = vsel %vm3842, %v3843, %v3840
        %vm3846 = vcmp.eq.s32.totalorder %v350, 7
        %vm3847 = vcmp.eq.s32.totalorder %v351, 7
        %v3848 = vstv %s3518
        %v3849 = vsel %vm3846, %v3848, %v3844
        %v3850 = vsel %vm3847, %v3848, %v3845
        %vm3851 = vcmp.eq.s32.totalorder %v350, 8
        %vm3852 = vcmp.eq.s32.totalorder %v351, 8
        %v3853 = vstv %s3501
        %v3854 = vsel %vm3851, %v3853, %v3849
        %v3855 = vsel %vm3852, %v3853, %v3850
        %vm3856 = vcmp.eq.s32.totalorder %v350, 9
        %vm3857 = vcmp.eq.s32.totalorder %v351, 9
        %v3858 = vstv %s3534
        %v3859 = vsel %vm3856, %v3858, %v3854
        %v3860 = vsel %vm3857, %v3858, %v3855
        %vm3861 = vcmp.eq.s32.totalorder %v350, 10
        %vm3862 = vcmp.eq.s32.totalorder %v351, 10
        %v3863 = vstv %s3780
        %v3864 = vsel %vm3861, %v3863, %v3859
        %v3865 = vsel %vm3862, %v3863, %v3860
        %vm3866 = vcmp.eq.s32.totalorder %v350, 11
        %vm3867 = vcmp.eq.s32.totalorder %v351, 11
        %v3868 = vstv %s3794
        %v3869 = vsel %vm3866, %v3868, %v3864
        %v3870 = vsel %vm3867, %v3868, %v3865
        %vm3871 = vcmp.eq.s32.totalorder %v350, 12
        %vm3872 = vcmp.eq.s32.totalorder %v351, 12
        %v3873 = vstv %s3810
        %v3874 = vsel %vm3871, %v3873, %v3869
        %v3875 = vsel %vm3872, %v3873, %v3870
        %3876 = vst [vmem:[%s332] sm:$0xff] %v3874
        %3877 = vst [vmem:[%s332 + $0x8] sm:$0xff] %v3875
        %s3878 = sand.u32 %s139, 1
        %s3879 = scalar_lea.sflag [#allocation4], %s3878
        %s3880 = sand.u32 %s139, 1
        %s3881 = smul.addr %s3880, 16
        %s3882 = scalar_lea.vmem [#allocation10], %s3881
        // Predicated region
        $region53: #{tpu_custom_call.1} parent=35 // pred_check
          %p3883 = pneg %p149
        $region54: #{tpu_custom_call.1} parent=35 // pred_check_branch
          %3885 = sbr.rel (%p3883) target = $region56
        $region55: #{tpu_custom_call.1} parent=35 // pred_region
          %s3887 = ssub.s32 256, 256
          %3888 = vsyncadd %s3879, %s3887
          %s3889 = smul.addr %s27, 2
          %s3890 = smul.addr %s3889, 128
          %s3891 = scalar_lea.hbm %s4, %s3890
          %s3892 = sshll.u32 %s3882, 4
          %s3893 = int_to_ptr.vmem [resolvable:$true] %s3892
          %3898 = dma.vmem_to_hbm [thread:$0]  %s3893, 256, %s3891, %s3879, 128, 128, 8
        $region56: #{tpu_custom_call.1} parent=35 // pred_fallthru
          _
      $region36: #{tpu_custom_call.1} parent=5 // pred_fallthru
        _
      %p3899 = scmp.le.s32.totalorder 2, %s22
      // Predicated region
      $region57: #{tpu_custom_call.1} parent=5 // pred_check
        %p3900 = pneg %p3899
      $region58: #{tpu_custom_call.1} parent=5 // pred_check_branch
        %3902 = sbr.rel (%p3900) target = $region60
      $region59: #{tpu_custom_call.1} parent=5 // pred_region
        %s3903 = ssub.s32 %s22, 2
        // Predicated region
        $region61: #{tpu_custom_call.1} parent=59 // pred_check
          %p3904 = pneg %p155
        $region62: #{tpu_custom_call.1} parent=59 // pred_check_branch
          %3906 = sbr.rel (%p3904) target = $region64
        $region63: #{tpu_custom_call.1} parent=59 // pred_region
          %s3907 = sand.u32 %s140, 1
          %s3908 = scalar_lea.sflag [#allocation4], %s3907
          %s3909 = sand.u32 %s140, 1
          %s3910 = smul.addr %s3909, 16
          %s3911 = scalar_lea.vmem [#allocation10], %s3910
          %3912 = dma.done %s3908, 256
        $region64: #{tpu_custom_call.1} parent=59 // pred_fallthru
          _
      $region60: #{tpu_custom_call.1} parent=5 // pred_fallthru
        _
    $region6: #{tpu_custom_call.1} parent=1 // loop_footer
      %s26 = sadd.s32 1, %s22
    $region7: #{tpu_custom_call.1} parent=1 // loop_footer_branch
      %21 = sbr.rel target = $region3
    $region8: #{tpu_custom_call.1} parent=1 // loop_exit
      _
    %3913 = vsyncpa [#allocation3], 1
    %s3914 = scalar_lea.sflag [#allocation3], 1
    %3915 = vsyncpa %s3914, 1
    %3916 = vsyncpa [#allocation6], 1
    %s3917 = scalar_lea.sflag [#allocation6], 1
    %3918 = vsyncpa %s3917, 1
    %3919 = vsyncpa [#allocation9], 1
    %s3920 = scalar_lea.sflag [#allocation9], 1
    %3921 = vsyncpa %s3920, 1
    %3922 = vsyncpa [#allocation4], 1
    %s3923 = scalar_lea.sflag [#allocation4], 1
    %3924 = vsyncpa %s3923, 1

</llo_original>
